<compile_context>
chip_gen: v7x
topology: tpu7x:2x2x1
jax: 0.10.0
libtpu: 0.0.40
codegen_flags: <defaults>
</compile_context>

<pallas_src>
import jax
import jax.numpy as jnp
from jax.experimental import pallas as pl
from jax.experimental.pallas import tpu as pltpu

LN_EPS = 1e-5  # torch.nn.LayerNorm default


def lstm_seq_kernel(xw_ref, h0_ref, c0_ref, wh_ref, ln_g_ref, ln_b_ref,
                    h_out_ref, c_out_ref, h_scr, c_scr):
    """T_BLOCK time steps per grid iteration; h/c carried in VMEM scratch.

    xw_ref   : (T_BLOCK, Bb, 4H) f32   precomputed x @ w_x (streamed)
    h0_ref   : (Bb, H)           f32   initial hidden (read at t_block == 0)
    c0_ref   : (Bb, H)           f32   initial cell   (read at t_block == 0)
    wh_ref   : (H, 4H)           bf16  hidden->gates weight (VMEM-resident)
    ln_g/b   : (5, H)            f32   LayerNorm scale/shift: rows f,i,o,u,cell
    h_out_ref: (T_BLOCK, Bb, H)  f32   per-step hidden output
    c_out_ref: (T_BLOCK, Bb, H)  f32   per-step cell output
    h_scr    : (Bb, H)           bf16  hidden carry (MXU-ready)
    c_scr    : (Bb, H)           f32   cell carry
    """
    t_blk = pl.program_id(1)
    H = h_scr.shape[-1]
    t_block = xw_ref.shape[0]          # static block size

    @pl.when(t_blk == 0)
    def _():
        h_scr[...] = h0_ref[...].astype(jnp.bfloat16)
        c_scr[...] = c0_ref[...]

    wh = wh_ref[...]                   # (H, 4H) bf16, loaded once per block
    ln_g = ln_g_ref[...]
    ln_b = ln_b_ref[...]

    def layer_norm(v, k):
        # One-pass variance: mean and E[v^2] are independent reductions.
        mu = jnp.mean(v, axis=-1, keepdims=True)
        m2 = jnp.mean(v * v, axis=-1, keepdims=True)
        var = m2 - mu * mu
        return ((v - mu) * jax.lax.rsqrt(var + LN_EPS)
                * ln_g[k:k + 1, :] + ln_b[k:k + 1, :])

    # Static unroll over the time block (t_block is a compile-time constant).
    for k in range(t_block):
        # fiou = Linear(cat([x, h])) with the x half hoisted to the wrapper.
        fiou = xw_ref[k] + jnp.dot(h_scr[...], wh,
                                   preferred_element_type=jnp.float32)

        # Lane-aligned gate slices (H is a multiple of 128).
        f = jax.nn.sigmoid(layer_norm(fiou[:, 0 * H:1 * H], 0))
        i = jax.nn.sigmoid(layer_norm(fiou[:, 1 * H:2 * H], 1))
        o = jax.nn.sigmoid(layer_norm(fiou[:, 2 * H:3 * H], 2))
        u = jnp.tanh(layer_norm(fiou[:, 3 * H:4 * H], 3))
        # TODO(synk): nn.Dropout on u is train-time stochastic; this is the
        # inference/identity path (dropout=None).

        new_c = layer_norm(i * u + f * c_scr[...], 4)
        new_h = o * jnp.tanh(new_c)

        h_scr[...] = new_h.astype(jnp.bfloat16)   # MXU-ready carry
        c_scr[...] = new_c

        h_out_ref[k] = new_h.astype(h_out_ref.dtype)
        c_out_ref[k] = new_c.astype(c_out_ref.dtype)


def layer_norm_lstm_seq(xs, h0, c0, w_x, w_h, ln_gamma, ln_beta,
                        t_block=None, b_block=None):
    """Apply the cell over a sequence xs: (T, B, D_in).

    Returns (h_seq, c_seq), each (T, B, H)."""
    T, B, D_in = xs.shape
    H = h0.shape[1]

    if t_block is None:
        t_block = min(T, 8)
    if b_block is None:
        b_block = B          # set < B (multiple of 8) to shard batch on v7x
    assert B % b_block == 0 and b_block % 8 == 0, "batch block must be 8-aligned"
    assert H % 128 == 0, "hidden size must be lane-aligned"

    n_b = B // b_block
    n_t = pl.cdiv(T, t_block)
    T_pad = n_t * t_block

    # Hoisted, time-independent input projection: one big f32 matmul (XLA).
    xw = jnp.einsum('tbd,dg->tbg', xs, w_x,
                    preferred_element_type=jnp.float32)       # (T, B, 4H) f32
    if T_pad != T:
        xw = jnp.pad(xw, ((0, T_pad - T), (0, 0), (0, 0)))

    wh_bf16 = w_h.astype(jnp.bfloat16)

    def const_spec(a):
        nd = a.ndim
        return pl.BlockSpec(a.shape, lambda bi, ti, _nd=nd: (0,) * _nd)

    h_seq, c_seq = pl.pallas_call(
        lstm_seq_kernel,
        out_shape=(jax.ShapeDtypeStruct((T_pad, B, H), jnp.float32),
                   jax.ShapeDtypeStruct((T_pad, B, H), jnp.float32)),
        grid_spec=pltpu.PrefetchScalarGridSpec(
            num_scalar_prefetch=0,
            grid=(n_b, n_t),
            in_specs=[
                pl.BlockSpec((t_block, b_block, 4 * H),
                             lambda bi, ti: (ti, bi, 0)),        # xw stream
                pl.BlockSpec((b_block, H), lambda bi, ti: (bi, 0)),  # h0
                pl.BlockSpec((b_block, H), lambda bi, ti: (bi, 0)),  # c0
                const_spec(wh_bf16),
                const_spec(ln_gamma), const_spec(ln_beta),
            ],
            out_specs=[
                pl.BlockSpec((t_block, b_block, H), lambda bi, ti: (ti, bi, 0)),
                pl.BlockSpec((t_block, b_block, H), lambda bi, ti: (ti, bi, 0)),
            ],
            scratch_shapes=[pltpu.VMEM((b_block, H), jnp.bfloat16),  # h carry
                            pltpu.VMEM((b_block, H), jnp.float32)],  # c carry
        ),
        compiler_params=pltpu.CompilerParams(
            dimension_semantics=("parallel", "arbitrary"),
            vmem_limit_bytes=32 * 1024 * 1024),
    )(xw, h0, c0, wh_bf16, ln_gamma, ln_beta)

    return h_seq[:T], c_seq[:T]


def layer_norm_lstm_cell(x, h, c, w_x, w_h, ln_gamma, ln_beta):
    """Single-step forward matching the PyTorch module: returns (new_h, new_c)."""
    hs, cs = layer_norm_lstm_seq(x[None], h, c, w_x, w_h, ln_gamma, ln_beta)
    return hs[0], cs[0]


# ----------------------------- references -----------------------------------

def _ln(v, g, b):
    mu = jnp.mean(v, axis=-1, keepdims=True)
    var = jnp.mean(jnp.square(v - mu), axis=-1, keepdims=True)
    return (v - mu) / jnp.sqrt(var + LN_EPS) * g + b


def reference_seq_matched(xs, h0, c0, w_x, w_h, ln_gamma, ln_beta):
    """Pure-JAX mirror of the kernel's precision choices: f32 hoisted x@w_x,
    bf16 h carry / bf16 w_h with f32 MXU accumulation, f32 elsewhere."""
    H = h0.shape[1]
    xw = jnp.einsum('tbd,dg->tbg', xs, w_x,
                    preferred_element_type=jnp.float32)
    wh_bf16 = w_h.astype(jnp.bfloat16)

    def step(carry, xw_t):
        h_bf16, c = carry
        fiou = xw_t + jnp.dot(h_bf16, wh_bf16,
                              preferred_element_type=jnp.float32)
        gates = [_ln(fiou[:, k * H:(k + 1) * H], ln_gamma[k], ln_beta[k])
                 for k in range(4)]
        f, i, o = (jax.nn.sigmoid(g) for g in gates[:3])
        u = jnp.tanh(gates[3])
        new_c = _ln(i * u + f * c, ln_gamma[4], ln_beta[4])
        new_h = o * jnp.tanh(new_c)
        return (new_h.astype(jnp.bfloat16), new_c), (new_h, new_c)

    _, (hs, cs) = jax.lax.scan(step, (h0.astype(jnp.bfloat16), c0), xw)
    return hs, cs


def reference_seq_f32(xs, h0, c0, w_x, w_h, ln_gamma, ln_beta):
    """Full-f32 PyTorch-semantics reference."""
    H = h0.shape[1]

    def step(carry, x):
        h, c = carry
        fiou = (jnp.dot(x, w_x, preferred_element_type=jnp.float32)
                + jnp.dot(h, w_h, preferred_element_type=jnp.float32))
        gates = [_ln(fiou[:, k * H:(k + 1) * H], ln_gamma[k], ln_beta[k])
                 for k in range(4)]
        f, i, o = (jax.nn.sigmoid(g) for g in gates[:3])
        u = jnp.tanh(gates[3])
        new_c = _ln(i * u + f * c, ln_gamma[4], ln_beta[4])
        new_h = o * jnp.tanh(new_c)
        return (new_h, new_c), (new_h, new_c)

    _, (hs, cs) = jax.lax.scan(step, (h0, c0), xs)
    return hs, cs


if __name__ == "__main__":
    # Small shapes; H is a multiple of 128 so gates/LN/outputs are lane-dense.
    # T=12 with t_block=8 exercises both the inner unrolled loop, the
    # cross-grid-step h/c carry and the T-padding path.
    T, B, D_IN, H = 12, 8, 64, 128

    key = jax.random.PRNGKey(0)
    kx, kh, kc, kwx, kwh, kg, kb = jax.random.split(key, 7)

    xs = jax.random.normal(kx, (T, B, D_IN), jnp.float32)
    h0 = jax.random.normal(kh, (B, H), jnp.float32)
    c0 = jax.random.normal(kc, (B, H), jnp.float32)

    # nn.Linear(input_size + hidden_size, 4*hidden_size, bias=False), stored
    # transposed and pre-split into the input / hidden halves.
    bound = 1.0 / jnp.sqrt(D_IN + H)
    w_x = jax.random.uniform(kwx, (D_IN, 4 * H), jnp.float32, -bound, bound)
    w_h = jax.random.uniform(kwh, (H, 4 * H), jnp.float32, -bound, bound)

    # LayerNorm params: rows 0..3 = f,i,o,u gate norms, row 4 = cell norm.
    ln_gamma = 1.0 + 0.1 * jax.random.normal(kg, (5, H), jnp.float32)
    ln_beta = 0.1 * jax.random.normal(kb, (5, H), jnp.float32)

    hs, cs = layer_norm_lstm_seq(xs, h0, c0, w_x, w_h, ln_gamma, ln_beta)
    jax.block_until_ready((hs, cs))

    # 1) Tight check vs a matched-precision reference (same bf16 h @ w_h,
    #    f32 hoisted x @ w_x -- same math as the kernel).
    hs_m, cs_m = reference_seq_matched(xs, h0, c0, w_x, w_h, ln_gamma, ln_beta)
    assert jnp.allclose(hs, hs_m, atol=2e-3, rtol=2e-3), "matched-ref h mismatch"
    assert jnp.allclose(cs, cs_m, atol=2e-3, rtol=2e-3), "matched-ref c mismatch"

    # 2) Sanity check vs the full-f32 PyTorch-semantics reference (bf16 h path
    #    compounds over the recurrence, so compare in RMS terms).
    hs_f, cs_f = reference_seq_f32(xs, h0, c0, w_x, w_h, ln_gamma, ln_beta)

    def rel_rms(a, b):
        return jnp.sqrt(jnp.mean(jnp.square(a - b))
                        / (jnp.mean(jnp.square(b)) + 1e-12))

    assert rel_rms(hs, hs_f) < 3e-2, "f32-ref h drift too large"
    assert rel_rms(cs, cs_f) < 3e-2, "f32-ref c drift too large"

    # 3) Single-step wrapper matches a single module forward.
    h1, c1 = layer_norm_lstm_cell(xs[0], h0, c0, w_x, w_h, ln_gamma, ln_beta)
    h1_r, c1_r = (a[0] for a in reference_seq_matched(
        xs[:1], h0, c0, w_x, w_h, ln_gamma, ln_beta))
    assert jnp.allclose(h1, h1_r, atol=2e-3, rtol=2e-3)
    assert jnp.allclose(c1, c1_r, atol=2e-3, rtol=2e-3)

    print("KERNEL_OK")
</pallas_src>

<mosaic_0001>
module attributes {stable_mosaic.version = 11 : i64} {
  func.func @lstm_seq_kernel(%arg0: i32, %arg1: i32, %arg2: memref<8x8x512xf32, #tpu.memory_space<vmem>>, %arg3: memref<8x128xf32, #tpu.memory_space<vmem>>, %arg4: memref<8x128xf32, #tpu.memory_space<vmem>>, %arg5: memref<128x512xbf16, #tpu.memory_space<vmem>>, %arg6: memref<5x128xf32, #tpu.memory_space<vmem>>, %arg7: memref<5x128xf32, #tpu.memory_space<vmem>>, %arg8: memref<8x8x128xf32, #tpu.memory_space<vmem>>, %arg9: memref<8x8x128xf32, #tpu.memory_space<vmem>>, %arg10: memref<8x128xbf16, #tpu.memory_space<vmem>>, %arg11: memref<8x128xf32, #tpu.memory_space<vmem>>) attributes {dimension_semantics = [#tpu.dimension_semantics<parallel>, #tpu.dimension_semantics<arbitrary>], iteration_bounds = array<i64: 1, 2>, scalar_prefetch = 0 : i64, scratch_operands = 2 : i64, tpu.core_type = #tpu.core_type<tc>, window_params = [{transform_indices = @transform_0, window_bounds = array<i64: 8, 8, 512>}, {transform_indices = @transform_1, window_bounds = array<i64: 8, 128>}, {transform_indices = @transform_2, window_bounds = array<i64: 8, 128>}, {pipeline_mode = #tpu.pipeline_mode<synchronous>, transform_indices = @transform_3, window_bounds = array<i64: 128, 512>}, {pipeline_mode = #tpu.pipeline_mode<synchronous>, transform_indices = @transform_4, window_bounds = array<i64: 5, 128>}, {pipeline_mode = #tpu.pipeline_mode<synchronous>, transform_indices = @transform_5, window_bounds = array<i64: 5, 128>}, {transform_indices = @transform_6, window_bounds = array<i64: 8, 8, 128>}, {transform_indices = @transform_7, window_bounds = array<i64: 8, 8, 128>}]} {
    %c0_i32 = arith.constant 0 : i32
    %0 = arith.cmpi eq, %arg1, %c0_i32 : i32
    %1 = arith.extui %0 : i1 to i32
    %c0_i32_0 = arith.constant 0 : i32
    %2 = arith.cmpi ne, %1, %c0_i32_0 : i32
    scf.if %2 {
      %c0_366 = arith.constant 0 : index
      %c0_367 = arith.constant 0 : index
      %1286 = vector.load %arg3[%c0_366, %c0_367] : memref<8x128xf32, #tpu.memory_space<vmem>>, vector<8x128xf32>
      %1287 = arith.truncf %1286 : vector<8x128xf32> to vector<8x128xbf16>
      %c0_368 = arith.constant 0 : index
      %c0_369 = arith.constant 0 : index
      %1288 = vector.load %arg10[%c0_368, %c0_369] : memref<8x128xbf16, #tpu.memory_space<vmem>>, vector<8x128xbf16>
      tpu.vector_store %arg10[%c0_368, %c0_369], %1287 {strides = array<i32>} : memref<8x128xbf16, #tpu.memory_space<vmem>>, vector<8x128xbf16>,
      %c0_370 = arith.constant 0 : index
      %c0_371 = arith.constant 0 : index
      %1289 = vector.load %arg4[%c0_370, %c0_371] : memref<8x128xf32, #tpu.memory_space<vmem>>, vector<8x128xf32>
      %c0_372 = arith.constant 0 : index
      %c0_373 = arith.constant 0 : index
      %1290 = vector.load %arg11[%c0_372, %c0_373] : memref<8x128xf32, #tpu.memory_space<vmem>>, vector<8x128xf32>
      tpu.vector_store %arg11[%c0_372, %c0_373], %1289 {strides = array<i32>} : memref<8x128xf32, #tpu.memory_space<vmem>>, vector<8x128xf32>,
    } else {
    }
    %c0 = arith.constant 0 : index
    %c0_1 = arith.constant 0 : index
    %3 = vector.load %arg5[%c0, %c0_1] : memref<128x512xbf16, #tpu.memory_space<vmem>>, vector<128x512xbf16>
    %c0_2 = arith.constant 0 : index
    %c0_3 = arith.constant 0 : index
    %4 = vector.load %arg6[%c0_2, %c0_3] : memref<5x128xf32, #tpu.memory_space<vmem>>, vector<5x128xf32>
    %c0_4 = arith.constant 0 : index
    %c0_5 = arith.constant 0 : index
    %5 = vector.load %arg7[%c0_4, %c0_5] : memref<5x128xf32, #tpu.memory_space<vmem>>, vector<5x128xf32>
    %c0_6 = arith.constant 0 : index
    %c0_7 = arith.constant 0 : index
    %c0_8 = arith.constant 0 : index
    %6 = vector.load %arg2[%c0_6, %c0_7, %c0_8] : memref<8x8x512xf32, #tpu.memory_space<vmem>>, vector<1x8x512xf32>
    %7 = vector.shape_cast %6 : vector<1x8x512xf32> to vector<8x512xf32>
    %c0_9 = arith.constant 0 : index
    %c0_10 = arith.constant 0 : index
    %8 = vector.load %arg10[%c0_9, %c0_10] : memref<8x128xbf16, #tpu.memory_space<vmem>>, vector<8x128xbf16>
    %cst = arith.constant dense<0.000000e+00> : vector<8x512xf32>
    %9 = tpu.matmul %8, %3, %cst {dimension_numbers = #tpu.dot_dimension_numbers<[1], [0], [0], [1], [0, 0, 1, 1], [], []>} : vector<8x128xbf16>, vector<128x512xbf16>, vector<8x512xf32> -> vector<8x512xf32>
    %10 = arith.addf %7, %9 : vector<8x512xf32>
    %11 = vector.extract_strided_slice %10 {offsets = [0, 0], sizes = [8, 128], strides = [1, 1]} : vector<8x512xf32> to vector<8x128xf32>
    %cst_11 = arith.constant dense<0.000000e+00> : vector<8xf32>
    %12 = vector.multi_reduction <add>, %11, %cst_11 [1] : vector<8x128xf32> to vector<8xf32>
    %13 = vector.shape_cast %12 : vector<8xf32> to vector<8x1xf32>
    %cst_12 = arith.constant 1.280000e+02 : f32
    %14 = vector.broadcast %cst_12 : f32 to vector<8x1xf32>
    %15 = arith.divf %13, %14 : vector<8x1xf32>
    %16 = arith.mulf %11, %11 : vector<8x128xf32>
    %cst_13 = arith.constant dense<0.000000e+00> : vector<8xf32>
    %17 = vector.multi_reduction <add>, %16, %cst_13 [1] : vector<8x128xf32> to vector<8xf32>
    %18 = vector.shape_cast %17 : vector<8xf32> to vector<8x1xf32>
    %cst_14 = arith.constant 1.280000e+02 : f32
    %19 = vector.broadcast %cst_14 : f32 to vector<8x1xf32>
    %20 = arith.divf %18, %19 : vector<8x1xf32>
    %21 = arith.mulf %15, %15 : vector<8x1xf32>
    %22 = arith.subf %20, %21 : vector<8x1xf32>
    %23 = vector.broadcast %15 : vector<8x1xf32> to vector<8x128xf32>
    %24 = arith.subf %11, %23 : vector<8x128xf32>
    %cst_15 = arith.constant 9.99999974E-6 : f32
    %25 = vector.broadcast %cst_15 : f32 to vector<8x1xf32>
    %26 = arith.addf %22, %25 : vector<8x1xf32>
    %27 = math.rsqrt %26 : vector<8x1xf32>
    %28 = vector.broadcast %27 : vector<8x1xf32> to vector<8x128xf32>
    %29 = arith.mulf %24, %28 : vector<8x128xf32>
    %30 = vector.extract_strided_slice %4 {offsets = [0, 0], sizes = [1, 128], strides = [1, 1]} : vector<5x128xf32> to vector<1x128xf32>
    %31 = vector.broadcast %30 : vector<1x128xf32> to vector<8x128xf32>
    %32 = arith.mulf %29, %31 : vector<8x128xf32>
    %33 = vector.extract_strided_slice %5 {offsets = [0, 0], sizes = [1, 128], strides = [1, 1]} : vector<5x128xf32> to vector<1x128xf32>
    %34 = vector.broadcast %33 : vector<1x128xf32> to vector<8x128xf32>
    %35 = arith.addf %32, %34 : vector<8x128xf32>
    %36 = arith.negf %35 : vector<8x128xf32>
    %37 = math.exp %36 : vector<8x128xf32>
    %cst_16 = arith.constant 1.000000e+00 : f32
    %38 = vector.broadcast %cst_16 : f32 to vector<8x128xf32>
    %39 = arith.addf %38, %37 : vector<8x128xf32>
    %40 = arith.divf %38, %39 : vector<8x128xf32>
    %41 = vector.extract_strided_slice %10 {offsets = [0, 128], sizes = [8, 128], strides = [1, 1]} : vector<8x512xf32> to vector<8x128xf32>
    %cst_17 = arith.constant dense<0.000000e+00> : vector<8xf32>
    %42 = vector.multi_reduction <add>, %41, %cst_17 [1] : vector<8x128xf32> to vector<8xf32>
    %43 = vector.shape_cast %42 : vector<8xf32> to vector<8x1xf32>
    %cst_18 = arith.constant 1.280000e+02 : f32
    %44 = vector.broadcast %cst_18 : f32 to vector<8x1xf32>
    %45 = arith.divf %43, %44 : vector<8x1xf32>
    %46 = arith.mulf %41, %41 : vector<8x128xf32>
    %cst_19 = arith.constant dense<0.000000e+00> : vector<8xf32>
    %47 = vector.multi_reduction <add>, %46, %cst_19 [1] : vector<8x128xf32> to vector<8xf32>
    %48 = vector.shape_cast %47 : vector<8xf32> to vector<8x1xf32>
    %cst_20 = arith.constant 1.280000e+02 : f32
    %49 = vector.broadcast %cst_20 : f32 to vector<8x1xf32>
    %50 = arith.divf %48, %49 : vector<8x1xf32>
    %51 = arith.mulf %45, %45 : vector<8x1xf32>
    %52 = arith.subf %50, %51 : vector<8x1xf32>
    %53 = vector.broadcast %45 : vector<8x1xf32> to vector<8x128xf32>
    %54 = arith.subf %41, %53 : vector<8x128xf32>
    %cst_21 = arith.constant 9.99999974E-6 : f32
    %55 = vector.broadcast %cst_21 : f32 to vector<8x1xf32>
    %56 = arith.addf %52, %55 : vector<8x1xf32>
    %57 = math.rsqrt %56 : vector<8x1xf32>
    %58 = vector.broadcast %57 : vector<8x1xf32> to vector<8x128xf32>
    %59 = arith.mulf %54, %58 : vector<8x128xf32>
    %60 = vector.extract_strided_slice %4 {offsets = [1, 0], sizes = [1, 128], strides = [1, 1]} : vector<5x128xf32> to vector<1x128xf32>
    %61 = vector.broadcast %60 : vector<1x128xf32> to vector<8x128xf32>
    %62 = arith.mulf %59, %61 : vector<8x128xf32>
    %63 = vector.extract_strided_slice %5 {offsets = [1, 0], sizes = [1, 128], strides = [1, 1]} : vector<5x128xf32> to vector<1x128xf32>
    %64 = vector.broadcast %63 : vector<1x128xf32> to vector<8x128xf32>
    %65 = arith.addf %62, %64 : vector<8x128xf32>
    %66 = arith.negf %65 : vector<8x128xf32>
    %67 = math.exp %66 : vector<8x128xf32>
    %cst_22 = arith.constant 1.000000e+00 : f32
    %68 = vector.broadcast %cst_22 : f32 to vector<8x128xf32>
    %69 = arith.addf %68, %67 : vector<8x128xf32>
    %70 = arith.divf %68, %69 : vector<8x128xf32>
    %71 = vector.extract_strided_slice %10 {offsets = [0, 256], sizes = [8, 128], strides = [1, 1]} : vector<8x512xf32> to vector<8x128xf32>
    %cst_23 = arith.constant dense<0.000000e+00> : vector<8xf32>
    %72 = vector.multi_reduction <add>, %71, %cst_23 [1] : vector<8x128xf32> to vector<8xf32>
    %73 = vector.shape_cast %72 : vector<8xf32> to vector<8x1xf32>
    %cst_24 = arith.constant 1.280000e+02 : f32
    %74 = vector.broadcast %cst_24 : f32 to vector<8x1xf32>
    %75 = arith.divf %73, %74 : vector<8x1xf32>
    %76 = arith.mulf %71, %71 : vector<8x128xf32>
    %cst_25 = arith.constant dense<0.000000e+00> : vector<8xf32>
    %77 = vector.multi_reduction <add>, %76, %cst_25 [1] : vector<8x128xf32> to vector<8xf32>
    %78 = vector.shape_cast %77 : vector<8xf32> to vector<8x1xf32>
    %cst_26 = arith.constant 1.280000e+02 : f32
    %79 = vector.broadcast %cst_26 : f32 to vector<8x1xf32>
    %80 = arith.divf %78, %79 : vector<8x1xf32>
    %81 = arith.mulf %75, %75 : vector<8x1xf32>
    %82 = arith.subf %80, %81 : vector<8x1xf32>
    %83 = vector.broadcast %75 : vector<8x1xf32> to vector<8x128xf32>
    %84 = arith.subf %71, %83 : vector<8x128xf32>
    %cst_27 = arith.constant 9.99999974E-6 : f32
    %85 = vector.broadcast %cst_27 : f32 to vector<8x1xf32>
    %86 = arith.addf %82, %85 : vector<8x1xf32>
    %87 = math.rsqrt %86 : vector<8x1xf32>
    %88 = vector.broadcast %87 : vector<8x1xf32> to vector<8x128xf32>
    %89 = arith.mulf %84, %88 : vector<8x128xf32>
    %90 = vector.extract_strided_slice %4 {offsets = [2, 0], sizes = [1, 128], strides = [1, 1]} : vector<5x128xf32> to vector<1x128xf32>
    %91 = vector.broadcast %90 : vector<1x128xf32> to vector<8x128xf32>
    %92 = arith.mulf %89, %91 : vector<8x128xf32>
    %93 = vector.extract_strided_slice %5 {offsets = [2, 0], sizes = [1, 128], strides = [1, 1]} : vector<5x128xf32> to vector<1x128xf32>
    %94 = vector.broadcast %93 : vector<1x128xf32> to vector<8x128xf32>
    %95 = arith.addf %92, %94 : vector<8x128xf32>
    %96 = arith.negf %95 : vector<8x128xf32>
    %97 = math.exp %96 : vector<8x128xf32>
    %cst_28 = arith.constant 1.000000e+00 : f32
    %98 = vector.broadcast %cst_28 : f32 to vector<8x128xf32>
    %99 = arith.addf %98, %97 : vector<8x128xf32>
    %100 = arith.divf %98, %99 : vector<8x128xf32>
    %101 = vector.extract_strided_slice %10 {offsets = [0, 384], sizes = [8, 128], strides = [1, 1]} : vector<8x512xf32> to vector<8x128xf32>
    %cst_29 = arith.constant dense<0.000000e+00> : vector<8xf32>
    %102 = vector.multi_reduction <add>, %101, %cst_29 [1] : vector<8x128xf32> to vector<8xf32>
    %103 = vector.shape_cast %102 : vector<8xf32> to vector<8x1xf32>
    %cst_30 = arith.constant 1.280000e+02 : f32
    %104 = vector.broadcast %cst_30 : f32 to vector<8x1xf32>
    %105 = arith.divf %103, %104 : vector<8x1xf32>
    %106 = arith.mulf %101, %101 : vector<8x128xf32>
    %cst_31 = arith.constant dense<0.000000e+00> : vector<8xf32>
    %107 = vector.multi_reduction <add>, %106, %cst_31 [1] : vector<8x128xf32> to vector<8xf32>
    %108 = vector.shape_cast %107 : vector<8xf32> to vector<8x1xf32>
    %cst_32 = arith.constant 1.280000e+02 : f32
    %109 = vector.broadcast %cst_32 : f32 to vector<8x1xf32>
    %110 = arith.divf %108, %109 : vector<8x1xf32>
    %111 = arith.mulf %105, %105 : vector<8x1xf32>
    %112 = arith.subf %110, %111 : vector<8x1xf32>
    %113 = vector.broadcast %105 : vector<8x1xf32> to vector<8x128xf32>
    %114 = arith.subf %101, %113 : vector<8x128xf32>
    %cst_33 = arith.constant 9.99999974E-6 : f32
    %115 = vector.broadcast %cst_33 : f32 to vector<8x1xf32>
    %116 = arith.addf %112, %115 : vector<8x1xf32>
    %117 = math.rsqrt %116 : vector<8x1xf32>
    %118 = vector.broadcast %117 : vector<8x1xf32> to vector<8x128xf32>
    %119 = arith.mulf %114, %118 : vector<8x128xf32>
    %120 = vector.extract_strided_slice %4 {offsets = [3, 0], sizes = [1, 128], strides = [1, 1]} : vector<5x128xf32> to vector<1x128xf32>
    %121 = vector.broadcast %120 : vector<1x128xf32> to vector<8x128xf32>
    %122 = arith.mulf %119, %121 : vector<8x128xf32>
    %123 = vector.extract_strided_slice %5 {offsets = [3, 0], sizes = [1, 128], strides = [1, 1]} : vector<5x128xf32> to vector<1x128xf32>
    %124 = vector.broadcast %123 : vector<1x128xf32> to vector<8x128xf32>
    %125 = arith.addf %122, %124 : vector<8x128xf32>
    %126 = math.tanh %125 : vector<8x128xf32>
    %127 = arith.mulf %70, %126 : vector<8x128xf32>
    %c0_34 = arith.constant 0 : index
    %c0_35 = arith.constant 0 : index
    %128 = vector.load %arg11[%c0_34, %c0_35] : memref<8x128xf32, #tpu.memory_space<vmem>>, vector<8x128xf32>
    %129 = arith.mulf %40, %128 : vector<8x128xf32>
    %130 = arith.addf %127, %129 : vector<8x128xf32>
    %cst_36 = arith.constant dense<0.000000e+00> : vector<8xf32>
    %131 = vector.multi_reduction <add>, %130, %cst_36 [1] : vector<8x128xf32> to vector<8xf32>
    %132 = vector.shape_cast %131 : vector<8xf32> to vector<8x1xf32>
    %cst_37 = arith.constant 1.280000e+02 : f32
    %133 = vector.broadcast %cst_37 : f32 to vector<8x1xf32>
    %134 = arith.divf %132, %133 : vector<8x1xf32>
    %135 = arith.mulf %130, %130 : vector<8x128xf32>
    %cst_38 = arith.constant dense<0.000000e+00> : vector<8xf32>
    %136 = vector.multi_reduction <add>, %135, %cst_38 [1] : vector<8x128xf32> to vector<8xf32>
    %137 = vector.shape_cast %136 : vector<8xf32> to vector<8x1xf32>
    %cst_39 = arith.constant 1.280000e+02 : f32
    %138 = vector.broadcast %cst_39 : f32 to vector<8x1xf32>
    %139 = arith.divf %137, %138 : vector<8x1xf32>
    %140 = arith.mulf %134, %134 : vector<8x1xf32>
    %141 = arith.subf %139, %140 : vector<8x1xf32>
    %142 = vector.broadcast %134 : vector<8x1xf32> to vector<8x128xf32>
    %143 = arith.subf %130, %142 : vector<8x128xf32>
    %cst_40 = arith.constant 9.99999974E-6 : f32
    %144 = vector.broadcast %cst_40 : f32 to vector<8x1xf32>
    %145 = arith.addf %141, %144 : vector<8x1xf32>
    %146 = math.rsqrt %145 : vector<8x1xf32>
    %147 = vector.broadcast %146 : vector<8x1xf32> to vector<8x128xf32>
    %148 = arith.mulf %143, %147 : vector<8x128xf32>
    %149 = vector.extract_strided_slice %4 {offsets = [4, 0], sizes = [1, 128], strides = [1, 1]} : vector<5x128xf32> to vector<1x128xf32>
    %150 = vector.broadcast %149 : vector<1x128xf32> to vector<8x128xf32>
    %151 = arith.mulf %148, %150 : vector<8x128xf32>
    %152 = vector.extract_strided_slice %5 {offsets = [4, 0], sizes = [1, 128], strides = [1, 1]} : vector<5x128xf32> to vector<1x128xf32>
    %153 = vector.broadcast %152 : vector<1x128xf32> to vector<8x128xf32>
    %154 = arith.addf %151, %153 : vector<8x128xf32>
    %155 = math.tanh %154 : vector<8x128xf32>
    %156 = arith.mulf %100, %155 : vector<8x128xf32>
    %157 = arith.truncf %156 : vector<8x128xf32> to vector<8x128xbf16>
    %c0_41 = arith.constant 0 : index
    %c0_42 = arith.constant 0 : index
    %158 = vector.load %arg10[%c0_41, %c0_42] : memref<8x128xbf16, #tpu.memory_space<vmem>>, vector<8x128xbf16>
    tpu.vector_store %arg10[%c0_41, %c0_42], %157 {strides = array<i32>} : memref<8x128xbf16, #tpu.memory_space<vmem>>, vector<8x128xbf16>,
    %c0_43 = arith.constant 0 : index
    %c0_44 = arith.constant 0 : index
    %159 = vector.load %arg11[%c0_43, %c0_44] : memref<8x128xf32, #tpu.memory_space<vmem>>, vector<8x128xf32>
    tpu.vector_store %arg11[%c0_43, %c0_44], %154 {strides = array<i32>} : memref<8x128xf32, #tpu.memory_space<vmem>>, vector<8x128xf32>,
    %c0_45 = arith.constant 0 : index
    %c0_46 = arith.constant 0 : index
    %c0_47 = arith.constant 0 : index
    %160 = vector.load %arg8[%c0_45, %c0_46, %c0_47] : memref<8x8x128xf32, #tpu.memory_space<vmem>>, vector<1x8x128xf32>
    %161 = vector.shape_cast %160 : vector<1x8x128xf32> to vector<8x128xf32>
    %162 = vector.shape_cast %156 : vector<8x128xf32> to vector<1x8x128xf32>
    tpu.vector_store %arg8[%c0_45, %c0_46, %c0_47], %162 {strides = array<i32>} : memref<8x8x128xf32, #tpu.memory_space<vmem>>, vector<1x8x128xf32>,
    %c0_48 = arith.constant 0 : index
    %c0_49 = arith.constant 0 : index
    %c0_50 = arith.constant 0 : index
    %163 = vector.load %arg9[%c0_48, %c0_49, %c0_50] : memref<8x8x128xf32, #tpu.memory_space<vmem>>, vector<1x8x128xf32>
    %164 = vector.shape_cast %163 : vector<1x8x128xf32> to vector<8x128xf32>
    %165 = vector.shape_cast %154 : vector<8x128xf32> to vector<1x8x128xf32>
    tpu.vector_store %arg9[%c0_48, %c0_49, %c0_50], %165 {strides = array<i32>} : memref<8x8x128xf32, #tpu.memory_space<vmem>>, vector<1x8x128xf32>,
    %c1 = arith.constant 1 : index
    %c0_51 = arith.constant 0 : index
    %c0_52 = arith.constant 0 : index
    %166 = vector.load %arg2[%c1, %c0_51, %c0_52] : memref<8x8x512xf32, #tpu.memory_space<vmem>>, vector<1x8x512xf32>
    %167 = vector.shape_cast %166 : vector<1x8x512xf32> to vector<8x512xf32>
    %c0_53 = arith.constant 0 : index
    %c0_54 = arith.constant 0 : index
    %168 = vector.load %arg10[%c0_53, %c0_54] : memref<8x128xbf16, #tpu.memory_space<vmem>>, vector<8x128xbf16>
    %cst_55 = arith.constant dense<0.000000e+00> : vector<8x512xf32>
    %169 = tpu.matmul %168, %3, %cst_55 {dimension_numbers = #tpu.dot_dimension_numbers<[1], [0], [0], [1], [0, 0, 1, 1], [], []>} : vector<8x128xbf16>, vector<128x512xbf16>, vector<8x512xf32> -> vector<8x512xf32>
    %170 = arith.addf %167, %169 : vector<8x512xf32>
    %171 = vector.extract_strided_slice %170 {offsets = [0, 0], sizes = [8, 128], strides = [1, 1]} : vector<8x512xf32> to vector<8x128xf32>
    %cst_56 = arith.constant dense<0.000000e+00> : vector<8xf32>
    %172 = vector.multi_reduction <add>, %171, %cst_56 [1] : vector<8x128xf32> to vector<8xf32>
    %173 = vector.shape_cast %172 : vector<8xf32> to vector<8x1xf32>
    %cst_57 = arith.constant 1.280000e+02 : f32
    %174 = vector.broadcast %cst_57 : f32 to vector<8x1xf32>
    %175 = arith.divf %173, %174 : vector<8x1xf32>
    %176 = arith.mulf %171, %171 : vector<8x128xf32>
    %cst_58 = arith.constant dense<0.000000e+00> : vector<8xf32>
    %177 = vector.multi_reduction <add>, %176, %cst_58 [1] : vector<8x128xf32> to vector<8xf32>
    %178 = vector.shape_cast %177 : vector<8xf32> to vector<8x1xf32>
    %cst_59 = arith.constant 1.280000e+02 : f32
    %179 = vector.broadcast %cst_59 : f32 to vector<8x1xf32>
    %180 = arith.divf %178, %179 : vector<8x1xf32>
    %181 = arith.mulf %175, %175 : vector<8x1xf32>
    %182 = arith.subf %180, %181 : vector<8x1xf32>
    %183 = vector.broadcast %175 : vector<8x1xf32> to vector<8x128xf32>
    %184 = arith.subf %171, %183 : vector<8x128xf32>
    %cst_60 = arith.constant 9.99999974E-6 : f32
    %185 = vector.broadcast %cst_60 : f32 to vector<8x1xf32>
    %186 = arith.addf %182, %185 : vector<8x1xf32>
    %187 = math.rsqrt %186 : vector<8x1xf32>
    %188 = vector.broadcast %187 : vector<8x1xf32> to vector<8x128xf32>
    %189 = arith.mulf %184, %188 : vector<8x128xf32>
    %190 = vector.extract_strided_slice %4 {offsets = [0, 0], sizes = [1, 128], strides = [1, 1]} : vector<5x128xf32> to vector<1x128xf32>
    %191 = vector.broadcast %190 : vector<1x128xf32> to vector<8x128xf32>
    %192 = arith.mulf %189, %191 : vector<8x128xf32>
    %193 = vector.extract_strided_slice %5 {offsets = [0, 0], sizes = [1, 128], strides = [1, 1]} : vector<5x128xf32> to vector<1x128xf32>
    %194 = vector.broadcast %193 : vector<1x128xf32> to vector<8x128xf32>
    %195 = arith.addf %192, %194 : vector<8x128xf32>
    %196 = arith.negf %195 : vector<8x128xf32>
    %197 = math.exp %196 : vector<8x128xf32>
    %cst_61 = arith.constant 1.000000e+00 : f32
    %198 = vector.broadcast %cst_61 : f32 to vector<8x128xf32>
    %199 = arith.addf %198, %197 : vector<8x128xf32>
    %200 = arith.divf %198, %199 : vector<8x128xf32>
    %201 = vector.extract_strided_slice %170 {offsets = [0, 128], sizes = [8, 128], strides = [1, 1]} : vector<8x512xf32> to vector<8x128xf32>
    %cst_62 = arith.constant dense<0.000000e+00> : vector<8xf32>
    %202 = vector.multi_reduction <add>, %201, %cst_62 [1] : vector<8x128xf32> to vector<8xf32>
    %203 = vector.shape_cast %202 : vector<8xf32> to vector<8x1xf32>
    %cst_63 = arith.constant 1.280000e+02 : f32
    %204 = vector.broadcast %cst_63 : f32 to vector<8x1xf32>
    %205 = arith.divf %203, %204 : vector<8x1xf32>
    %206 = arith.mulf %201, %201 : vector<8x128xf32>
    %cst_64 = arith.constant dense<0.000000e+00> : vector<8xf32>
    %207 = vector.multi_reduction <add>, %206, %cst_64 [1] : vector<8x128xf32> to vector<8xf32>
    %208 = vector.shape_cast %207 : vector<8xf32> to vector<8x1xf32>
    %cst_65 = arith.constant 1.280000e+02 : f32
    %209 = vector.broadcast %cst_65 : f32 to vector<8x1xf32>
    %210 = arith.divf %208, %209 : vector<8x1xf32>
    %211 = arith.mulf %205, %205 : vector<8x1xf32>
    %212 = arith.subf %210, %211 : vector<8x1xf32>
    %213 = vector.broadcast %205 : vector<8x1xf32> to vector<8x128xf32>
    %214 = arith.subf %201, %213 : vector<8x128xf32>
    %cst_66 = arith.constant 9.99999974E-6 : f32
    %215 = vector.broadcast %cst_66 : f32 to vector<8x1xf32>
    %216 = arith.addf %212, %215 : vector<8x1xf32>
    %217 = math.rsqrt %216 : vector<8x1xf32>
    %218 = vector.broadcast %217 : vector<8x1xf32> to vector<8x128xf32>
    %219 = arith.mulf %214, %218 : vector<8x128xf32>
    %220 = vector.extract_strided_slice %4 {offsets = [1, 0], sizes = [1, 128], strides = [1, 1]} : vector<5x128xf32> to vector<1x128xf32>
    %221 = vector.broadcast %220 : vector<1x128xf32> to vector<8x128xf32>
    %222 = arith.mulf %219, %221 : vector<8x128xf32>
    %223 = vector.extract_strided_slice %5 {offsets = [1, 0], sizes = [1, 128], strides = [1, 1]} : vector<5x128xf32> to vector<1x128xf32>
    %224 = vector.broadcast %223 : vector<1x128xf32> to vector<8x128xf32>
    %225 = arith.addf %222, %224 : vector<8x128xf32>
    %226 = arith.negf %225 : vector<8x128xf32>
    %227 = math.exp %226 : vector<8x128xf32>
    %cst_67 = arith.constant 1.000000e+00 : f32
    %228 = vector.broadcast %cst_67 : f32 to vector<8x128xf32>
    %229 = arith.addf %228, %227 : vector<8x128xf32>
    %230 = arith.divf %228, %229 : vector<8x128xf32>
    %231 = vector.extract_strided_slice %170 {offsets = [0, 256], sizes = [8, 128], strides = [1, 1]} : vector<8x512xf32> to vector<8x128xf32>
    %cst_68 = arith.constant dense<0.000000e+00> : vector<8xf32>
    %232 = vector.multi_reduction <add>, %231, %cst_68 [1] : vector<8x128xf32> to vector<8xf32>
    %233 = vector.shape_cast %232 : vector<8xf32> to vector<8x1xf32>
    %cst_69 = arith.constant 1.280000e+02 : f32
    %234 = vector.broadcast %cst_69 : f32 to vector<8x1xf32>
    %235 = arith.divf %233, %234 : vector<8x1xf32>
    %236 = arith.mulf %231, %231 : vector<8x128xf32>
    %cst_70 = arith.constant dense<0.000000e+00> : vector<8xf32>
    %237 = vector.multi_reduction <add>, %236, %cst_70 [1] : vector<8x128xf32> to vector<8xf32>
    %238 = vector.shape_cast %237 : vector<8xf32> to vector<8x1xf32>
    %cst_71 = arith.constant 1.280000e+02 : f32
    %239 = vector.broadcast %cst_71 : f32 to vector<8x1xf32>
    %240 = arith.divf %238, %239 : vector<8x1xf32>
    %241 = arith.mulf %235, %235 : vector<8x1xf32>
    %242 = arith.subf %240, %241 : vector<8x1xf32>
    %243 = vector.broadcast %235 : vector<8x1xf32> to vector<8x128xf32>
    %244 = arith.subf %231, %243 : vector<8x128xf32>
    %cst_72 = arith.constant 9.99999974E-6 : f32
    %245 = vector.broadcast %cst_72 : f32 to vector<8x1xf32>
    %246 = arith.addf %242, %245 : vector<8x1xf32>
    %247 = math.rsqrt %246 : vector<8x1xf32>
    %248 = vector.broadcast %247 : vector<8x1xf32> to vector<8x128xf32>
    %249 = arith.mulf %244, %248 : vector<8x128xf32>
    %250 = vector.extract_strided_slice %4 {offsets = [2, 0], sizes = [1, 128], strides = [1, 1]} : vector<5x128xf32> to vector<1x128xf32>
    %251 = vector.broadcast %250 : vector<1x128xf32> to vector<8x128xf32>
    %252 = arith.mulf %249, %251 : vector<8x128xf32>
    %253 = vector.extract_strided_slice %5 {offsets = [2, 0], sizes = [1, 128], strides = [1, 1]} : vector<5x128xf32> to vector<1x128xf32>
    %254 = vector.broadcast %253 : vector<1x128xf32> to vector<8x128xf32>
    %255 = arith.addf %252, %254 : vector<8x128xf32>
    %256 = arith.negf %255 : vector<8x128xf32>
    %257 = math.exp %256 : vector<8x128xf32>
    %cst_73 = arith.constant 1.000000e+00 : f32
    %258 = vector.broadcast %cst_73 : f32 to vector<8x128xf32>
    %259 = arith.addf %258, %257 : vector<8x128xf32>
    %260 = arith.divf %258, %259 : vector<8x128xf32>
    %261 = vector.extract_strided_slice %170 {offsets = [0, 384], sizes = [8, 128], strides = [1, 1]} : vector<8x512xf32> to vector<8x128xf32>
    %cst_74 = arith.constant dense<0.000000e+00> : vector<8xf32>
    %262 = vector.multi_reduction <add>, %261, %cst_74 [1] : vector<8x128xf32> to vector<8xf32>
    %263 = vector.shape_cast %262 : vector<8xf32> to vector<8x1xf32>
    %cst_75 = arith.constant 1.280000e+02 : f32
    %264 = vector.broadcast %cst_75 : f32 to vector<8x1xf32>
    %265 = arith.divf %263, %264 : vector<8x1xf32>
    %266 = arith.mulf %261, %261 : vector<8x128xf32>
    %cst_76 = arith.constant dense<0.000000e+00> : vector<8xf32>
    %267 = vector.multi_reduction <add>, %266, %cst_76 [1] : vector<8x128xf32> to vector<8xf32>
    %268 = vector.shape_cast %267 : vector<8xf32> to vector<8x1xf32>
    %cst_77 = arith.constant 1.280000e+02 : f32
    %269 = vector.broadcast %cst_77 : f32 to vector<8x1xf32>
    %270 = arith.divf %268, %269 : vector<8x1xf32>
    %271 = arith.mulf %265, %265 : vector<8x1xf32>
    %272 = arith.subf %270, %271 : vector<8x1xf32>
    %273 = vector.broadcast %265 : vector<8x1xf32> to vector<8x128xf32>
    %274 = arith.subf %261, %273 : vector<8x128xf32>
    %cst_78 = arith.constant 9.99999974E-6 : f32
    %275 = vector.broadcast %cst_78 : f32 to vector<8x1xf32>
    %276 = arith.addf %272, %275 : vector<8x1xf32>
    %277 = math.rsqrt %276 : vector<8x1xf32>
    %278 = vector.broadcast %277 : vector<8x1xf32> to vector<8x128xf32>
    %279 = arith.mulf %274, %278 : vector<8x128xf32>
    %280 = vector.extract_strided_slice %4 {offsets = [3, 0], sizes = [1, 128], strides = [1, 1]} : vector<5x128xf32> to vector<1x128xf32>
    %281 = vector.broadcast %280 : vector<1x128xf32> to vector<8x128xf32>
    %282 = arith.mulf %279, %281 : vector<8x128xf32>
    %283 = vector.extract_strided_slice %5 {offsets = [3, 0], sizes = [1, 128], strides = [1, 1]} : vector<5x128xf32> to vector<1x128xf32>
    %284 = vector.broadcast %283 : vector<1x128xf32> to vector<8x128xf32>
    %285 = arith.addf %282, %284 : vector<8x128xf32>
    %286 = math.tanh %285 : vector<8x128xf32>
    %287 = arith.mulf %230, %286 : vector<8x128xf32>
    %c0_79 = arith.constant 0 : index
    %c0_80 = arith.constant 0 : index
    %288 = vector.load %arg11[%c0_79, %c0_80] : memref<8x128xf32, #tpu.memory_space<vmem>>, vector<8x128xf32>
    %289 = arith.mulf %200, %288 : vector<8x128xf32>
    %290 = arith.addf %287, %289 : vector<8x128xf32>
    %cst_81 = arith.constant dense<0.000000e+00> : vector<8xf32>
    %291 = vector.multi_reduction <add>, %290, %cst_81 [1] : vector<8x128xf32> to vector<8xf32>
    %292 = vector.shape_cast %291 : vector<8xf32> to vector<8x1xf32>
    %cst_82 = arith.constant 1.280000e+02 : f32
    %293 = vector.broadcast %cst_82 : f32 to vector<8x1xf32>
    %294 = arith.divf %292, %293 : vector<8x1xf32>
    %295 = arith.mulf %290, %290 : vector<8x128xf32>
    %cst_83 = arith.constant dense<0.000000e+00> : vector<8xf32>
    %296 = vector.multi_reduction <add>, %295, %cst_83 [1] : vector<8x128xf32> to vector<8xf32>
    %297 = vector.shape_cast %296 : vector<8xf32> to vector<8x1xf32>
    %cst_84 = arith.constant 1.280000e+02 : f32
    %298 = vector.broadcast %cst_84 : f32 to vector<8x1xf32>
    %299 = arith.divf %297, %298 : vector<8x1xf32>
    %300 = arith.mulf %294, %294 : vector<8x1xf32>
    %301 = arith.subf %299, %300 : vector<8x1xf32>
    %302 = vector.broadcast %294 : vector<8x1xf32> to vector<8x128xf32>
    %303 = arith.subf %290, %302 : vector<8x128xf32>
    %cst_85 = arith.constant 9.99999974E-6 : f32
    %304 = vector.broadcast %cst_85 : f32 to vector<8x1xf32>
    %305 = arith.addf %301, %304 : vector<8x1xf32>
    %306 = math.rsqrt %305 : vector<8x1xf32>
    %307 = vector.broadcast %306 : vector<8x1xf32> to vector<8x128xf32>
    %308 = arith.mulf %303, %307 : vector<8x128xf32>
    %309 = vector.extract_strided_slice %4 {offsets = [4, 0], sizes = [1, 128], strides = [1, 1]} : vector<5x128xf32> to vector<1x128xf32>
    %310 = vector.broadcast %309 : vector<1x128xf32> to vector<8x128xf32>
    %311 = arith.mulf %308, %310 : vector<8x128xf32>
    %312 = vector.extract_strided_slice %5 {offsets = [4, 0], sizes = [1, 128], strides = [1, 1]} : vector<5x128xf32> to vector<1x128xf32>
    %313 = vector.broadcast %312 : vector<1x128xf32> to vector<8x128xf32>
    %314 = arith.addf %311, %313 : vector<8x128xf32>
    %315 = math.tanh %314 : vector<8x128xf32>
    %316 = arith.mulf %260, %315 : vector<8x128xf32>
    %317 = arith.truncf %316 : vector<8x128xf32> to vector<8x128xbf16>
    %c0_86 = arith.constant 0 : index
    %c0_87 = arith.constant 0 : index
    %318 = vector.load %arg10[%c0_86, %c0_87] : memref<8x128xbf16, #tpu.memory_space<vmem>>, vector<8x128xbf16>
    tpu.vector_store %arg10[%c0_86, %c0_87], %317 {strides = array<i32>} : memref<8x128xbf16, #tpu.memory_space<vmem>>, vector<8x128xbf16>,
    %c0_88 = arith.constant 0 : index
    %c0_89 = arith.constant 0 : index
    %319 = vector.load %arg11[%c0_88, %c0_89] : memref<8x128xf32, #tpu.memory_space<vmem>>, vector<8x128xf32>
    tpu.vector_store %arg11[%c0_88, %c0_89], %314 {strides = array<i32>} : memref<8x128xf32, #tpu.memory_space<vmem>>, vector<8x128xf32>,
    %c1_90 = arith.constant 1 : index
    %c0_91 = arith.constant 0 : index
    %c0_92 = arith.constant 0 : index
    %320 = vector.load %arg8[%c1_90, %c0_91, %c0_92] : memref<8x8x128xf32, #tpu.memory_space<vmem>>, vector<1x8x128xf32>
    %321 = vector.shape_cast %320 : vector<1x8x128xf32> to vector<8x128xf32>
    %322 = vector.shape_cast %316 : vector<8x128xf32> to vector<1x8x128xf32>
    tpu.vector_store %arg8[%c1_90, %c0_91, %c0_92], %322 {strides = array<i32>} : memref<8x8x128xf32, #tpu.memory_space<vmem>>, vector<1x8x128xf32>,
    %c1_93 = arith.constant 1 : index
    %c0_94 = arith.constant 0 : index
    %c0_95 = arith.constant 0 : index
    %323 = vector.load %arg9[%c1_93, %c0_94, %c0_95] : memref<8x8x128xf32, #tpu.memory_space<vmem>>, vector<1x8x128xf32>
    %324 = vector.shape_cast %323 : vector<1x8x128xf32> to vector<8x128xf32>
    %325 = vector.shape_cast %314 : vector<8x128xf32> to vector<1x8x128xf32>
    tpu.vector_store %arg9[%c1_93, %c0_94, %c0_95], %325 {strides = array<i32>} : memref<8x8x128xf32, #tpu.memory_space<vmem>>, vector<1x8x128xf32>,
    %c2 = arith.constant 2 : index
    %c0_96 = arith.constant 0 : index
    %c0_97 = arith.constant 0 : index
    %326 = vector.load %arg2[%c2, %c0_96, %c0_97] : memref<8x8x512xf32, #tpu.memory_space<vmem>>, vector<1x8x512xf32>
    %327 = vector.shape_cast %326 : vector<1x8x512xf32> to vector<8x512xf32>
    %c0_98 = arith.constant 0 : index
    %c0_99 = arith.constant 0 : index
    %328 = vector.load %arg10[%c0_98, %c0_99] : memref<8x128xbf16, #tpu.memory_space<vmem>>, vector<8x128xbf16>
    %cst_100 = arith.constant dense<0.000000e+00> : vector<8x512xf32>
    %329 = tpu.matmul %328, %3, %cst_100 {dimension_numbers = #tpu.dot_dimension_numbers<[1], [0], [0], [1], [0, 0, 1, 1], [], []>} : vector<8x128xbf16>, vector<128x512xbf16>, vector<8x512xf32> -> vector<8x512xf32>
    %330 = arith.addf %327, %329 : vector<8x512xf32>
    %331 = vector.extract_strided_slice %330 {offsets = [0, 0], sizes = [8, 128], strides = [1, 1]} : vector<8x512xf32> to vector<8x128xf32>
    %cst_101 = arith.constant dense<0.000000e+00> : vector<8xf32>
    %332 = vector.multi_reduction <add>, %331, %cst_101 [1] : vector<8x128xf32> to vector<8xf32>
    %333 = vector.shape_cast %332 : vector<8xf32> to vector<8x1xf32>
    %cst_102 = arith.constant 1.280000e+02 : f32
    %334 = vector.broadcast %cst_102 : f32 to vector<8x1xf32>
    %335 = arith.divf %333, %334 : vector<8x1xf32>
    %336 = arith.mulf %331, %331 : vector<8x128xf32>
    %cst_103 = arith.constant dense<0.000000e+00> : vector<8xf32>
    %337 = vector.multi_reduction <add>, %336, %cst_103 [1] : vector<8x128xf32> to vector<8xf32>
    %338 = vector.shape_cast %337 : vector<8xf32> to vector<8x1xf32>
    %cst_104 = arith.constant 1.280000e+02 : f32
    %339 = vector.broadcast %cst_104 : f32 to vector<8x1xf32>
    %340 = arith.divf %338, %339 : vector<8x1xf32>
    %341 = arith.mulf %335, %335 : vector<8x1xf32>
    %342 = arith.subf %340, %341 : vector<8x1xf32>
    %343 = vector.broadcast %335 : vector<8x1xf32> to vector<8x128xf32>
    %344 = arith.subf %331, %343 : vector<8x128xf32>
    %cst_105 = arith.constant 9.99999974E-6 : f32
    %345 = vector.broadcast %cst_105 : f32 to vector<8x1xf32>
    %346 = arith.addf %342, %345 : vector<8x1xf32>
    %347 = math.rsqrt %346 : vector<8x1xf32>
    %348 = vector.broadcast %347 : vector<8x1xf32> to vector<8x128xf32>
    %349 = arith.mulf %344, %348 : vector<8x128xf32>
    %350 = vector.extract_strided_slice %4 {offsets = [0, 0], sizes = [1, 128], strides = [1, 1]} : vector<5x128xf32> to vector<1x128xf32>
    %351 = vector.broadcast %350 : vector<1x128xf32> to vector<8x128xf32>
    %352 = arith.mulf %349, %351 : vector<8x128xf32>
    %353 = vector.extract_strided_slice %5 {offsets = [0, 0], sizes = [1, 128], strides = [1, 1]} : vector<5x128xf32> to vector<1x128xf32>
    %354 = vector.broadcast %353 : vector<1x128xf32> to vector<8x128xf32>
    %355 = arith.addf %352, %354 : vector<8x128xf32>
    %356 = arith.negf %355 : vector<8x128xf32>
    %357 = math.exp %356 : vector<8x128xf32>
    %cst_106 = arith.constant 1.000000e+00 : f32
    %358 = vector.broadcast %cst_106 : f32 to vector<8x128xf32>
    %359 = arith.addf %358, %357 : vector<8x128xf32>
    %360 = arith.divf %358, %359 : vector<8x128xf32>
    %361 = vector.extract_strided_slice %330 {offsets = [0, 128], sizes = [8, 128], strides = [1, 1]} : vector<8x512xf32> to vector<8x128xf32>
    %cst_107 = arith.constant dense<0.000000e+00> : vector<8xf32>
    %362 = vector.multi_reduction <add>, %361, %cst_107 [1] : vector<8x128xf32> to vector<8xf32>
    %363 = vector.shape_cast %362 : vector<8xf32> to vector<8x1xf32>
    %cst_108 = arith.constant 1.280000e+02 : f32
    %364 = vector.broadcast %cst_108 : f32 to vector<8x1xf32>
    %365 = arith.divf %363, %364 : vector<8x1xf32>
    %366 = arith.mulf %361, %361 : vector<8x128xf32>
    %cst_109 = arith.constant dense<0.000000e+00> : vector<8xf32>
    %367 = vector.multi_reduction <add>, %366, %cst_109 [1] : vector<8x128xf32> to vector<8xf32>
    %368 = vector.shape_cast %367 : vector<8xf32> to vector<8x1xf32>
    %cst_110 = arith.constant 1.280000e+02 : f32
    %369 = vector.broadcast %cst_110 : f32 to vector<8x1xf32>
    %370 = arith.divf %368, %369 : vector<8x1xf32>
    %371 = arith.mulf %365, %365 : vector<8x1xf32>
    %372 = arith.subf %370, %371 : vector<8x1xf32>
    %373 = vector.broadcast %365 : vector<8x1xf32> to vector<8x128xf32>
    %374 = arith.subf %361, %373 : vector<8x128xf32>
    %cst_111 = arith.constant 9.99999974E-6 : f32
    %375 = vector.broadcast %cst_111 : f32 to vector<8x1xf32>
    %376 = arith.addf %372, %375 : vector<8x1xf32>
    %377 = math.rsqrt %376 : vector<8x1xf32>
    %378 = vector.broadcast %377 : vector<8x1xf32> to vector<8x128xf32>
    %379 = arith.mulf %374, %378 : vector<8x128xf32>
    %380 = vector.extract_strided_slice %4 {offsets = [1, 0], sizes = [1, 128], strides = [1, 1]} : vector<5x128xf32> to vector<1x128xf32>
    %381 = vector.broadcast %380 : vector<1x128xf32> to vector<8x128xf32>
    %382 = arith.mulf %379, %381 : vector<8x128xf32>
    %383 = vector.extract_strided_slice %5 {offsets = [1, 0], sizes = [1, 128], strides = [1, 1]} : vector<5x128xf32> to vector<1x128xf32>
    %384 = vector.broadcast %383 : vector<1x128xf32> to vector<8x128xf32>
    %385 = arith.addf %382, %384 : vector<8x128xf32>
    %386 = arith.negf %385 : vector<8x128xf32>
    %387 = math.exp %386 : vector<8x128xf32>
    %cst_112 = arith.constant 1.000000e+00 : f32
    %388 = vector.broadcast %cst_112 : f32 to vector<8x128xf32>
    %389 = arith.addf %388, %387 : vector<8x128xf32>
    %390 = arith.divf %388, %389 : vector<8x128xf32>
    %391 = vector.extract_strided_slice %330 {offsets = [0, 256], sizes = [8, 128], strides = [1, 1]} : vector<8x512xf32> to vector<8x128xf32>
    %cst_113 = arith.constant dense<0.000000e+00> : vector<8xf32>
    %392 = vector.multi_reduction <add>, %391, %cst_113 [1] : vector<8x128xf32> to vector<8xf32>
    %393 = vector.shape_cast %392 : vector<8xf32> to vector<8x1xf32>
    %cst_114 = arith.constant 1.280000e+02 : f32
    %394 = vector.broadcast %cst_114 : f32 to vector<8x1xf32>
    %395 = arith.divf %393, %394 : vector<8x1xf32>
    %396 = arith.mulf %391, %391 : vector<8x128xf32>
    %cst_115 = arith.constant dense<0.000000e+00> : vector<8xf32>
    %397 = vector.multi_reduction <add>, %396, %cst_115 [1] : vector<8x128xf32> to vector<8xf32>
    %398 = vector.shape_cast %397 : vector<8xf32> to vector<8x1xf32>
    %cst_116 = arith.constant 1.280000e+02 : f32
    %399 = vector.broadcast %cst_116 : f32 to vector<8x1xf32>
    %400 = arith.divf %398, %399 : vector<8x1xf32>
    %401 = arith.mulf %395, %395 : vector<8x1xf32>
    %402 = arith.subf %400, %401 : vector<8x1xf32>
    %403 = vector.broadcast %395 : vector<8x1xf32> to vector<8x128xf32>
    %404 = arith.subf %391, %403 : vector<8x128xf32>
    %cst_117 = arith.constant 9.99999974E-6 : f32
    %405 = vector.broadcast %cst_117 : f32 to vector<8x1xf32>
    %406 = arith.addf %402, %405 : vector<8x1xf32>
    %407 = math.rsqrt %406 : vector<8x1xf32>
    %408 = vector.broadcast %407 : vector<8x1xf32> to vector<8x128xf32>
    %409 = arith.mulf %404, %408 : vector<8x128xf32>
    %410 = vector.extract_strided_slice %4 {offsets = [2, 0], sizes = [1, 128], strides = [1, 1]} : vector<5x128xf32> to vector<1x128xf32>
    %411 = vector.broadcast %410 : vector<1x128xf32> to vector<8x128xf32>
    %412 = arith.mulf %409, %411 : vector<8x128xf32>
    %413 = vector.extract_strided_slice %5 {offsets = [2, 0], sizes = [1, 128], strides = [1, 1]} : vector<5x128xf32> to vector<1x128xf32>
    %414 = vector.broadcast %413 : vector<1x128xf32> to vector<8x128xf32>
    %415 = arith.addf %412, %414 : vector<8x128xf32>
    %416 = arith.negf %415 : vector<8x128xf32>
    %417 = math.exp %416 : vector<8x128xf32>
    %cst_118 = arith.constant 1.000000e+00 : f32
    %418 = vector.broadcast %cst_118 : f32 to vector<8x128xf32>
    %419 = arith.addf %418, %417 : vector<8x128xf32>
    %420 = arith.divf %418, %419 : vector<8x128xf32>
    %421 = vector.extract_strided_slice %330 {offsets = [0, 384], sizes = [8, 128], strides = [1, 1]} : vector<8x512xf32> to vector<8x128xf32>
    %cst_119 = arith.constant dense<0.000000e+00> : vector<8xf32>
    %422 = vector.multi_reduction <add>, %421, %cst_119 [1] : vector<8x128xf32> to vector<8xf32>
    %423 = vector.shape_cast %422 : vector<8xf32> to vector<8x1xf32>
    %cst_120 = arith.constant 1.280000e+02 : f32
    %424 = vector.broadcast %cst_120 : f32 to vector<8x1xf32>
    %425 = arith.divf %423, %424 : vector<8x1xf32>
    %426 = arith.mulf %421, %421 : vector<8x128xf32>
    %cst_121 = arith.constant dense<0.000000e+00> : vector<8xf32>
    %427 = vector.multi_reduction <add>, %426, %cst_121 [1] : vector<8x128xf32> to vector<8xf32>
    %428 = vector.shape_cast %427 : vector<8xf32> to vector<8x1xf32>
    %cst_122 = arith.constant 1.280000e+02 : f32
    %429 = vector.broadcast %cst_122 : f32 to vector<8x1xf32>
    %430 = arith.divf %428, %429 : vector<8x1xf32>
    %431 = arith.mulf %425, %425 : vector<8x1xf32>
    %432 = arith.subf %430, %431 : vector<8x1xf32>
    %433 = vector.broadcast %425 : vector<8x1xf32> to vector<8x128xf32>
    %434 = arith.subf %421, %433 : vector<8x128xf32>
    %cst_123 = arith.constant 9.99999974E-6 : f32
    %435 = vector.broadcast %cst_123 : f32 to vector<8x1xf32>
    %436 = arith.addf %432, %435 : vector<8x1xf32>
    %437 = math.rsqrt %436 : vector<8x1xf32>
    %438 = vector.broadcast %437 : vector<8x1xf32> to vector<8x128xf32>
    %439 = arith.mulf %434, %438 : vector<8x128xf32>
    %440 = vector.extract_strided_slice %4 {offsets = [3, 0], sizes = [1, 128], strides = [1, 1]} : vector<5x128xf32> to vector<1x128xf32>
    %441 = vector.broadcast %440 : vector<1x128xf32> to vector<8x128xf32>
    %442 = arith.mulf %439, %441 : vector<8x128xf32>
    %443 = vector.extract_strided_slice %5 {offsets = [3, 0], sizes = [1, 128], strides = [1, 1]} : vector<5x128xf32> to vector<1x128xf32>
    %444 = vector.broadcast %443 : vector<1x128xf32> to vector<8x128xf32>
    %445 = arith.addf %442, %444 : vector<8x128xf32>
    %446 = math.tanh %445 : vector<8x128xf32>
    %447 = arith.mulf %390, %446 : vector<8x128xf32>
    %c0_124 = arith.constant 0 : index
    %c0_125 = arith.constant 0 : index
    %448 = vector.load %arg11[%c0_124, %c0_125] : memref<8x128xf32, #tpu.memory_space<vmem>>, vector<8x128xf32>
    %449 = arith.mulf %360, %448 : vector<8x128xf32>
    %450 = arith.addf %447, %449 : vector<8x128xf32>
    %cst_126 = arith.constant dense<0.000000e+00> : vector<8xf32>
    %451 = vector.multi_reduction <add>, %450, %cst_126 [1] : vector<8x128xf32> to vector<8xf32>
    %452 = vector.shape_cast %451 : vector<8xf32> to vector<8x1xf32>
    %cst_127 = arith.constant 1.280000e+02 : f32
    %453 = vector.broadcast %cst_127 : f32 to vector<8x1xf32>
    %454 = arith.divf %452, %453 : vector<8x1xf32>
    %455 = arith.mulf %450, %450 : vector<8x128xf32>
    %cst_128 = arith.constant dense<0.000000e+00> : vector<8xf32>
    %456 = vector.multi_reduction <add>, %455, %cst_128 [1] : vector<8x128xf32> to vector<8xf32>
    %457 = vector.shape_cast %456 : vector<8xf32> to vector<8x1xf32>
    %cst_129 = arith.constant 1.280000e+02 : f32
    %458 = vector.broadcast %cst_129 : f32 to vector<8x1xf32>
    %459 = arith.divf %457, %458 : vector<8x1xf32>
    %460 = arith.mulf %454, %454 : vector<8x1xf32>
    %461 = arith.subf %459, %460 : vector<8x1xf32>
    %462 = vector.broadcast %454 : vector<8x1xf32> to vector<8x128xf32>
    %463 = arith.subf %450, %462 : vector<8x128xf32>
    %cst_130 = arith.constant 9.99999974E-6 : f32
    %464 = vector.broadcast %cst_130 : f32 to vector<8x1xf32>
    %465 = arith.addf %461, %464 : vector<8x1xf32>
    %466 = math.rsqrt %465 : vector<8x1xf32>
    %467 = vector.broadcast %466 : vector<8x1xf32> to vector<8x128xf32>
    %468 = arith.mulf %463, %467 : vector<8x128xf32>
    %469 = vector.extract_strided_slice %4 {offsets = [4, 0], sizes = [1, 128], strides = [1, 1]} : vector<5x128xf32> to vector<1x128xf32>
    %470 = vector.broadcast %469 : vector<1x128xf32> to vector<8x128xf32>
    %471 = arith.mulf %468, %470 : vector<8x128xf32>
    %472 = vector.extract_strided_slice %5 {offsets = [4, 0], sizes = [1, 128], strides = [1, 1]} : vector<5x128xf32> to vector<1x128xf32>
    %473 = vector.broadcast %472 : vector<1x128xf32> to vector<8x128xf32>
    %474 = arith.addf %471, %473 : vector<8x128xf32>
    %475 = math.tanh %474 : vector<8x128xf32>
    %476 = arith.mulf %420, %475 : vector<8x128xf32>
    %477 = arith.truncf %476 : vector<8x128xf32> to vector<8x128xbf16>
    %c0_131 = arith.constant 0 : index
    %c0_132 = arith.constant 0 : index
    %478 = vector.load %arg10[%c0_131, %c0_132] : memref<8x128xbf16, #tpu.memory_space<vmem>>, vector<8x128xbf16>
    tpu.vector_store %arg10[%c0_131, %c0_132], %477 {strides = array<i32>} : memref<8x128xbf16, #tpu.memory_space<vmem>>, vector<8x128xbf16>,
    %c0_133 = arith.constant 0 : index
    %c0_134 = arith.constant 0 : index
    %479 = vector.load %arg11[%c0_133, %c0_134] : memref<8x128xf32, #tpu.memory_space<vmem>>, vector<8x128xf32>
    tpu.vector_store %arg11[%c0_133, %c0_134], %474 {strides = array<i32>} : memref<8x128xf32, #tpu.memory_space<vmem>>, vector<8x128xf32>,
    %c2_135 = arith.constant 2 : index
    %c0_136 = arith.constant 0 : index
    %c0_137 = arith.constant 0 : index
    %480 = vector.load %arg8[%c2_135, %c0_136, %c0_137] : memref<8x8x128xf32, #tpu.memory_space<vmem>>, vector<1x8x128xf32>
    %481 = vector.shape_cast %480 : vector<1x8x128xf32> to vector<8x128xf32>
    %482 = vector.shape_cast %476 : vector<8x128xf32> to vector<1x8x128xf32>
    tpu.vector_store %arg8[%c2_135, %c0_136, %c0_137], %482 {strides = array<i32>} : memref<8x8x128xf32, #tpu.memory_space<vmem>>, vector<1x8x128xf32>,
    %c2_138 = arith.constant 2 : index
    %c0_139 = arith.constant 0 : index
    %c0_140 = arith.constant 0 : index
    %483 = vector.load %arg9[%c2_138, %c0_139, %c0_140] : memref<8x8x128xf32, #tpu.memory_space<vmem>>, vector<1x8x128xf32>
    %484 = vector.shape_cast %483 : vector<1x8x128xf32> to vector<8x128xf32>
    %485 = vector.shape_cast %474 : vector<8x128xf32> to vector<1x8x128xf32>
    tpu.vector_store %arg9[%c2_138, %c0_139, %c0_140], %485 {strides = array<i32>} : memref<8x8x128xf32, #tpu.memory_space<vmem>>, vector<1x8x128xf32>,
    %c3 = arith.constant 3 : index
    %c0_141 = arith.constant 0 : index
    %c0_142 = arith.constant 0 : index
    %486 = vector.load %arg2[%c3, %c0_141, %c0_142] : memref<8x8x512xf32, #tpu.memory_space<vmem>>, vector<1x8x512xf32>
    %487 = vector.shape_cast %486 : vector<1x8x512xf32> to vector<8x512xf32>
    %c0_143 = arith.constant 0 : index
    %c0_144 = arith.constant 0 : index
    %488 = vector.load %arg10[%c0_143, %c0_144] : memref<8x128xbf16, #tpu.memory_space<vmem>>, vector<8x128xbf16>
    %cst_145 = arith.constant dense<0.000000e+00> : vector<8x512xf32>
    %489 = tpu.matmul %488, %3, %cst_145 {dimension_numbers = #tpu.dot_dimension_numbers<[1], [0], [0], [1], [0, 0, 1, 1], [], []>} : vector<8x128xbf16>, vector<128x512xbf16>, vector<8x512xf32> -> vector<8x512xf32>
    %490 = arith.addf %487, %489 : vector<8x512xf32>
    %491 = vector.extract_strided_slice %490 {offsets = [0, 0], sizes = [8, 128], strides = [1, 1]} : vector<8x512xf32> to vector<8x128xf32>
    %cst_146 = arith.constant dense<0.000000e+00> : vector<8xf32>
    %492 = vector.multi_reduction <add>, %491, %cst_146 [1] : vector<8x128xf32> to vector<8xf32>
    %493 = vector.shape_cast %492 : vector<8xf32> to vector<8x1xf32>
    %cst_147 = arith.constant 1.280000e+02 : f32
    %494 = vector.broadcast %cst_147 : f32 to vector<8x1xf32>
    %495 = arith.divf %493, %494 : vector<8x1xf32>
    %496 = arith.mulf %491, %491 : vector<8x128xf32>
    %cst_148 = arith.constant dense<0.000000e+00> : vector<8xf32>
    %497 = vector.multi_reduction <add>, %496, %cst_148 [1] : vector<8x128xf32> to vector<8xf32>
    %498 = vector.shape_cast %497 : vector<8xf32> to vector<8x1xf32>
    %cst_149 = arith.constant 1.280000e+02 : f32
    %499 = vector.broadcast %cst_149 : f32 to vector<8x1xf32>
    %500 = arith.divf %498, %499 : vector<8x1xf32>
    %501 = arith.mulf %495, %495 : vector<8x1xf32>
    %502 = arith.subf %500, %501 : vector<8x1xf32>
    %503 = vector.broadcast %495 : vector<8x1xf32> to vector<8x128xf32>
    %504 = arith.subf %491, %503 : vector<8x128xf32>
    %cst_150 = arith.constant 9.99999974E-6 : f32
    %505 = vector.broadcast %cst_150 : f32 to vector<8x1xf32>
    %506 = arith.addf %502, %505 : vector<8x1xf32>
    %507 = math.rsqrt %506 : vector<8x1xf32>
    %508 = vector.broadcast %507 : vector<8x1xf32> to vector<8x128xf32>
    %509 = arith.mulf %504, %508 : vector<8x128xf32>
    %510 = vector.extract_strided_slice %4 {offsets = [0, 0], sizes = [1, 128], strides = [1, 1]} : vector<5x128xf32> to vector<1x128xf32>
    %511 = vector.broadcast %510 : vector<1x128xf32> to vector<8x128xf32>
    %512 = arith.mulf %509, %511 : vector<8x128xf32>
    %513 = vector.extract_strided_slice %5 {offsets = [0, 0], sizes = [1, 128], strides = [1, 1]} : vector<5x128xf32> to vector<1x128xf32>
    %514 = vector.broadcast %513 : vector<1x128xf32> to vector<8x128xf32>
    %515 = arith.addf %512, %514 : vector<8x128xf32>
    %516 = arith.negf %515 : vector<8x128xf32>
    %517 = math.exp %516 : vector<8x128xf32>
    %cst_151 = arith.constant 1.000000e+00 : f32
    %518 = vector.broadcast %cst_151 : f32 to vector<8x128xf32>
    %519 = arith.addf %518, %517 : vector<8x128xf32>
    %520 = arith.divf %518, %519 : vector<8x128xf32>
    %521 = vector.extract_strided_slice %490 {offsets = [0, 128], sizes = [8, 128], strides = [1, 1]} : vector<8x512xf32> to vector<8x128xf32>
    %cst_152 = arith.constant dense<0.000000e+00> : vector<8xf32>
    %522 = vector.multi_reduction <add>, %521, %cst_152 [1] : vector<8x128xf32> to vector<8xf32>
    %523 = vector.shape_cast %522 : vector<8xf32> to vector<8x1xf32>
    %cst_153 = arith.constant 1.280000e+02 : f32
    %524 = vector.broadcast %cst_153 : f32 to vector<8x1xf32>
    %525 = arith.divf %523, %524 : vector<8x1xf32>
    %526 = arith.mulf %521, %521 : vector<8x128xf32>
    %cst_154 = arith.constant dense<0.000000e+00> : vector<8xf32>
    %527 = vector.multi_reduction <add>, %526, %cst_154 [1] : vector<8x128xf32> to vector<8xf32>
    %528 = vector.shape_cast %527 : vector<8xf32> to vector<8x1xf32>
    %cst_155 = arith.constant 1.280000e+02 : f32
    %529 = vector.broadcast %cst_155 : f32 to vector<8x1xf32>
    %530 = arith.divf %528, %529 : vector<8x1xf32>
    %531 = arith.mulf %525, %525 : vector<8x1xf32>
    %532 = arith.subf %530, %531 : vector<8x1xf32>
    %533 = vector.broadcast %525 : vector<8x1xf32> to vector<8x128xf32>
    %534 = arith.subf %521, %533 : vector<8x128xf32>
    %cst_156 = arith.constant 9.99999974E-6 : f32
    %535 = vector.broadcast %cst_156 : f32 to vector<8x1xf32>
    %536 = arith.addf %532, %535 : vector<8x1xf32>
    %537 = math.rsqrt %536 : vector<8x1xf32>
    %538 = vector.broadcast %537 : vector<8x1xf32> to vector<8x128xf32>
    %539 = arith.mulf %534, %538 : vector<8x128xf32>
    %540 = vector.extract_strided_slice %4 {offsets = [1, 0], sizes = [1, 128], strides = [1, 1]} : vector<5x128xf32> to vector<1x128xf32>
    %541 = vector.broadcast %540 : vector<1x128xf32> to vector<8x128xf32>
    %542 = arith.mulf %539, %541 : vector<8x128xf32>
    %543 = vector.extract_strided_slice %5 {offsets = [1, 0], sizes = [1, 128], strides = [1, 1]} : vector<5x128xf32> to vector<1x128xf32>
    %544 = vector.broadcast %543 : vector<1x128xf32> to vector<8x128xf32>
    %545 = arith.addf %542, %544 : vector<8x128xf32>
    %546 = arith.negf %545 : vector<8x128xf32>
    %547 = math.exp %546 : vector<8x128xf32>
    %cst_157 = arith.constant 1.000000e+00 : f32
    %548 = vector.broadcast %cst_157 : f32 to vector<8x128xf32>
    %549 = arith.addf %548, %547 : vector<8x128xf32>
    %550 = arith.divf %548, %549 : vector<8x128xf32>
    %551 = vector.extract_strided_slice %490 {offsets = [0, 256], sizes = [8, 128], strides = [1, 1]} : vector<8x512xf32> to vector<8x128xf32>
    %cst_158 = arith.constant dense<0.000000e+00> : vector<8xf32>
    %552 = vector.multi_reduction <add>, %551, %cst_158 [1] : vector<8x128xf32> to vector<8xf32>
    %553 = vector.shape_cast %552 : vector<8xf32> to vector<8x1xf32>
    %cst_159 = arith.constant 1.280000e+02 : f32
    %554 = vector.broadcast %cst_159 : f32 to vector<8x1xf32>
    %555 = arith.divf %553, %554 : vector<8x1xf32>
    %556 = arith.mulf %551, %551 : vector<8x128xf32>
    %cst_160 = arith.constant dense<0.000000e+00> : vector<8xf32>
    %557 = vector.multi_reduction <add>, %556, %cst_160 [1] : vector<8x128xf32> to vector<8xf32>
    %558 = vector.shape_cast %557 : vector<8xf32> to vector<8x1xf32>
    %cst_161 = arith.constant 1.280000e+02 : f32
    %559 = vector.broadcast %cst_161 : f32 to vector<8x1xf32>
    %560 = arith.divf %558, %559 : vector<8x1xf32>
    %561 = arith.mulf %555, %555 : vector<8x1xf32>
    %562 = arith.subf %560, %561 : vector<8x1xf32>
    %563 = vector.broadcast %555 : vector<8x1xf32> to vector<8x128xf32>
    %564 = arith.subf %551, %563 : vector<8x128xf32>
    %cst_162 = arith.constant 9.99999974E-6 : f32
    %565 = vector.broadcast %cst_162 : f32 to vector<8x1xf32>
    %566 = arith.addf %562, %565 : vector<8x1xf32>
    %567 = math.rsqrt %566 : vector<8x1xf32>
    %568 = vector.broadcast %567 : vector<8x1xf32> to vector<8x128xf32>
    %569 = arith.mulf %564, %568 : vector<8x128xf32>
    %570 = vector.extract_strided_slice %4 {offsets = [2, 0], sizes = [1, 128], strides = [1, 1]} : vector<5x128xf32> to vector<1x128xf32>
    %571 = vector.broadcast %570 : vector<1x128xf32> to vector<8x128xf32>
    %572 = arith.mulf %569, %571 : vector<8x128xf32>
    %573 = vector.extract_strided_slice %5 {offsets = [2, 0], sizes = [1, 128], strides = [1, 1]} : vector<5x128xf32> to vector<1x128xf32>
    %574 = vector.broadcast %573 : vector<1x128xf32> to vector<8x128xf32>
    %575 = arith.addf %572, %574 : vector<8x128xf32>
    %576 = arith.negf %575 : vector<8x128xf32>
    %577 = math.exp %576 : vector<8x128xf32>
    %cst_163 = arith.constant 1.000000e+00 : f32
    %578 = vector.broadcast %cst_163 : f32 to vector<8x128xf32>
    %579 = arith.addf %578, %577 : vector<8x128xf32>
    %580 = arith.divf %578, %579 : vector<8x128xf32>
    %581 = vector.extract_strided_slice %490 {offsets = [0, 384], sizes = [8, 128], strides = [1, 1]} : vector<8x512xf32> to vector<8x128xf32>
    %cst_164 = arith.constant dense<0.000000e+00> : vector<8xf32>
    %582 = vector.multi_reduction <add>, %581, %cst_164 [1] : vector<8x128xf32> to vector<8xf32>
    %583 = vector.shape_cast %582 : vector<8xf32> to vector<8x1xf32>
    %cst_165 = arith.constant 1.280000e+02 : f32
    %584 = vector.broadcast %cst_165 : f32 to vector<8x1xf32>
    %585 = arith.divf %583, %584 : vector<8x1xf32>
    %586 = arith.mulf %581, %581 : vector<8x128xf32>
    %cst_166 = arith.constant dense<0.000000e+00> : vector<8xf32>
    %587 = vector.multi_reduction <add>, %586, %cst_166 [1] : vector<8x128xf32> to vector<8xf32>
    %588 = vector.shape_cast %587 : vector<8xf32> to vector<8x1xf32>
    %cst_167 = arith.constant 1.280000e+02 : f32
    %589 = vector.broadcast %cst_167 : f32 to vector<8x1xf32>
    %590 = arith.divf %588, %589 : vector<8x1xf32>
    %591 = arith.mulf %585, %585 : vector<8x1xf32>
    %592 = arith.subf %590, %591 : vector<8x1xf32>
    %593 = vector.broadcast %585 : vector<8x1xf32> to vector<8x128xf32>
    %594 = arith.subf %581, %593 : vector<8x128xf32>
    %cst_168 = arith.constant 9.99999974E-6 : f32
    %595 = vector.broadcast %cst_168 : f32 to vector<8x1xf32>
    %596 = arith.addf %592, %595 : vector<8x1xf32>
    %597 = math.rsqrt %596 : vector<8x1xf32>
    %598 = vector.broadcast %597 : vector<8x1xf32> to vector<8x128xf32>
    %599 = arith.mulf %594, %598 : vector<8x128xf32>
    %600 = vector.extract_strided_slice %4 {offsets = [3, 0], sizes = [1, 128], strides = [1, 1]} : vector<5x128xf32> to vector<1x128xf32>
    %601 = vector.broadcast %600 : vector<1x128xf32> to vector<8x128xf32>
    %602 = arith.mulf %599, %601 : vector<8x128xf32>
    %603 = vector.extract_strided_slice %5 {offsets = [3, 0], sizes = [1, 128], strides = [1, 1]} : vector<5x128xf32> to vector<1x128xf32>
    %604 = vector.broadcast %603 : vector<1x128xf32> to vector<8x128xf32>
    %605 = arith.addf %602, %604 : vector<8x128xf32>
    %606 = math.tanh %605 : vector<8x128xf32>
    %607 = arith.mulf %550, %606 : vector<8x128xf32>
    %c0_169 = arith.constant 0 : index
    %c0_170 = arith.constant 0 : index
    %608 = vector.load %arg11[%c0_169, %c0_170] : memref<8x128xf32, #tpu.memory_space<vmem>>, vector<8x128xf32>
    %609 = arith.mulf %520, %608 : vector<8x128xf32>
    %610 = arith.addf %607, %609 : vector<8x128xf32>
    %cst_171 = arith.constant dense<0.000000e+00> : vector<8xf32>
    %611 = vector.multi_reduction <add>, %610, %cst_171 [1] : vector<8x128xf32> to vector<8xf32>
    %612 = vector.shape_cast %611 : vector<8xf32> to vector<8x1xf32>
    %cst_172 = arith.constant 1.280000e+02 : f32
    %613 = vector.broadcast %cst_172 : f32 to vector<8x1xf32>
    %614 = arith.divf %612, %613 : vector<8x1xf32>
    %615 = arith.mulf %610, %610 : vector<8x128xf32>
    %cst_173 = arith.constant dense<0.000000e+00> : vector<8xf32>
    %616 = vector.multi_reduction <add>, %615, %cst_173 [1] : vector<8x128xf32> to vector<8xf32>
    %617 = vector.shape_cast %616 : vector<8xf32> to vector<8x1xf32>
    %cst_174 = arith.constant 1.280000e+02 : f32
    %618 = vector.broadcast %cst_174 : f32 to vector<8x1xf32>
    %619 = arith.divf %617, %618 : vector<8x1xf32>
    %620 = arith.mulf %614, %614 : vector<8x1xf32>
    %621 = arith.subf %619, %620 : vector<8x1xf32>
    %622 = vector.broadcast %614 : vector<8x1xf32> to vector<8x128xf32>
    %623 = arith.subf %610, %622 : vector<8x128xf32>
    %cst_175 = arith.constant 9.99999974E-6 : f32
    %624 = vector.broadcast %cst_175 : f32 to vector<8x1xf32>
    %625 = arith.addf %621, %624 : vector<8x1xf32>
    %626 = math.rsqrt %625 : vector<8x1xf32>
    %627 = vector.broadcast %626 : vector<8x1xf32> to vector<8x128xf32>
    %628 = arith.mulf %623, %627 : vector<8x128xf32>
    %629 = vector.extract_strided_slice %4 {offsets = [4, 0], sizes = [1, 128], strides = [1, 1]} : vector<5x128xf32> to vector<1x128xf32>
    %630 = vector.broadcast %629 : vector<1x128xf32> to vector<8x128xf32>
    %631 = arith.mulf %628, %630 : vector<8x128xf32>
    %632 = vector.extract_strided_slice %5 {offsets = [4, 0], sizes = [1, 128], strides = [1, 1]} : vector<5x128xf32> to vector<1x128xf32>
    %633 = vector.broadcast %632 : vector<1x128xf32> to vector<8x128xf32>
    %634 = arith.addf %631, %633 : vector<8x128xf32>
    %635 = math.tanh %634 : vector<8x128xf32>
    %636 = arith.mulf %580, %635 : vector<8x128xf32>
    %637 = arith.truncf %636 : vector<8x128xf32> to vector<8x128xbf16>
    %c0_176 = arith.constant 0 : index
    %c0_177 = arith.constant 0 : index
    %638 = vector.load %arg10[%c0_176, %c0_177] : memref<8x128xbf16, #tpu.memory_space<vmem>>, vector<8x128xbf16>
    tpu.vector_store %arg10[%c0_176, %c0_177], %637 {strides = array<i32>} : memref<8x128xbf16, #tpu.memory_space<vmem>>, vector<8x128xbf16>,
    %c0_178 = arith.constant 0 : index
    %c0_179 = arith.constant 0 : index
    %639 = vector.load %arg11[%c0_178, %c0_179] : memref<8x128xf32, #tpu.memory_space<vmem>>, vector<8x128xf32>
    tpu.vector_store %arg11[%c0_178, %c0_179], %634 {strides = array<i32>} : memref<8x128xf32, #tpu.memory_space<vmem>>, vector<8x128xf32>,
    %c3_180 = arith.constant 3 : index
    %c0_181 = arith.constant 0 : index
    %c0_182 = arith.constant 0 : index
    %640 = vector.load %arg8[%c3_180, %c0_181, %c0_182] : memref<8x8x128xf32, #tpu.memory_space<vmem>>, vector<1x8x128xf32>
    %641 = vector.shape_cast %640 : vector<1x8x128xf32> to vector<8x128xf32>
    %642 = vector.shape_cast %636 : vector<8x128xf32> to vector<1x8x128xf32>
    tpu.vector_store %arg8[%c3_180, %c0_181, %c0_182], %642 {strides = array<i32>} : memref<8x8x128xf32, #tpu.memory_space<vmem>>, vector<1x8x128xf32>,
    %c3_183 = arith.constant 3 : index
    %c0_184 = arith.constant 0 : index
    %c0_185 = arith.constant 0 : index
    %643 = vector.load %arg9[%c3_183, %c0_184, %c0_185] : memref<8x8x128xf32, #tpu.memory_space<vmem>>, vector<1x8x128xf32>
    %644 = vector.shape_cast %643 : vector<1x8x128xf32> to vector<8x128xf32>
    %645 = vector.shape_cast %634 : vector<8x128xf32> to vector<1x8x128xf32>
    tpu.vector_store %arg9[%c3_183, %c0_184, %c0_185], %645 {strides = array<i32>} : memref<8x8x128xf32, #tpu.memory_space<vmem>>, vector<1x8x128xf32>,
    %c4 = arith.constant 4 : index
    %c0_186 = arith.constant 0 : index
    %c0_187 = arith.constant 0 : index
    %646 = vector.load %arg2[%c4, %c0_186, %c0_187] : memref<8x8x512xf32, #tpu.memory_space<vmem>>, vector<1x8x512xf32>
    %647 = vector.shape_cast %646 : vector<1x8x512xf32> to vector<8x512xf32>
    %c0_188 = arith.constant 0 : index
    %c0_189 = arith.constant 0 : index
    %648 = vector.load %arg10[%c0_188, %c0_189] : memref<8x128xbf16, #tpu.memory_space<vmem>>, vector<8x128xbf16>
    %cst_190 = arith.constant dense<0.000000e+00> : vector<8x512xf32>
    %649 = tpu.matmul %648, %3, %cst_190 {dimension_numbers = #tpu.dot_dimension_numbers<[1], [0], [0], [1], [0, 0, 1, 1], [], []>} : vector<8x128xbf16>, vector<128x512xbf16>, vector<8x512xf32> -> vector<8x512xf32>
    %650 = arith.addf %647, %649 : vector<8x512xf32>
    %651 = vector.extract_strided_slice %650 {offsets = [0, 0], sizes = [8, 128], strides = [1, 1]} : vector<8x512xf32> to vector<8x128xf32>
    %cst_191 = arith.constant dense<0.000000e+00> : vector<8xf32>
    %652 = vector.multi_reduction <add>, %651, %cst_191 [1] : vector<8x128xf32> to vector<8xf32>
    %653 = vector.shape_cast %652 : vector<8xf32> to vector<8x1xf32>
    %cst_192 = arith.constant 1.280000e+02 : f32
    %654 = vector.broadcast %cst_192 : f32 to vector<8x1xf32>
    %655 = arith.divf %653, %654 : vector<8x1xf32>
    %656 = arith.mulf %651, %651 : vector<8x128xf32>
    %cst_193 = arith.constant dense<0.000000e+00> : vector<8xf32>
    %657 = vector.multi_reduction <add>, %656, %cst_193 [1] : vector<8x128xf32> to vector<8xf32>
    %658 = vector.shape_cast %657 : vector<8xf32> to vector<8x1xf32>
    %cst_194 = arith.constant 1.280000e+02 : f32
    %659 = vector.broadcast %cst_194 : f32 to vector<8x1xf32>
    %660 = arith.divf %658, %659 : vector<8x1xf32>
    %661 = arith.mulf %655, %655 : vector<8x1xf32>
    %662 = arith.subf %660, %661 : vector<8x1xf32>
    %663 = vector.broadcast %655 : vector<8x1xf32> to vector<8x128xf32>
    %664 = arith.subf %651, %663 : vector<8x128xf32>
    %cst_195 = arith.constant 9.99999974E-6 : f32
    %665 = vector.broadcast %cst_195 : f32 to vector<8x1xf32>
    %666 = arith.addf %662, %665 : vector<8x1xf32>
    %667 = math.rsqrt %666 : vector<8x1xf32>
    %668 = vector.broadcast %667 : vector<8x1xf32> to vector<8x128xf32>
    %669 = arith.mulf %664, %668 : vector<8x128xf32>
    %670 = vector.extract_strided_slice %4 {offsets = [0, 0], sizes = [1, 128], strides = [1, 1]} : vector<5x128xf32> to vector<1x128xf32>
    %671 = vector.broadcast %670 : vector<1x128xf32> to vector<8x128xf32>
    %672 = arith.mulf %669, %671 : vector<8x128xf32>
    %673 = vector.extract_strided_slice %5 {offsets = [0, 0], sizes = [1, 128], strides = [1, 1]} : vector<5x128xf32> to vector<1x128xf32>
    %674 = vector.broadcast %673 : vector<1x128xf32> to vector<8x128xf32>
    %675 = arith.addf %672, %674 : vector<8x128xf32>
    %676 = arith.negf %675 : vector<8x128xf32>
    %677 = math.exp %676 : vector<8x128xf32>
    %cst_196 = arith.constant 1.000000e+00 : f32
    %678 = vector.broadcast %cst_196 : f32 to vector<8x128xf32>
    %679 = arith.addf %678, %677 : vector<8x128xf32>
    %680 = arith.divf %678, %679 : vector<8x128xf32>
    %681 = vector.extract_strided_slice %650 {offsets = [0, 128], sizes = [8, 128], strides = [1, 1]} : vector<8x512xf32> to vector<8x128xf32>
    %cst_197 = arith.constant dense<0.000000e+00> : vector<8xf32>
    %682 = vector.multi_reduction <add>, %681, %cst_197 [1] : vector<8x128xf32> to vector<8xf32>
    %683 = vector.shape_cast %682 : vector<8xf32> to vector<8x1xf32>
    %cst_198 = arith.constant 1.280000e+02 : f32
    %684 = vector.broadcast %cst_198 : f32 to vector<8x1xf32>
    %685 = arith.divf %683, %684 : vector<8x1xf32>
    %686 = arith.mulf %681, %681 : vector<8x128xf32>
    %cst_199 = arith.constant dense<0.000000e+00> : vector<8xf32>
    %687 = vector.multi_reduction <add>, %686, %cst_199 [1] : vector<8x128xf32> to vector<8xf32>
    %688 = vector.shape_cast %687 : vector<8xf32> to vector<8x1xf32>
    %cst_200 = arith.constant 1.280000e+02 : f32
    %689 = vector.broadcast %cst_200 : f32 to vector<8x1xf32>
    %690 = arith.divf %688, %689 : vector<8x1xf32>
    %691 = arith.mulf %685, %685 : vector<8x1xf32>
    %692 = arith.subf %690, %691 : vector<8x1xf32>
    %693 = vector.broadcast %685 : vector<8x1xf32> to vector<8x128xf32>
    %694 = arith.subf %681, %693 : vector<8x128xf32>
    %cst_201 = arith.constant 9.99999974E-6 : f32
    %695 = vector.broadcast %cst_201 : f32 to vector<8x1xf32>
    %696 = arith.addf %692, %695 : vector<8x1xf32>
    %697 = math.rsqrt %696 : vector<8x1xf32>
    %698 = vector.broadcast %697 : vector<8x1xf32> to vector<8x128xf32>
    %699 = arith.mulf %694, %698 : vector<8x128xf32>
    %700 = vector.extract_strided_slice %4 {offsets = [1, 0], sizes = [1, 128], strides = [1, 1]} : vector<5x128xf32> to vector<1x128xf32>
    %701 = vector.broadcast %700 : vector<1x128xf32> to vector<8x128xf32>
    %702 = arith.mulf %699, %701 : vector<8x128xf32>
    %703 = vector.extract_strided_slice %5 {offsets = [1, 0], sizes = [1, 128], strides = [1, 1]} : vector<5x128xf32> to vector<1x128xf32>
    %704 = vector.broadcast %703 : vector<1x128xf32> to vector<8x128xf32>
    %705 = arith.addf %702, %704 : vector<8x128xf32>
    %706 = arith.negf %705 : vector<8x128xf32>
    %707 = math.exp %706 : vector<8x128xf32>
    %cst_202 = arith.constant 1.000000e+00 : f32
    %708 = vector.broadcast %cst_202 : f32 to vector<8x128xf32>
    %709 = arith.addf %708, %707 : vector<8x128xf32>
    %710 = arith.divf %708, %709 : vector<8x128xf32>
    %711 = vector.extract_strided_slice %650 {offsets = [0, 256], sizes = [8, 128], strides = [1, 1]} : vector<8x512xf32> to vector<8x128xf32>
    %cst_203 = arith.constant dense<0.000000e+00> : vector<8xf32>
    %712 = vector.multi_reduction <add>, %711, %cst_203 [1] : vector<8x128xf32> to vector<8xf32>
    %713 = vector.shape_cast %712 : vector<8xf32> to vector<8x1xf32>
    %cst_204 = arith.constant 1.280000e+02 : f32
    %714 = vector.broadcast %cst_204 : f32 to vector<8x1xf32>
    %715 = arith.divf %713, %714 : vector<8x1xf32>
    %716 = arith.mulf %711, %711 : vector<8x128xf32>
    %cst_205 = arith.constant dense<0.000000e+00> : vector<8xf32>
    %717 = vector.multi_reduction <add>, %716, %cst_205 [1] : vector<8x128xf32> to vector<8xf32>
    %718 = vector.shape_cast %717 : vector<8xf32> to vector<8x1xf32>
    %cst_206 = arith.constant 1.280000e+02 : f32
    %719 = vector.broadcast %cst_206 : f32 to vector<8x1xf32>
    %720 = arith.divf %718, %719 : vector<8x1xf32>
    %721 = arith.mulf %715, %715 : vector<8x1xf32>
    %722 = arith.subf %720, %721 : vector<8x1xf32>
    %723 = vector.broadcast %715 : vector<8x1xf32> to vector<8x128xf32>
    %724 = arith.subf %711, %723 : vector<8x128xf32>
    %cst_207 = arith.constant 9.99999974E-6 : f32
    %725 = vector.broadcast %cst_207 : f32 to vector<8x1xf32>
    %726 = arith.addf %722, %725 : vector<8x1xf32>
    %727 = math.rsqrt %726 : vector<8x1xf32>
    %728 = vector.broadcast %727 : vector<8x1xf32> to vector<8x128xf32>
    %729 = arith.mulf %724, %728 : vector<8x128xf32>
    %730 = vector.extract_strided_slice %4 {offsets = [2, 0], sizes = [1, 128], strides = [1, 1]} : vector<5x128xf32> to vector<1x128xf32>
    %731 = vector.broadcast %730 : vector<1x128xf32> to vector<8x128xf32>
    %732 = arith.mulf %729, %731 : vector<8x128xf32>
    %733 = vector.extract_strided_slice %5 {offsets = [2, 0], sizes = [1, 128], strides = [1, 1]} : vector<5x128xf32> to vector<1x128xf32>
    %734 = vector.broadcast %733 : vector<1x128xf32> to vector<8x128xf32>
    %735 = arith.addf %732, %734 : vector<8x128xf32>
    %736 = arith.negf %735 : vector<8x128xf32>
    %737 = math.exp %736 : vector<8x128xf32>
    %cst_208 = arith.constant 1.000000e+00 : f32
    %738 = vector.broadcast %cst_208 : f32 to vector<8x128xf32>
    %739 = arith.addf %738, %737 : vector<8x128xf32>
    %740 = arith.divf %738, %739 : vector<8x128xf32>
    %741 = vector.extract_strided_slice %650 {offsets = [0, 384], sizes = [8, 128], strides = [1, 1]} : vector<8x512xf32> to vector<8x128xf32>
    %cst_209 = arith.constant dense<0.000000e+00> : vector<8xf32>
    %742 = vector.multi_reduction <add>, %741, %cst_209 [1] : vector<8x128xf32> to vector<8xf32>
    %743 = vector.shape_cast %742 : vector<8xf32> to vector<8x1xf32>
    %cst_210 = arith.constant 1.280000e+02 : f32
    %744 = vector.broadcast %cst_210 : f32 to vector<8x1xf32>
    %745 = arith.divf %743, %744 : vector<8x1xf32>
    %746 = arith.mulf %741, %741 : vector<8x128xf32>
    %cst_211 = arith.constant dense<0.000000e+00> : vector<8xf32>
    %747 = vector.multi_reduction <add>, %746, %cst_211 [1] : vector<8x128xf32> to vector<8xf32>
    %748 = vector.shape_cast %747 : vector<8xf32> to vector<8x1xf32>
    %cst_212 = arith.constant 1.280000e+02 : f32
    %749 = vector.broadcast %cst_212 : f32 to vector<8x1xf32>
    %750 = arith.divf %748, %749 : vector<8x1xf32>
    %751 = arith.mulf %745, %745 : vector<8x1xf32>
    %752 = arith.subf %750, %751 : vector<8x1xf32>
    %753 = vector.broadcast %745 : vector<8x1xf32> to vector<8x128xf32>
    %754 = arith.subf %741, %753 : vector<8x128xf32>
    %cst_213 = arith.constant 9.99999974E-6 : f32
    %755 = vector.broadcast %cst_213 : f32 to vector<8x1xf32>
    %756 = arith.addf %752, %755 : vector<8x1xf32>
    %757 = math.rsqrt %756 : vector<8x1xf32>
    %758 = vector.broadcast %757 : vector<8x1xf32> to vector<8x128xf32>
    %759 = arith.mulf %754, %758 : vector<8x128xf32>
    %760 = vector.extract_strided_slice %4 {offsets = [3, 0], sizes = [1, 128], strides = [1, 1]} : vector<5x128xf32> to vector<1x128xf32>
    %761 = vector.broadcast %760 : vector<1x128xf32> to vector<8x128xf32>
    %762 = arith.mulf %759, %761 : vector<8x128xf32>
    %763 = vector.extract_strided_slice %5 {offsets = [3, 0], sizes = [1, 128], strides = [1, 1]} : vector<5x128xf32> to vector<1x128xf32>
    %764 = vector.broadcast %763 : vector<1x128xf32> to vector<8x128xf32>
    %765 = arith.addf %762, %764 : vector<8x128xf32>
    %766 = math.tanh %765 : vector<8x128xf32>
    %767 = arith.mulf %710, %766 : vector<8x128xf32>
    %c0_214 = arith.constant 0 : index
    %c0_215 = arith.constant 0 : index
    %768 = vector.load %arg11[%c0_214, %c0_215] : memref<8x128xf32, #tpu.memory_space<vmem>>, vector<8x128xf32>
    %769 = arith.mulf %680, %768 : vector<8x128xf32>
    %770 = arith.addf %767, %769 : vector<8x128xf32>
    %cst_216 = arith.constant dense<0.000000e+00> : vector<8xf32>
    %771 = vector.multi_reduction <add>, %770, %cst_216 [1] : vector<8x128xf32> to vector<8xf32>
    %772 = vector.shape_cast %771 : vector<8xf32> to vector<8x1xf32>
    %cst_217 = arith.constant 1.280000e+02 : f32
    %773 = vector.broadcast %cst_217 : f32 to vector<8x1xf32>
    %774 = arith.divf %772, %773 : vector<8x1xf32>
    %775 = arith.mulf %770, %770 : vector<8x128xf32>
    %cst_218 = arith.constant dense<0.000000e+00> : vector<8xf32>
    %776 = vector.multi_reduction <add>, %775, %cst_218 [1] : vector<8x128xf32> to vector<8xf32>
    %777 = vector.shape_cast %776 : vector<8xf32> to vector<8x1xf32>
    %cst_219 = arith.constant 1.280000e+02 : f32
    %778 = vector.broadcast %cst_219 : f32 to vector<8x1xf32>
    %779 = arith.divf %777, %778 : vector<8x1xf32>
    %780 = arith.mulf %774, %774 : vector<8x1xf32>
    %781 = arith.subf %779, %780 : vector<8x1xf32>
    %782 = vector.broadcast %774 : vector<8x1xf32> to vector<8x128xf32>
    %783 = arith.subf %770, %782 : vector<8x128xf32>
    %cst_220 = arith.constant 9.99999974E-6 : f32
    %784 = vector.broadcast %cst_220 : f32 to vector<8x1xf32>
    %785 = arith.addf %781, %784 : vector<8x1xf32>
    %786 = math.rsqrt %785 : vector<8x1xf32>
    %787 = vector.broadcast %786 : vector<8x1xf32> to vector<8x128xf32>
    %788 = arith.mulf %783, %787 : vector<8x128xf32>
    %789 = vector.extract_strided_slice %4 {offsets = [4, 0], sizes = [1, 128], strides = [1, 1]} : vector<5x128xf32> to vector<1x128xf32>
    %790 = vector.broadcast %789 : vector<1x128xf32> to vector<8x128xf32>
    %791 = arith.mulf %788, %790 : vector<8x128xf32>
    %792 = vector.extract_strided_slice %5 {offsets = [4, 0], sizes = [1, 128], strides = [1, 1]} : vector<5x128xf32> to vector<1x128xf32>
    %793 = vector.broadcast %792 : vector<1x128xf32> to vector<8x128xf32>
    %794 = arith.addf %791, %793 : vector<8x128xf32>
    %795 = math.tanh %794 : vector<8x128xf32>
    %796 = arith.mulf %740, %795 : vector<8x128xf32>
    %797 = arith.truncf %796 : vector<8x128xf32> to vector<8x128xbf16>
    %c0_221 = arith.constant 0 : index
    %c0_222 = arith.constant 0 : index
    %798 = vector.load %arg10[%c0_221, %c0_222] : memref<8x128xbf16, #tpu.memory_space<vmem>>, vector<8x128xbf16>
    tpu.vector_store %arg10[%c0_221, %c0_222], %797 {strides = array<i32>} : memref<8x128xbf16, #tpu.memory_space<vmem>>, vector<8x128xbf16>,
    %c0_223 = arith.constant 0 : index
    %c0_224 = arith.constant 0 : index
    %799 = vector.load %arg11[%c0_223, %c0_224] : memref<8x128xf32, #tpu.memory_space<vmem>>, vector<8x128xf32>
    tpu.vector_store %arg11[%c0_223, %c0_224], %794 {strides = array<i32>} : memref<8x128xf32, #tpu.memory_space<vmem>>, vector<8x128xf32>,
    %c4_225 = arith.constant 4 : index
    %c0_226 = arith.constant 0 : index
    %c0_227 = arith.constant 0 : index
    %800 = vector.load %arg8[%c4_225, %c0_226, %c0_227] : memref<8x8x128xf32, #tpu.memory_space<vmem>>, vector<1x8x128xf32>
    %801 = vector.shape_cast %800 : vector<1x8x128xf32> to vector<8x128xf32>
    %802 = vector.shape_cast %796 : vector<8x128xf32> to vector<1x8x128xf32>
    tpu.vector_store %arg8[%c4_225, %c0_226, %c0_227], %802 {strides = array<i32>} : memref<8x8x128xf32, #tpu.memory_space<vmem>>, vector<1x8x128xf32>,
    %c4_228 = arith.constant 4 : index
    %c0_229 = arith.constant 0 : index
    %c0_230 = arith.constant 0 : index
    %803 = vector.load %arg9[%c4_228, %c0_229, %c0_230] : memref<8x8x128xf32, #tpu.memory_space<vmem>>, vector<1x8x128xf32>
    %804 = vector.shape_cast %803 : vector<1x8x128xf32> to vector<8x128xf32>
    %805 = vector.shape_cast %794 : vector<8x128xf32> to vector<1x8x128xf32>
    tpu.vector_store %arg9[%c4_228, %c0_229, %c0_230], %805 {strides = array<i32>} : memref<8x8x128xf32, #tpu.memory_space<vmem>>, vector<1x8x128xf32>,
    %c5 = arith.constant 5 : index
    %c0_231 = arith.constant 0 : index
    %c0_232 = arith.constant 0 : index
    %806 = vector.load %arg2[%c5, %c0_231, %c0_232] : memref<8x8x512xf32, #tpu.memory_space<vmem>>, vector<1x8x512xf32>
    %807 = vector.shape_cast %806 : vector<1x8x512xf32> to vector<8x512xf32>
    %c0_233 = arith.constant 0 : index
    %c0_234 = arith.constant 0 : index
    %808 = vector.load %arg10[%c0_233, %c0_234] : memref<8x128xbf16, #tpu.memory_space<vmem>>, vector<8x128xbf16>
    %cst_235 = arith.constant dense<0.000000e+00> : vector<8x512xf32>
    %809 = tpu.matmul %808, %3, %cst_235 {dimension_numbers = #tpu.dot_dimension_numbers<[1], [0], [0], [1], [0, 0, 1, 1], [], []>} : vector<8x128xbf16>, vector<128x512xbf16>, vector<8x512xf32> -> vector<8x512xf32>
    %810 = arith.addf %807, %809 : vector<8x512xf32>
    %811 = vector.extract_strided_slice %810 {offsets = [0, 0], sizes = [8, 128], strides = [1, 1]} : vector<8x512xf32> to vector<8x128xf32>
    %cst_236 = arith.constant dense<0.000000e+00> : vector<8xf32>
    %812 = vector.multi_reduction <add>, %811, %cst_236 [1] : vector<8x128xf32> to vector<8xf32>
    %813 = vector.shape_cast %812 : vector<8xf32> to vector<8x1xf32>
    %cst_237 = arith.constant 1.280000e+02 : f32
    %814 = vector.broadcast %cst_237 : f32 to vector<8x1xf32>
    %815 = arith.divf %813, %814 : vector<8x1xf32>
    %816 = arith.mulf %811, %811 : vector<8x128xf32>
    %cst_238 = arith.constant dense<0.000000e+00> : vector<8xf32>
    %817 = vector.multi_reduction <add>, %816, %cst_238 [1] : vector<8x128xf32> to vector<8xf32>
    %818 = vector.shape_cast %817 : vector<8xf32> to vector<8x1xf32>
    %cst_239 = arith.constant 1.280000e+02 : f32
    %819 = vector.broadcast %cst_239 : f32 to vector<8x1xf32>
    %820 = arith.divf %818, %819 : vector<8x1xf32>
    %821 = arith.mulf %815, %815 : vector<8x1xf32>
    %822 = arith.subf %820, %821 : vector<8x1xf32>
    %823 = vector.broadcast %815 : vector<8x1xf32> to vector<8x128xf32>
    %824 = arith.subf %811, %823 : vector<8x128xf32>
    %cst_240 = arith.constant 9.99999974E-6 : f32
    %825 = vector.broadcast %cst_240 : f32 to vector<8x1xf32>
    %826 = arith.addf %822, %825 : vector<8x1xf32>
    %827 = math.rsqrt %826 : vector<8x1xf32>
    %828 = vector.broadcast %827 : vector<8x1xf32> to vector<8x128xf32>
    %829 = arith.mulf %824, %828 : vector<8x128xf32>
    %830 = vector.extract_strided_slice %4 {offsets = [0, 0], sizes = [1, 128], strides = [1, 1]} : vector<5x128xf32> to vector<1x128xf32>
    %831 = vector.broadcast %830 : vector<1x128xf32> to vector<8x128xf32>
    %832 = arith.mulf %829, %831 : vector<8x128xf32>
    %833 = vector.extract_strided_slice %5 {offsets = [0, 0], sizes = [1, 128], strides = [1, 1]} : vector<5x128xf32> to vector<1x128xf32>
    %834 = vector.broadcast %833 : vector<1x128xf32> to vector<8x128xf32>
    %835 = arith.addf %832, %834 : vector<8x128xf32>
    %836 = arith.negf %835 : vector<8x128xf32>
    %837 = math.exp %836 : vector<8x128xf32>
    %cst_241 = arith.constant 1.000000e+00 : f32
    %838 = vector.broadcast %cst_241 : f32 to vector<8x128xf32>
    %839 = arith.addf %838, %837 : vector<8x128xf32>
    %840 = arith.divf %838, %839 : vector<8x128xf32>
    %841 = vector.extract_strided_slice %810 {offsets = [0, 128], sizes = [8, 128], strides = [1, 1]} : vector<8x512xf32> to vector<8x128xf32>
    %cst_242 = arith.constant dense<0.000000e+00> : vector<8xf32>
    %842 = vector.multi_reduction <add>, %841, %cst_242 [1] : vector<8x128xf32> to vector<8xf32>
    %843 = vector.shape_cast %842 : vector<8xf32> to vector<8x1xf32>
    %cst_243 = arith.constant 1.280000e+02 : f32
    %844 = vector.broadcast %cst_243 : f32 to vector<8x1xf32>
    %845 = arith.divf %843, %844 : vector<8x1xf32>
    %846 = arith.mulf %841, %841 : vector<8x128xf32>
    %cst_244 = arith.constant dense<0.000000e+00> : vector<8xf32>
    %847 = vector.multi_reduction <add>, %846, %cst_244 [1] : vector<8x128xf32> to vector<8xf32>
    %848 = vector.shape_cast %847 : vector<8xf32> to vector<8x1xf32>
    %cst_245 = arith.constant 1.280000e+02 : f32
    %849 = vector.broadcast %cst_245 : f32 to vector<8x1xf32>
    %850 = arith.divf %848, %849 : vector<8x1xf32>
    %851 = arith.mulf %845, %845 : vector<8x1xf32>
    %852 = arith.subf %850, %851 : vector<8x1xf32>
    %853 = vector.broadcast %845 : vector<8x1xf32> to vector<8x128xf32>
    %854 = arith.subf %841, %853 : vector<8x128xf32>
    %cst_246 = arith.constant 9.99999974E-6 : f32
    %855 = vector.broadcast %cst_246 : f32 to vector<8x1xf32>
    %856 = arith.addf %852, %855 : vector<8x1xf32>
    %857 = math.rsqrt %856 : vector<8x1xf32>
    %858 = vector.broadcast %857 : vector<8x1xf32> to vector<8x128xf32>
    %859 = arith.mulf %854, %858 : vector<8x128xf32>
    %860 = vector.extract_strided_slice %4 {offsets = [1, 0], sizes = [1, 128], strides = [1, 1]} : vector<5x128xf32> to vector<1x128xf32>
    %861 = vector.broadcast %860 : vector<1x128xf32> to vector<8x128xf32>
    %862 = arith.mulf %859, %861 : vector<8x128xf32>
    %863 = vector.extract_strided_slice %5 {offsets = [1, 0], sizes = [1, 128], strides = [1, 1]} : vector<5x128xf32> to vector<1x128xf32>
    %864 = vector.broadcast %863 : vector<1x128xf32> to vector<8x128xf32>
    %865 = arith.addf %862, %864 : vector<8x128xf32>
    %866 = arith.negf %865 : vector<8x128xf32>
    %867 = math.exp %866 : vector<8x128xf32>
    %cst_247 = arith.constant 1.000000e+00 : f32
    %868 = vector.broadcast %cst_247 : f32 to vector<8x128xf32>
    %869 = arith.addf %868, %867 : vector<8x128xf32>
    %870 = arith.divf %868, %869 : vector<8x128xf32>
    %871 = vector.extract_strided_slice %810 {offsets = [0, 256], sizes = [8, 128], strides = [1, 1]} : vector<8x512xf32> to vector<8x128xf32>
    %cst_248 = arith.constant dense<0.000000e+00> : vector<8xf32>
    %872 = vector.multi_reduction <add>, %871, %cst_248 [1] : vector<8x128xf32> to vector<8xf32>
    %873 = vector.shape_cast %872 : vector<8xf32> to vector<8x1xf32>
    %cst_249 = arith.constant 1.280000e+02 : f32
    %874 = vector.broadcast %cst_249 : f32 to vector<8x1xf32>
    %875 = arith.divf %873, %874 : vector<8x1xf32>
    %876 = arith.mulf %871, %871 : vector<8x128xf32>
    %cst_250 = arith.constant dense<0.000000e+00> : vector<8xf32>
    %877 = vector.multi_reduction <add>, %876, %cst_250 [1] : vector<8x128xf32> to vector<8xf32>
    %878 = vector.shape_cast %877 : vector<8xf32> to vector<8x1xf32>
    %cst_251 = arith.constant 1.280000e+02 : f32
    %879 = vector.broadcast %cst_251 : f32 to vector<8x1xf32>
    %880 = arith.divf %878, %879 : vector<8x1xf32>
    %881 = arith.mulf %875, %875 : vector<8x1xf32>
    %882 = arith.subf %880, %881 : vector<8x1xf32>
    %883 = vector.broadcast %875 : vector<8x1xf32> to vector<8x128xf32>
    %884 = arith.subf %871, %883 : vector<8x128xf32>
    %cst_252 = arith.constant 9.99999974E-6 : f32
    %885 = vector.broadcast %cst_252 : f32 to vector<8x1xf32>
    %886 = arith.addf %882, %885 : vector<8x1xf32>
    %887 = math.rsqrt %886 : vector<8x1xf32>
    %888 = vector.broadcast %887 : vector<8x1xf32> to vector<8x128xf32>
    %889 = arith.mulf %884, %888 : vector<8x128xf32>
    %890 = vector.extract_strided_slice %4 {offsets = [2, 0], sizes = [1, 128], strides = [1, 1]} : vector<5x128xf32> to vector<1x128xf32>
    %891 = vector.broadcast %890 : vector<1x128xf32> to vector<8x128xf32>
    %892 = arith.mulf %889, %891 : vector<8x128xf32>
    %893 = vector.extract_strided_slice %5 {offsets = [2, 0], sizes = [1, 128], strides = [1, 1]} : vector<5x128xf32> to vector<1x128xf32>
    %894 = vector.broadcast %893 : vector<1x128xf32> to vector<8x128xf32>
    %895 = arith.addf %892, %894 : vector<8x128xf32>
    %896 = arith.negf %895 : vector<8x128xf32>
    %897 = math.exp %896 : vector<8x128xf32>
    %cst_253 = arith.constant 1.000000e+00 : f32
    %898 = vector.broadcast %cst_253 : f32 to vector<8x128xf32>
    %899 = arith.addf %898, %897 : vector<8x128xf32>
    %900 = arith.divf %898, %899 : vector<8x128xf32>
    %901 = vector.extract_strided_slice %810 {offsets = [0, 384], sizes = [8, 128], strides = [1, 1]} : vector<8x512xf32> to vector<8x128xf32>
    %cst_254 = arith.constant dense<0.000000e+00> : vector<8xf32>
    %902 = vector.multi_reduction <add>, %901, %cst_254 [1] : vector<8x128xf32> to vector<8xf32>
    %903 = vector.shape_cast %902 : vector<8xf32> to vector<8x1xf32>
    %cst_255 = arith.constant 1.280000e+02 : f32
    %904 = vector.broadcast %cst_255 : f32 to vector<8x1xf32>
    %905 = arith.divf %903, %904 : vector<8x1xf32>
    %906 = arith.mulf %901, %901 : vector<8x128xf32>
    %cst_256 = arith.constant dense<0.000000e+00> : vector<8xf32>
    %907 = vector.multi_reduction <add>, %906, %cst_256 [1] : vector<8x128xf32> to vector<8xf32>
    %908 = vector.shape_cast %907 : vector<8xf32> to vector<8x1xf32>
    %cst_257 = arith.constant 1.280000e+02 : f32
    %909 = vector.broadcast %cst_257 : f32 to vector<8x1xf32>
    %910 = arith.divf %908, %909 : vector<8x1xf32>
    %911 = arith.mulf %905, %905 : vector<8x1xf32>
    %912 = arith.subf %910, %911 : vector<8x1xf32>
    %913 = vector.broadcast %905 : vector<8x1xf32> to vector<8x128xf32>
    %914 = arith.subf %901, %913 : vector<8x128xf32>
    %cst_258 = arith.constant 9.99999974E-6 : f32
    %915 = vector.broadcast %cst_258 : f32 to vector<8x1xf32>
    %916 = arith.addf %912, %915 : vector<8x1xf32>
    %917 = math.rsqrt %916 : vector<8x1xf32>
    %918 = vector.broadcast %917 : vector<8x1xf32> to vector<8x128xf32>
    %919 = arith.mulf %914, %918 : vector<8x128xf32>
    %920 = vector.extract_strided_slice %4 {offsets = [3, 0], sizes = [1, 128], strides = [1, 1]} : vector<5x128xf32> to vector<1x128xf32>
    %921 = vector.broadcast %920 : vector<1x128xf32> to vector<8x128xf32>
    %922 = arith.mulf %919, %921 : vector<8x128xf32>
    %923 = vector.extract_strided_slice %5 {offsets = [3, 0], sizes = [1, 128], strides = [1, 1]} : vector<5x128xf32> to vector<1x128xf32>
    %924 = vector.broadcast %923 : vector<1x128xf32> to vector<8x128xf32>
    %925 = arith.addf %922, %924 : vector<8x128xf32>
    %926 = math.tanh %925 : vector<8x128xf32>
    %927 = arith.mulf %870, %926 : vector<8x128xf32>
    %c0_259 = arith.constant 0 : index
    %c0_260 = arith.constant 0 : index
    %928 = vector.load %arg11[%c0_259, %c0_260] : memref<8x128xf32, #tpu.memory_space<vmem>>, vector<8x128xf32>
    %929 = arith.mulf %840, %928 : vector<8x128xf32>
    %930 = arith.addf %927, %929 : vector<8x128xf32>
    %cst_261 = arith.constant dense<0.000000e+00> : vector<8xf32>
    %931 = vector.multi_reduction <add>, %930, %cst_261 [1] : vector<8x128xf32> to vector<8xf32>
    %932 = vector.shape_cast %931 : vector<8xf32> to vector<8x1xf32>
    %cst_262 = arith.constant 1.280000e+02 : f32
    %933 = vector.broadcast %cst_262 : f32 to vector<8x1xf32>
    %934 = arith.divf %932, %933 : vector<8x1xf32>
    %935 = arith.mulf %930, %930 : vector<8x128xf32>
    %cst_263 = arith.constant dense<0.000000e+00> : vector<8xf32>
    %936 = vector.multi_reduction <add>, %935, %cst_263 [1] : vector<8x128xf32> to vector<8xf32>
    %937 = vector.shape_cast %936 : vector<8xf32> to vector<8x1xf32>
    %cst_264 = arith.constant 1.280000e+02 : f32
    %938 = vector.broadcast %cst_264 : f32 to vector<8x1xf32>
    %939 = arith.divf %937, %938 : vector<8x1xf32>
    %940 = arith.mulf %934, %934 : vector<8x1xf32>
    %941 = arith.subf %939, %940 : vector<8x1xf32>
    %942 = vector.broadcast %934 : vector<8x1xf32> to vector<8x128xf32>
    %943 = arith.subf %930, %942 : vector<8x128xf32>
    %cst_265 = arith.constant 9.99999974E-6 : f32
    %944 = vector.broadcast %cst_265 : f32 to vector<8x1xf32>
    %945 = arith.addf %941, %944 : vector<8x1xf32>
    %946 = math.rsqrt %945 : vector<8x1xf32>
    %947 = vector.broadcast %946 : vector<8x1xf32> to vector<8x128xf32>
    %948 = arith.mulf %943, %947 : vector<8x128xf32>
    %949 = vector.extract_strided_slice %4 {offsets = [4, 0], sizes = [1, 128], strides = [1, 1]} : vector<5x128xf32> to vector<1x128xf32>
    %950 = vector.broadcast %949 : vector<1x128xf32> to vector<8x128xf32>
    %951 = arith.mulf %948, %950 : vector<8x128xf32>
    %952 = vector.extract_strided_slice %5 {offsets = [4, 0], sizes = [1, 128], strides = [1, 1]} : vector<5x128xf32> to vector<1x128xf32>
    %953 = vector.broadcast %952 : vector<1x128xf32> to vector<8x128xf32>
    %954 = arith.addf %951, %953 : vector<8x128xf32>
    %955 = math.tanh %954 : vector<8x128xf32>
    %956 = arith.mulf %900, %955 : vector<8x128xf32>
    %957 = arith.truncf %956 : vector<8x128xf32> to vector<8x128xbf16>
    %c0_266 = arith.constant 0 : index
    %c0_267 = arith.constant 0 : index
    %958 = vector.load %arg10[%c0_266, %c0_267] : memref<8x128xbf16, #tpu.memory_space<vmem>>, vector<8x128xbf16>
    tpu.vector_store %arg10[%c0_266, %c0_267], %957 {strides = array<i32>} : memref<8x128xbf16, #tpu.memory_space<vmem>>, vector<8x128xbf16>,
    %c0_268 = arith.constant 0 : index
    %c0_269 = arith.constant 0 : index
    %959 = vector.load %arg11[%c0_268, %c0_269] : memref<8x128xf32, #tpu.memory_space<vmem>>, vector<8x128xf32>
    tpu.vector_store %arg11[%c0_268, %c0_269], %954 {strides = array<i32>} : memref<8x128xf32, #tpu.memory_space<vmem>>, vector<8x128xf32>,
    %c5_270 = arith.constant 5 : index
    %c0_271 = arith.constant 0 : index
    %c0_272 = arith.constant 0 : index
    %960 = vector.load %arg8[%c5_270, %c0_271, %c0_272] : memref<8x8x128xf32, #tpu.memory_space<vmem>>, vector<1x8x128xf32>
    %961 = vector.shape_cast %960 : vector<1x8x128xf32> to vector<8x128xf32>
    %962 = vector.shape_cast %956 : vector<8x128xf32> to vector<1x8x128xf32>
    tpu.vector_store %arg8[%c5_270, %c0_271, %c0_272], %962 {strides = array<i32>} : memref<8x8x128xf32, #tpu.memory_space<vmem>>, vector<1x8x128xf32>,
    %c5_273 = arith.constant 5 : index
    %c0_274 = arith.constant 0 : index
    %c0_275 = arith.constant 0 : index
    %963 = vector.load %arg9[%c5_273, %c0_274, %c0_275] : memref<8x8x128xf32, #tpu.memory_space<vmem>>, vector<1x8x128xf32>
    %964 = vector.shape_cast %963 : vector<1x8x128xf32> to vector<8x128xf32>
    %965 = vector.shape_cast %954 : vector<8x128xf32> to vector<1x8x128xf32>
    tpu.vector_store %arg9[%c5_273, %c0_274, %c0_275], %965 {strides = array<i32>} : memref<8x8x128xf32, #tpu.memory_space<vmem>>, vector<1x8x128xf32>,
    %c6 = arith.constant 6 : index
    %c0_276 = arith.constant 0 : index
    %c0_277 = arith.constant 0 : index
    %966 = vector.load %arg2[%c6, %c0_276, %c0_277] : memref<8x8x512xf32, #tpu.memory_space<vmem>>, vector<1x8x512xf32>
    %967 = vector.shape_cast %966 : vector<1x8x512xf32> to vector<8x512xf32>
    %c0_278 = arith.constant 0 : index
    %c0_279 = arith.constant 0 : index
    %968 = vector.load %arg10[%c0_278, %c0_279] : memref<8x128xbf16, #tpu.memory_space<vmem>>, vector<8x128xbf16>
    %cst_280 = arith.constant dense<0.000000e+00> : vector<8x512xf32>
    %969 = tpu.matmul %968, %3, %cst_280 {dimension_numbers = #tpu.dot_dimension_numbers<[1], [0], [0], [1], [0, 0, 1, 1], [], []>} : vector<8x128xbf16>, vector<128x512xbf16>, vector<8x512xf32> -> vector<8x512xf32>
    %970 = arith.addf %967, %969 : vector<8x512xf32>
    %971 = vector.extract_strided_slice %970 {offsets = [0, 0], sizes = [8, 128], strides = [1, 1]} : vector<8x512xf32> to vector<8x128xf32>
    %cst_281 = arith.constant dense<0.000000e+00> : vector<8xf32>
    %972 = vector.multi_reduction <add>, %971, %cst_281 [1] : vector<8x128xf32> to vector<8xf32>
    %973 = vector.shape_cast %972 : vector<8xf32> to vector<8x1xf32>
    %cst_282 = arith.constant 1.280000e+02 : f32
    %974 = vector.broadcast %cst_282 : f32 to vector<8x1xf32>
    %975 = arith.divf %973, %974 : vector<8x1xf32>
    %976 = arith.mulf %971, %971 : vector<8x128xf32>
    %cst_283 = arith.constant dense<0.000000e+00> : vector<8xf32>
    %977 = vector.multi_reduction <add>, %976, %cst_283 [1] : vector<8x128xf32> to vector<8xf32>
    %978 = vector.shape_cast %977 : vector<8xf32> to vector<8x1xf32>
    %cst_284 = arith.constant 1.280000e+02 : f32
    %979 = vector.broadcast %cst_284 : f32 to vector<8x1xf32>
    %980 = arith.divf %978, %979 : vector<8x1xf32>
    %981 = arith.mulf %975, %975 : vector<8x1xf32>
    %982 = arith.subf %980, %981 : vector<8x1xf32>
    %983 = vector.broadcast %975 : vector<8x1xf32> to vector<8x128xf32>
    %984 = arith.subf %971, %983 : vector<8x128xf32>
    %cst_285 = arith.constant 9.99999974E-6 : f32
    %985 = vector.broadcast %cst_285 : f32 to vector<8x1xf32>
    %986 = arith.addf %982, %985 : vector<8x1xf32>
    %987 = math.rsqrt %986 : vector<8x1xf32>
    %988 = vector.broadcast %987 : vector<8x1xf32> to vector<8x128xf32>
    %989 = arith.mulf %984, %988 : vector<8x128xf32>
    %990 = vector.extract_strided_slice %4 {offsets = [0, 0], sizes = [1, 128], strides = [1, 1]} : vector<5x128xf32> to vector<1x128xf32>
    %991 = vector.broadcast %990 : vector<1x128xf32> to vector<8x128xf32>
    %992 = arith.mulf %989, %991 : vector<8x128xf32>
    %993 = vector.extract_strided_slice %5 {offsets = [0, 0], sizes = [1, 128], strides = [1, 1]} : vector<5x128xf32> to vector<1x128xf32>
    %994 = vector.broadcast %993 : vector<1x128xf32> to vector<8x128xf32>
    %995 = arith.addf %992, %994 : vector<8x128xf32>
    %996 = arith.negf %995 : vector<8x128xf32>
    %997 = math.exp %996 : vector<8x128xf32>
    %cst_286 = arith.constant 1.000000e+00 : f32
    %998 = vector.broadcast %cst_286 : f32 to vector<8x128xf32>
    %999 = arith.addf %998, %997 : vector<8x128xf32>
    %1000 = arith.divf %998, %999 : vector<8x128xf32>
    %1001 = vector.extract_strided_slice %970 {offsets = [0, 128], sizes = [8, 128], strides = [1, 1]} : vector<8x512xf32> to vector<8x128xf32>
    %cst_287 = arith.constant dense<0.000000e+00> : vector<8xf32>
    %1002 = vector.multi_reduction <add>, %1001, %cst_287 [1] : vector<8x128xf32> to vector<8xf32>
    %1003 = vector.shape_cast %1002 : vector<8xf32> to vector<8x1xf32>
    %cst_288 = arith.constant 1.280000e+02 : f32
    %1004 = vector.broadcast %cst_288 : f32 to vector<8x1xf32>
    %1005 = arith.divf %1003, %1004 : vector<8x1xf32>
    %1006 = arith.mulf %1001, %1001 : vector<8x128xf32>
    %cst_289 = arith.constant dense<0.000000e+00> : vector<8xf32>
    %1007 = vector.multi_reduction <add>, %1006, %cst_289 [1] : vector<8x128xf32> to vector<8xf32>
    %1008 = vector.shape_cast %1007 : vector<8xf32> to vector<8x1xf32>
    %cst_290 = arith.constant 1.280000e+02 : f32
    %1009 = vector.broadcast %cst_290 : f32 to vector<8x1xf32>
    %1010 = arith.divf %1008, %1009 : vector<8x1xf32>
    %1011 = arith.mulf %1005, %1005 : vector<8x1xf32>
    %1012 = arith.subf %1010, %1011 : vector<8x1xf32>
    %1013 = vector.broadcast %1005 : vector<8x1xf32> to vector<8x128xf32>
    %1014 = arith.subf %1001, %1013 : vector<8x128xf32>
    %cst_291 = arith.constant 9.99999974E-6 : f32
    %1015 = vector.broadcast %cst_291 : f32 to vector<8x1xf32>
    %1016 = arith.addf %1012, %1015 : vector<8x1xf32>
    %1017 = math.rsqrt %1016 : vector<8x1xf32>
    %1018 = vector.broadcast %1017 : vector<8x1xf32> to vector<8x128xf32>
    %1019 = arith.mulf %1014, %1018 : vector<8x128xf32>
    %1020 = vector.extract_strided_slice %4 {offsets = [1, 0], sizes = [1, 128], strides = [1, 1]} : vector<5x128xf32> to vector<1x128xf32>
    %1021 = vector.broadcast %1020 : vector<1x128xf32> to vector<8x128xf32>
    %1022 = arith.mulf %1019, %1021 : vector<8x128xf32>
    %1023 = vector.extract_strided_slice %5 {offsets = [1, 0], sizes = [1, 128], strides = [1, 1]} : vector<5x128xf32> to vector<1x128xf32>
    %1024 = vector.broadcast %1023 : vector<1x128xf32> to vector<8x128xf32>
    %1025 = arith.addf %1022, %1024 : vector<8x128xf32>
    %1026 = arith.negf %1025 : vector<8x128xf32>
    %1027 = math.exp %1026 : vector<8x128xf32>
    %cst_292 = arith.constant 1.000000e+00 : f32
    %1028 = vector.broadcast %cst_292 : f32 to vector<8x128xf32>
    %1029 = arith.addf %1028, %1027 : vector<8x128xf32>
    %1030 = arith.divf %1028, %1029 : vector<8x128xf32>
    %1031 = vector.extract_strided_slice %970 {offsets = [0, 256], sizes = [8, 128], strides = [1, 1]} : vector<8x512xf32> to vector<8x128xf32>
    %cst_293 = arith.constant dense<0.000000e+00> : vector<8xf32>
    %1032 = vector.multi_reduction <add>, %1031, %cst_293 [1] : vector<8x128xf32> to vector<8xf32>
    %1033 = vector.shape_cast %1032 : vector<8xf32> to vector<8x1xf32>
    %cst_294 = arith.constant 1.280000e+02 : f32
    %1034 = vector.broadcast %cst_294 : f32 to vector<8x1xf32>
    %1035 = arith.divf %1033, %1034 : vector<8x1xf32>
    %1036 = arith.mulf %1031, %1031 : vector<8x128xf32>
    %cst_295 = arith.constant dense<0.000000e+00> : vector<8xf32>
    %1037 = vector.multi_reduction <add>, %1036, %cst_295 [1] : vector<8x128xf32> to vector<8xf32>
    %1038 = vector.shape_cast %1037 : vector<8xf32> to vector<8x1xf32>
    %cst_296 = arith.constant 1.280000e+02 : f32
    %1039 = vector.broadcast %cst_296 : f32 to vector<8x1xf32>
    %1040 = arith.divf %1038, %1039 : vector<8x1xf32>
    %1041 = arith.mulf %1035, %1035 : vector<8x1xf32>
    %1042 = arith.subf %1040, %1041 : vector<8x1xf32>
    %1043 = vector.broadcast %1035 : vector<8x1xf32> to vector<8x128xf32>
    %1044 = arith.subf %1031, %1043 : vector<8x128xf32>
    %cst_297 = arith.constant 9.99999974E-6 : f32
    %1045 = vector.broadcast %cst_297 : f32 to vector<8x1xf32>
    %1046 = arith.addf %1042, %1045 : vector<8x1xf32>
    %1047 = math.rsqrt %1046 : vector<8x1xf32>
    %1048 = vector.broadcast %1047 : vector<8x1xf32> to vector<8x128xf32>
    %1049 = arith.mulf %1044, %1048 : vector<8x128xf32>
    %1050 = vector.extract_strided_slice %4 {offsets = [2, 0], sizes = [1, 128], strides = [1, 1]} : vector<5x128xf32> to vector<1x128xf32>
    %1051 = vector.broadcast %1050 : vector<1x128xf32> to vector<8x128xf32>
    %1052 = arith.mulf %1049, %1051 : vector<8x128xf32>
    %1053 = vector.extract_strided_slice %5 {offsets = [2, 0], sizes = [1, 128], strides = [1, 1]} : vector<5x128xf32> to vector<1x128xf32>
    %1054 = vector.broadcast %1053 : vector<1x128xf32> to vector<8x128xf32>
    %1055 = arith.addf %1052, %1054 : vector<8x128xf32>
    %1056 = arith.negf %1055 : vector<8x128xf32>
    %1057 = math.exp %1056 : vector<8x128xf32>
    %cst_298 = arith.constant 1.000000e+00 : f32
    %1058 = vector.broadcast %cst_298 : f32 to vector<8x128xf32>
    %1059 = arith.addf %1058, %1057 : vector<8x128xf32>
    %1060 = arith.divf %1058, %1059 : vector<8x128xf32>
    %1061 = vector.extract_strided_slice %970 {offsets = [0, 384], sizes = [8, 128], strides = [1, 1]} : vector<8x512xf32> to vector<8x128xf32>
    %cst_299 = arith.constant dense<0.000000e+00> : vector<8xf32>
    %1062 = vector.multi_reduction <add>, %1061, %cst_299 [1] : vector<8x128xf32> to vector<8xf32>
    %1063 = vector.shape_cast %1062 : vector<8xf32> to vector<8x1xf32>
    %cst_300 = arith.constant 1.280000e+02 : f32
    %1064 = vector.broadcast %cst_300 : f32 to vector<8x1xf32>
    %1065 = arith.divf %1063, %1064 : vector<8x1xf32>
    %1066 = arith.mulf %1061, %1061 : vector<8x128xf32>
    %cst_301 = arith.constant dense<0.000000e+00> : vector<8xf32>
    %1067 = vector.multi_reduction <add>, %1066, %cst_301 [1] : vector<8x128xf32> to vector<8xf32>
    %1068 = vector.shape_cast %1067 : vector<8xf32> to vector<8x1xf32>
    %cst_302 = arith.constant 1.280000e+02 : f32
    %1069 = vector.broadcast %cst_302 : f32 to vector<8x1xf32>
    %1070 = arith.divf %1068, %1069 : vector<8x1xf32>
    %1071 = arith.mulf %1065, %1065 : vector<8x1xf32>
    %1072 = arith.subf %1070, %1071 : vector<8x1xf32>
    %1073 = vector.broadcast %1065 : vector<8x1xf32> to vector<8x128xf32>
    %1074 = arith.subf %1061, %1073 : vector<8x128xf32>
    %cst_303 = arith.constant 9.99999974E-6 : f32
    %1075 = vector.broadcast %cst_303 : f32 to vector<8x1xf32>
    %1076 = arith.addf %1072, %1075 : vector<8x1xf32>
    %1077 = math.rsqrt %1076 : vector<8x1xf32>
    %1078 = vector.broadcast %1077 : vector<8x1xf32> to vector<8x128xf32>
    %1079 = arith.mulf %1074, %1078 : vector<8x128xf32>
    %1080 = vector.extract_strided_slice %4 {offsets = [3, 0], sizes = [1, 128], strides = [1, 1]} : vector<5x128xf32> to vector<1x128xf32>
    %1081 = vector.broadcast %1080 : vector<1x128xf32> to vector<8x128xf32>
    %1082 = arith.mulf %1079, %1081 : vector<8x128xf32>
    %1083 = vector.extract_strided_slice %5 {offsets = [3, 0], sizes = [1, 128], strides = [1, 1]} : vector<5x128xf32> to vector<1x128xf32>
    %1084 = vector.broadcast %1083 : vector<1x128xf32> to vector<8x128xf32>
    %1085 = arith.addf %1082, %1084 : vector<8x128xf32>
    %1086 = math.tanh %1085 : vector<8x128xf32>
    %1087 = arith.mulf %1030, %1086 : vector<8x128xf32>
    %c0_304 = arith.constant 0 : index
    %c0_305 = arith.constant 0 : index
    %1088 = vector.load %arg11[%c0_304, %c0_305] : memref<8x128xf32, #tpu.memory_space<vmem>>, vector<8x128xf32>
    %1089 = arith.mulf %1000, %1088 : vector<8x128xf32>
    %1090 = arith.addf %1087, %1089 : vector<8x128xf32>
    %cst_306 = arith.constant dense<0.000000e+00> : vector<8xf32>
    %1091 = vector.multi_reduction <add>, %1090, %cst_306 [1] : vector<8x128xf32> to vector<8xf32>
    %1092 = vector.shape_cast %1091 : vector<8xf32> to vector<8x1xf32>
    %cst_307 = arith.constant 1.280000e+02 : f32
    %1093 = vector.broadcast %cst_307 : f32 to vector<8x1xf32>
    %1094 = arith.divf %1092, %1093 : vector<8x1xf32>
    %1095 = arith.mulf %1090, %1090 : vector<8x128xf32>
    %cst_308 = arith.constant dense<0.000000e+00> : vector<8xf32>
    %1096 = vector.multi_reduction <add>, %1095, %cst_308 [1] : vector<8x128xf32> to vector<8xf32>
    %1097 = vector.shape_cast %1096 : vector<8xf32> to vector<8x1xf32>
    %cst_309 = arith.constant 1.280000e+02 : f32
    %1098 = vector.broadcast %cst_309 : f32 to vector<8x1xf32>
    %1099 = arith.divf %1097, %1098 : vector<8x1xf32>
    %1100 = arith.mulf %1094, %1094 : vector<8x1xf32>
    %1101 = arith.subf %1099, %1100 : vector<8x1xf32>
    %1102 = vector.broadcast %1094 : vector<8x1xf32> to vector<8x128xf32>
    %1103 = arith.subf %1090, %1102 : vector<8x128xf32>
    %cst_310 = arith.constant 9.99999974E-6 : f32
    %1104 = vector.broadcast %cst_310 : f32 to vector<8x1xf32>
    %1105 = arith.addf %1101, %1104 : vector<8x1xf32>
    %1106 = math.rsqrt %1105 : vector<8x1xf32>
    %1107 = vector.broadcast %1106 : vector<8x1xf32> to vector<8x128xf32>
    %1108 = arith.mulf %1103, %1107 : vector<8x128xf32>
    %1109 = vector.extract_strided_slice %4 {offsets = [4, 0], sizes = [1, 128], strides = [1, 1]} : vector<5x128xf32> to vector<1x128xf32>
    %1110 = vector.broadcast %1109 : vector<1x128xf32> to vector<8x128xf32>
    %1111 = arith.mulf %1108, %1110 : vector<8x128xf32>
    %1112 = vector.extract_strided_slice %5 {offsets = [4, 0], sizes = [1, 128], strides = [1, 1]} : vector<5x128xf32> to vector<1x128xf32>
    %1113 = vector.broadcast %1112 : vector<1x128xf32> to vector<8x128xf32>
    %1114 = arith.addf %1111, %1113 : vector<8x128xf32>
    %1115 = math.tanh %1114 : vector<8x128xf32>
    %1116 = arith.mulf %1060, %1115 : vector<8x128xf32>
    %1117 = arith.truncf %1116 : vector<8x128xf32> to vector<8x128xbf16>
    %c0_311 = arith.constant 0 : index
    %c0_312 = arith.constant 0 : index
    %1118 = vector.load %arg10[%c0_311, %c0_312] : memref<8x128xbf16, #tpu.memory_space<vmem>>, vector<8x128xbf16>
    tpu.vector_store %arg10[%c0_311, %c0_312], %1117 {strides = array<i32>} : memref<8x128xbf16, #tpu.memory_space<vmem>>, vector<8x128xbf16>,
    %c0_313 = arith.constant 0 : index
    %c0_314 = arith.constant 0 : index
    %1119 = vector.load %arg11[%c0_313, %c0_314] : memref<8x128xf32, #tpu.memory_space<vmem>>, vector<8x128xf32>
    tpu.vector_store %arg11[%c0_313, %c0_314], %1114 {strides = array<i32>} : memref<8x128xf32, #tpu.memory_space<vmem>>, vector<8x128xf32>,
    %c6_315 = arith.constant 6 : index
    %c0_316 = arith.constant 0 : index
    %c0_317 = arith.constant 0 : index
    %1120 = vector.load %arg8[%c6_315, %c0_316, %c0_317] : memref<8x8x128xf32, #tpu.memory_space<vmem>>, vector<1x8x128xf32>
    %1121 = vector.shape_cast %1120 : vector<1x8x128xf32> to vector<8x128xf32>
    %1122 = vector.shape_cast %1116 : vector<8x128xf32> to vector<1x8x128xf32>
    tpu.vector_store %arg8[%c6_315, %c0_316, %c0_317], %1122 {strides = array<i32>} : memref<8x8x128xf32, #tpu.memory_space<vmem>>, vector<1x8x128xf32>,
    %c6_318 = arith.constant 6 : index
    %c0_319 = arith.constant 0 : index
    %c0_320 = arith.constant 0 : index
    %1123 = vector.load %arg9[%c6_318, %c0_319, %c0_320] : memref<8x8x128xf32, #tpu.memory_space<vmem>>, vector<1x8x128xf32>
    %1124 = vector.shape_cast %1123 : vector<1x8x128xf32> to vector<8x128xf32>
    %1125 = vector.shape_cast %1114 : vector<8x128xf32> to vector<1x8x128xf32>
    tpu.vector_store %arg9[%c6_318, %c0_319, %c0_320], %1125 {strides = array<i32>} : memref<8x8x128xf32, #tpu.memory_space<vmem>>, vector<1x8x128xf32>,
    %c7 = arith.constant 7 : index
    %c0_321 = arith.constant 0 : index
    %c0_322 = arith.constant 0 : index
    %1126 = vector.load %arg2[%c7, %c0_321, %c0_322] : memref<8x8x512xf32, #tpu.memory_space<vmem>>, vector<1x8x512xf32>
    %1127 = vector.shape_cast %1126 : vector<1x8x512xf32> to vector<8x512xf32>
    %c0_323 = arith.constant 0 : index
    %c0_324 = arith.constant 0 : index
    %1128 = vector.load %arg10[%c0_323, %c0_324] : memref<8x128xbf16, #tpu.memory_space<vmem>>, vector<8x128xbf16>
    %cst_325 = arith.constant dense<0.000000e+00> : vector<8x512xf32>
    %1129 = tpu.matmul %1128, %3, %cst_325 {dimension_numbers = #tpu.dot_dimension_numbers<[1], [0], [0], [1], [0, 0, 1, 1], [], []>} : vector<8x128xbf16>, vector<128x512xbf16>, vector<8x512xf32> -> vector<8x512xf32>
    %1130 = arith.addf %1127, %1129 : vector<8x512xf32>
    %1131 = vector.extract_strided_slice %1130 {offsets = [0, 0], sizes = [8, 128], strides = [1, 1]} : vector<8x512xf32> to vector<8x128xf32>
    %cst_326 = arith.constant dense<0.000000e+00> : vector<8xf32>
    %1132 = vector.multi_reduction <add>, %1131, %cst_326 [1] : vector<8x128xf32> to vector<8xf32>
    %1133 = vector.shape_cast %1132 : vector<8xf32> to vector<8x1xf32>
    %cst_327 = arith.constant 1.280000e+02 : f32
    %1134 = vector.broadcast %cst_327 : f32 to vector<8x1xf32>
    %1135 = arith.divf %1133, %1134 : vector<8x1xf32>
    %1136 = arith.mulf %1131, %1131 : vector<8x128xf32>
    %cst_328 = arith.constant dense<0.000000e+00> : vector<8xf32>
    %1137 = vector.multi_reduction <add>, %1136, %cst_328 [1] : vector<8x128xf32> to vector<8xf32>
    %1138 = vector.shape_cast %1137 : vector<8xf32> to vector<8x1xf32>
    %cst_329 = arith.constant 1.280000e+02 : f32
    %1139 = vector.broadcast %cst_329 : f32 to vector<8x1xf32>
    %1140 = arith.divf %1138, %1139 : vector<8x1xf32>
    %1141 = arith.mulf %1135, %1135 : vector<8x1xf32>
    %1142 = arith.subf %1140, %1141 : vector<8x1xf32>
    %1143 = vector.broadcast %1135 : vector<8x1xf32> to vector<8x128xf32>
    %1144 = arith.subf %1131, %1143 : vector<8x128xf32>
    %cst_330 = arith.constant 9.99999974E-6 : f32
    %1145 = vector.broadcast %cst_330 : f32 to vector<8x1xf32>
    %1146 = arith.addf %1142, %1145 : vector<8x1xf32>
    %1147 = math.rsqrt %1146 : vector<8x1xf32>
    %1148 = vector.broadcast %1147 : vector<8x1xf32> to vector<8x128xf32>
    %1149 = arith.mulf %1144, %1148 : vector<8x128xf32>
    %1150 = vector.extract_strided_slice %4 {offsets = [0, 0], sizes = [1, 128], strides = [1, 1]} : vector<5x128xf32> to vector<1x128xf32>
    %1151 = vector.broadcast %1150 : vector<1x128xf32> to vector<8x128xf32>
    %1152 = arith.mulf %1149, %1151 : vector<8x128xf32>
    %1153 = vector.extract_strided_slice %5 {offsets = [0, 0], sizes = [1, 128], strides = [1, 1]} : vector<5x128xf32> to vector<1x128xf32>
    %1154 = vector.broadcast %1153 : vector<1x128xf32> to vector<8x128xf32>
    %1155 = arith.addf %1152, %1154 : vector<8x128xf32>
    %1156 = arith.negf %1155 : vector<8x128xf32>
    %1157 = math.exp %1156 : vector<8x128xf32>
    %cst_331 = arith.constant 1.000000e+00 : f32
    %1158 = vector.broadcast %cst_331 : f32 to vector<8x128xf32>
    %1159 = arith.addf %1158, %1157 : vector<8x128xf32>
    %1160 = arith.divf %1158, %1159 : vector<8x128xf32>
    %1161 = vector.extract_strided_slice %1130 {offsets = [0, 128], sizes = [8, 128], strides = [1, 1]} : vector<8x512xf32> to vector<8x128xf32>
    %cst_332 = arith.constant dense<0.000000e+00> : vector<8xf32>
    %1162 = vector.multi_reduction <add>, %1161, %cst_332 [1] : vector<8x128xf32> to vector<8xf32>
    %1163 = vector.shape_cast %1162 : vector<8xf32> to vector<8x1xf32>
    %cst_333 = arith.constant 1.280000e+02 : f32
    %1164 = vector.broadcast %cst_333 : f32 to vector<8x1xf32>
    %1165 = arith.divf %1163, %1164 : vector<8x1xf32>
    %1166 = arith.mulf %1161, %1161 : vector<8x128xf32>
    %cst_334 = arith.constant dense<0.000000e+00> : vector<8xf32>
    %1167 = vector.multi_reduction <add>, %1166, %cst_334 [1] : vector<8x128xf32> to vector<8xf32>
    %1168 = vector.shape_cast %1167 : vector<8xf32> to vector<8x1xf32>
    %cst_335 = arith.constant 1.280000e+02 : f32
    %1169 = vector.broadcast %cst_335 : f32 to vector<8x1xf32>
    %1170 = arith.divf %1168, %1169 : vector<8x1xf32>
    %1171 = arith.mulf %1165, %1165 : vector<8x1xf32>
    %1172 = arith.subf %1170, %1171 : vector<8x1xf32>
    %1173 = vector.broadcast %1165 : vector<8x1xf32> to vector<8x128xf32>
    %1174 = arith.subf %1161, %1173 : vector<8x128xf32>
    %cst_336 = arith.constant 9.99999974E-6 : f32
    %1175 = vector.broadcast %cst_336 : f32 to vector<8x1xf32>
    %1176 = arith.addf %1172, %1175 : vector<8x1xf32>
    %1177 = math.rsqrt %1176 : vector<8x1xf32>
    %1178 = vector.broadcast %1177 : vector<8x1xf32> to vector<8x128xf32>
    %1179 = arith.mulf %1174, %1178 : vector<8x128xf32>
    %1180 = vector.extract_strided_slice %4 {offsets = [1, 0], sizes = [1, 128], strides = [1, 1]} : vector<5x128xf32> to vector<1x128xf32>
    %1181 = vector.broadcast %1180 : vector<1x128xf32> to vector<8x128xf32>
    %1182 = arith.mulf %1179, %1181 : vector<8x128xf32>
    %1183 = vector.extract_strided_slice %5 {offsets = [1, 0], sizes = [1, 128], strides = [1, 1]} : vector<5x128xf32> to vector<1x128xf32>
    %1184 = vector.broadcast %1183 : vector<1x128xf32> to vector<8x128xf32>
    %1185 = arith.addf %1182, %1184 : vector<8x128xf32>
    %1186 = arith.negf %1185 : vector<8x128xf32>
    %1187 = math.exp %1186 : vector<8x128xf32>
    %cst_337 = arith.constant 1.000000e+00 : f32
    %1188 = vector.broadcast %cst_337 : f32 to vector<8x128xf32>
    %1189 = arith.addf %1188, %1187 : vector<8x128xf32>
    %1190 = arith.divf %1188, %1189 : vector<8x128xf32>
    %1191 = vector.extract_strided_slice %1130 {offsets = [0, 256], sizes = [8, 128], strides = [1, 1]} : vector<8x512xf32> to vector<8x128xf32>
    %cst_338 = arith.constant dense<0.000000e+00> : vector<8xf32>
    %1192 = vector.multi_reduction <add>, %1191, %cst_338 [1] : vector<8x128xf32> to vector<8xf32>
    %1193 = vector.shape_cast %1192 : vector<8xf32> to vector<8x1xf32>
    %cst_339 = arith.constant 1.280000e+02 : f32
    %1194 = vector.broadcast %cst_339 : f32 to vector<8x1xf32>
    %1195 = arith.divf %1193, %1194 : vector<8x1xf32>
    %1196 = arith.mulf %1191, %1191 : vector<8x128xf32>
    %cst_340 = arith.constant dense<0.000000e+00> : vector<8xf32>
    %1197 = vector.multi_reduction <add>, %1196, %cst_340 [1] : vector<8x128xf32> to vector<8xf32>
    %1198 = vector.shape_cast %1197 : vector<8xf32> to vector<8x1xf32>
    %cst_341 = arith.constant 1.280000e+02 : f32
    %1199 = vector.broadcast %cst_341 : f32 to vector<8x1xf32>
    %1200 = arith.divf %1198, %1199 : vector<8x1xf32>
    %1201 = arith.mulf %1195, %1195 : vector<8x1xf32>
    %1202 = arith.subf %1200, %1201 : vector<8x1xf32>
    %1203 = vector.broadcast %1195 : vector<8x1xf32> to vector<8x128xf32>
    %1204 = arith.subf %1191, %1203 : vector<8x128xf32>
    %cst_342 = arith.constant 9.99999974E-6 : f32
    %1205 = vector.broadcast %cst_342 : f32 to vector<8x1xf32>
    %1206 = arith.addf %1202, %1205 : vector<8x1xf32>
    %1207 = math.rsqrt %1206 : vector<8x1xf32>
    %1208 = vector.broadcast %1207 : vector<8x1xf32> to vector<8x128xf32>
    %1209 = arith.mulf %1204, %1208 : vector<8x128xf32>
    %1210 = vector.extract_strided_slice %4 {offsets = [2, 0], sizes = [1, 128], strides = [1, 1]} : vector<5x128xf32> to vector<1x128xf32>
    %1211 = vector.broadcast %1210 : vector<1x128xf32> to vector<8x128xf32>
    %1212 = arith.mulf %1209, %1211 : vector<8x128xf32>
    %1213 = vector.extract_strided_slice %5 {offsets = [2, 0], sizes = [1, 128], strides = [1, 1]} : vector<5x128xf32> to vector<1x128xf32>
    %1214 = vector.broadcast %1213 : vector<1x128xf32> to vector<8x128xf32>
    %1215 = arith.addf %1212, %1214 : vector<8x128xf32>
    %1216 = arith.negf %1215 : vector<8x128xf32>
    %1217 = math.exp %1216 : vector<8x128xf32>
    %cst_343 = arith.constant 1.000000e+00 : f32
    %1218 = vector.broadcast %cst_343 : f32 to vector<8x128xf32>
    %1219 = arith.addf %1218, %1217 : vector<8x128xf32>
    %1220 = arith.divf %1218, %1219 : vector<8x128xf32>
    %1221 = vector.extract_strided_slice %1130 {offsets = [0, 384], sizes = [8, 128], strides = [1, 1]} : vector<8x512xf32> to vector<8x128xf32>
    %cst_344 = arith.constant dense<0.000000e+00> : vector<8xf32>
    %1222 = vector.multi_reduction <add>, %1221, %cst_344 [1] : vector<8x128xf32> to vector<8xf32>
    %1223 = vector.shape_cast %1222 : vector<8xf32> to vector<8x1xf32>
    %cst_345 = arith.constant 1.280000e+02 : f32
    %1224 = vector.broadcast %cst_345 : f32 to vector<8x1xf32>
    %1225 = arith.divf %1223, %1224 : vector<8x1xf32>
    %1226 = arith.mulf %1221, %1221 : vector<8x128xf32>
    %cst_346 = arith.constant dense<0.000000e+00> : vector<8xf32>
    %1227 = vector.multi_reduction <add>, %1226, %cst_346 [1] : vector<8x128xf32> to vector<8xf32>
    %1228 = vector.shape_cast %1227 : vector<8xf32> to vector<8x1xf32>
    %cst_347 = arith.constant 1.280000e+02 : f32
    %1229 = vector.broadcast %cst_347 : f32 to vector<8x1xf32>
    %1230 = arith.divf %1228, %1229 : vector<8x1xf32>
    %1231 = arith.mulf %1225, %1225 : vector<8x1xf32>
    %1232 = arith.subf %1230, %1231 : vector<8x1xf32>
    %1233 = vector.broadcast %1225 : vector<8x1xf32> to vector<8x128xf32>
    %1234 = arith.subf %1221, %1233 : vector<8x128xf32>
    %cst_348 = arith.constant 9.99999974E-6 : f32
    %1235 = vector.broadcast %cst_348 : f32 to vector<8x1xf32>
    %1236 = arith.addf %1232, %1235 : vector<8x1xf32>
    %1237 = math.rsqrt %1236 : vector<8x1xf32>
    %1238 = vector.broadcast %1237 : vector<8x1xf32> to vector<8x128xf32>
    %1239 = arith.mulf %1234, %1238 : vector<8x128xf32>
    %1240 = vector.extract_strided_slice %4 {offsets = [3, 0], sizes = [1, 128], strides = [1, 1]} : vector<5x128xf32> to vector<1x128xf32>
    %1241 = vector.broadcast %1240 : vector<1x128xf32> to vector<8x128xf32>
    %1242 = arith.mulf %1239, %1241 : vector<8x128xf32>
    %1243 = vector.extract_strided_slice %5 {offsets = [3, 0], sizes = [1, 128], strides = [1, 1]} : vector<5x128xf32> to vector<1x128xf32>
    %1244 = vector.broadcast %1243 : vector<1x128xf32> to vector<8x128xf32>
    %1245 = arith.addf %1242, %1244 : vector<8x128xf32>
    %1246 = math.tanh %1245 : vector<8x128xf32>
    %1247 = arith.mulf %1190, %1246 : vector<8x128xf32>
    %c0_349 = arith.constant 0 : index
    %c0_350 = arith.constant 0 : index
    %1248 = vector.load %arg11[%c0_349, %c0_350] : memref<8x128xf32, #tpu.memory_space<vmem>>, vector<8x128xf32>
    %1249 = arith.mulf %1160, %1248 : vector<8x128xf32>
    %1250 = arith.addf %1247, %1249 : vector<8x128xf32>
    %cst_351 = arith.constant dense<0.000000e+00> : vector<8xf32>
    %1251 = vector.multi_reduction <add>, %1250, %cst_351 [1] : vector<8x128xf32> to vector<8xf32>
    %1252 = vector.shape_cast %1251 : vector<8xf32> to vector<8x1xf32>
    %cst_352 = arith.constant 1.280000e+02 : f32
    %1253 = vector.broadcast %cst_352 : f32 to vector<8x1xf32>
    %1254 = arith.divf %1252, %1253 : vector<8x1xf32>
    %1255 = arith.mulf %1250, %1250 : vector<8x128xf32>
    %cst_353 = arith.constant dense<0.000000e+00> : vector<8xf32>
    %1256 = vector.multi_reduction <add>, %1255, %cst_353 [1] : vector<8x128xf32> to vector<8xf32>
    %1257 = vector.shape_cast %1256 : vector<8xf32> to vector<8x1xf32>
    %cst_354 = arith.constant 1.280000e+02 : f32
    %1258 = vector.broadcast %cst_354 : f32 to vector<8x1xf32>
    %1259 = arith.divf %1257, %1258 : vector<8x1xf32>
    %1260 = arith.mulf %1254, %1254 : vector<8x1xf32>
    %1261 = arith.subf %1259, %1260 : vector<8x1xf32>
    %1262 = vector.broadcast %1254 : vector<8x1xf32> to vector<8x128xf32>
    %1263 = arith.subf %1250, %1262 : vector<8x128xf32>
    %cst_355 = arith.constant 9.99999974E-6 : f32
    %1264 = vector.broadcast %cst_355 : f32 to vector<8x1xf32>
    %1265 = arith.addf %1261, %1264 : vector<8x1xf32>
    %1266 = math.rsqrt %1265 : vector<8x1xf32>
    %1267 = vector.broadcast %1266 : vector<8x1xf32> to vector<8x128xf32>
    %1268 = arith.mulf %1263, %1267 : vector<8x128xf32>
    %1269 = vector.extract_strided_slice %4 {offsets = [4, 0], sizes = [1, 128], strides = [1, 1]} : vector<5x128xf32> to vector<1x128xf32>
    %1270 = vector.broadcast %1269 : vector<1x128xf32> to vector<8x128xf32>
    %1271 = arith.mulf %1268, %1270 : vector<8x128xf32>
    %1272 = vector.extract_strided_slice %5 {offsets = [4, 0], sizes = [1, 128], strides = [1, 1]} : vector<5x128xf32> to vector<1x128xf32>
    %1273 = vector.broadcast %1272 : vector<1x128xf32> to vector<8x128xf32>
    %1274 = arith.addf %1271, %1273 : vector<8x128xf32>
    %1275 = math.tanh %1274 : vector<8x128xf32>
    %1276 = arith.mulf %1220, %1275 : vector<8x128xf32>
    %1277 = arith.truncf %1276 : vector<8x128xf32> to vector<8x128xbf16>
    %c0_356 = arith.constant 0 : index
    %c0_357 = arith.constant 0 : index
    %1278 = vector.load %arg10[%c0_356, %c0_357] : memref<8x128xbf16, #tpu.memory_space<vmem>>, vector<8x128xbf16>
    tpu.vector_store %arg10[%c0_356, %c0_357], %1277 {strides = array<i32>} : memref<8x128xbf16, #tpu.memory_space<vmem>>, vector<8x128xbf16>,
    %c0_358 = arith.constant 0 : index
    %c0_359 = arith.constant 0 : index
    %1279 = vector.load %arg11[%c0_358, %c0_359] : memref<8x128xf32, #tpu.memory_space<vmem>>, vector<8x128xf32>
    tpu.vector_store %arg11[%c0_358, %c0_359], %1274 {strides = array<i32>} : memref<8x128xf32, #tpu.memory_space<vmem>>, vector<8x128xf32>,
    %c7_360 = arith.constant 7 : index
    %c0_361 = arith.constant 0 : index
    %c0_362 = arith.constant 0 : index
    %1280 = vector.load %arg8[%c7_360, %c0_361, %c0_362] : memref<8x8x128xf32, #tpu.memory_space<vmem>>, vector<1x8x128xf32>
    %1281 = vector.shape_cast %1280 : vector<1x8x128xf32> to vector<8x128xf32>
    %1282 = vector.shape_cast %1276 : vector<8x128xf32> to vector<1x8x128xf32>
    tpu.vector_store %arg8[%c7_360, %c0_361, %c0_362], %1282 {strides = array<i32>} : memref<8x8x128xf32, #tpu.memory_space<vmem>>, vector<1x8x128xf32>,
    %c7_363 = arith.constant 7 : index
    %c0_364 = arith.constant 0 : index
    %c0_365 = arith.constant 0 : index
    %1283 = vector.load %arg9[%c7_363, %c0_364, %c0_365] : memref<8x8x128xf32, #tpu.memory_space<vmem>>, vector<1x8x128xf32>
    %1284 = vector.shape_cast %1283 : vector<1x8x128xf32> to vector<8x128xf32>
    %1285 = vector.shape_cast %1274 : vector<8x128xf32> to vector<1x8x128xf32>
    tpu.vector_store %arg9[%c7_363, %c0_364, %c0_365], %1285 {strides = array<i32>} : memref<8x8x128xf32, #tpu.memory_space<vmem>>, vector<1x8x128xf32>,
    return
  }
  func.func @transform_0(%arg0: i32, %arg1: i32) -> (i32, i32, i32) {
    %c0_i32 = arith.constant 0 : i32
    %c0_i32_0 = arith.constant 0 : i32
    return %arg1, %arg0, %c0_i32 : i32, i32, i32
  }
  func.func @transform_1(%arg0: i32, %arg1: i32) -> (i32, i32) {
    %c0_i32 = arith.constant 0 : i32
    %c0_i32_0 = arith.constant 0 : i32
    return %arg0, %c0_i32 : i32, i32
  }
  func.func @transform_2(%arg0: i32, %arg1: i32) -> (i32, i32) {
    %c0_i32 = arith.constant 0 : i32
    %c0_i32_0 = arith.constant 0 : i32
    return %arg0, %c0_i32 : i32, i32
  }
  func.func @transform_3(%arg0: i32, %arg1: i32) -> (i32, i32) {
    %c0_i32 = arith.constant 0 : i32
    %c0_i32_0 = arith.constant 0 : i32
    %c0_i32_1 = arith.constant 0 : i32
    return %c0_i32, %c0_i32_0 : i32, i32
  }
  func.func @transform_4(%arg0: i32, %arg1: i32) -> (i32, i32) {
    %c0_i32 = arith.constant 0 : i32
    %c0_i32_0 = arith.constant 0 : i32
    %c0_i32_1 = arith.constant 0 : i32
    return %c0_i32, %c0_i32_0 : i32, i32
  }
  func.func @transform_5(%arg0: i32, %arg1: i32) -> (i32, i32) {
    %c0_i32 = arith.constant 0 : i32
    %c0_i32_0 = arith.constant 0 : i32
    %c0_i32_1 = arith.constant 0 : i32
    return %c0_i32, %c0_i32_0 : i32, i32
  }
  func.func @transform_6(%arg0: i32, %arg1: i32) -> (i32, i32, i32) {
    %c0_i32 = arith.constant 0 : i32
    %c0_i32_0 = arith.constant 0 : i32
    return %arg1, %arg0, %c0_i32 : i32, i32, i32
  }
  func.func @transform_7(%arg0: i32, %arg1: i32) -> (i32, i32, i32) {
    %c0_i32 = arith.constant 0 : i32
    %c0_i32_0 = arith.constant 0 : i32
    return %arg1, %arg0, %c0_i32 : i32, i32, i32
  }
}

</mosaic_0001>

<llo_original>
// kernel: tpu_custom_call.1
$region0: #{tpu_custom_call.1}
  #allocation0 [shape = 'u32[]', space=smem, size = 0x4, offset = 0x4, fixed_abs, tag = 'smem constant byte address 0x4 - core index']
  #allocation1 [shape = 'u32[144,128]{1,0:T(1,128)}', space=vmem, size = 0x12000, scoped, tag = 'internal scratch']
  #allocation2 [shape = 'bf16[8,128]{1,0:T(8,128)(2,1)}', space=vmem, size = 0x800, scoped, tag = 'scratch operand']
  #allocation3 [shape = 'f32[8,128]{1,0:T(8,128)}', space=vmem, size = 0x1000, scoped, tag = 'scratch operand']
  %s0 = inlined_call_operand.hbm [shape: f32[16,8,512], index: 0, kind: input, shape index: {}]
  %s1 = inlined_call_operand.hbm [shape: f32[8,128], index: 1, kind: input, shape index: {}]
  %s2 = inlined_call_operand.hbm [shape: f32[8,128], index: 2, kind: input, shape index: {}]
  %s3 = inlined_call_operand.hbm [shape: bf16[128,512], index: 3, kind: input, shape index: {}]
  %s4 = inlined_call_operand.vmem [shape: f32[5,128], index: 4, kind: input, shape index: {}]
  %s5 = inlined_call_operand.vmem [shape: f32[5,128], index: 5, kind: input, shape index: {}]
  %s6 = inlined_call_operand.hbm [shape: f32[16,8,128], index: 6, kind: output, shape index: {0}]
  %s7 = inlined_call_operand.hbm [shape: f32[16,8,128], index: 7, kind: output, shape index: {1}]
  %8 = xla_tuple %s6, %s7
  %s9 = sld [smem:[#allocation0]]
  $region85: #{tpu_custom_call.1} parent=0
    _
  %s11 = ssub.s32 1, %s9
  %s12 = scalar_select 0, %s11, %s9
  $region1: #{tpu_custom_call.1} parent=0
    #allocation4 [shape = 'u8[262144]{0}', space=vmem, size = 0x40000, scoped, tag = 'input window, operand 0']
    #allocation5 [shape = 's32[2]{0}', space=sflag, size = 0x8, scoped, tag = 'scoped memory for tpu_custom_call.1']
    #allocation6 [shape = 's32[2]{0}', space=sflag, size = 0x8, scoped, tag = 'scoped memory for tpu_custom_call.1']
    #allocation7 [shape = 'u8[4096]{0}', space=vmem, size = 0x1000, scoped, tag = 'input window, operand 1, single buffered']
    #allocation8 [shape = 's32[1]{0}', space=sflag, size = 0x4, scoped, tag = 'scoped memory for tpu_custom_call.1']
    #allocation9 [shape = 'u8[4096]{0}', space=vmem, size = 0x1000, scoped, tag = 'input window, operand 2, single buffered']
    #allocation10 [shape = 'u8[131072]{0}', space=vmem, size = 0x20000, scoped, tag = 'input window, operand 3, single buffered']
    #allocation11 [shape = 's32[1]{0}', space=sflag, size = 0x4, scoped, tag = 'scoped memory for tpu_custom_call.1']
    #allocation12 [shape = 'u8[65536]{0}', space=vmem, size = 0x10000, scoped, tag = 'output window, operand 0']
    #allocation13 [shape = 'u8[65536]{0}', space=vmem, size = 0x10000, scoped, tag = 'output window, operand 1']
    #allocation14 [shape = 's32[2]{0}', space=sflag, size = 0x8, scoped, tag = 'scoped memory for tpu_custom_call.1']
    %13 = vsyncpa [#allocation5], 0
    %s14 = scalar_lea.sflag [#allocation5], 1
    %15 = vsyncpa %s14, 0
    %16 = vsyncpa [#allocation8], 0
    %17 = vsyncpa [#allocation11], 0
    %18 = vsyncpa [#allocation6], 0
    %s19 = scalar_lea.sflag [#allocation6], 1
    %20 = vsyncpa %s19, 0
    %21 = vsyncpa [#allocation14], 0
    %s22 = scalar_lea.sflag [#allocation14], 1
    %23 = vsyncpa %s22, 0
    loop: start=0, step=1, limit=4
    $region2: #{tpu_custom_call.1} parent=1 // loop_pre_header
      _
    $region3: #{tpu_custom_call.1} parent=1 // loop_header
      %s25 = sphi 0, %s29
      %p26 = scmp.ge.s32.totalorder %s25, 4
      %s32 = sphi 0, %s44
      %s33 = sphi 0, %s40
      %s34 = sphi 0, %s32
      %s35 = sphi 0, %s33
      %s36 = sphi 0, %s34
      %s37 = sphi 0, %s35
      %s49 = sphi 0, %s51
      %s52 = sphi 0, %s49
      %s53 = sphi 0, %s52
      %s69 = sphi 0, %s53
      %s75 = sphi 0, %s77
      %s78 = sphi 0, %s75
      %s79 = sphi 0, %s78
      %s95 = sphi 0, %s79
      %s101 = sphi 0, %s103
      %s104 = sphi 0, %s101
      %s105 = sphi 0, %s104
      %s121 = sphi 0, %s105
      %s125 = sphi 0, %s125
      %s127 = sphi 0, %s125
      %s128 = sphi 0, %s127
      %s142 = sphi 0, %s128
      %s146 = sphi 0, %s146
      %s148 = sphi 0, %s146
      %s149 = sphi 0, %s148
      %s163 = sphi 0, %s149
      %s167 = sphi 0, %s167
      %s169 = sphi 0, %s167
      %s170 = sphi 0, %s169
      %s184 = sphi 0, %s170
      %s192 = sphi 0, %s194
      %s195 = sphi 0, %s192
      %s196 = sphi 0, %s195
      %s212 = sphi 0, %s196
      %s220 = sphi 0, %s222
      %s223 = sphi 0, %s220
      %s224 = sphi 0, %s223
      %s240 = sphi 0, %s224
    $region4: #{tpu_custom_call.1} parent=1 // loop_header_branch
      %28 = sbr.rel (%p26) target = $region8
    $region5: #{tpu_custom_call.1} parent=1 // loop_body
      %s30 = ssub.s32 %s25, 1
      %s31 = ssub.s32 %s25, 2
      %s38 = sadd.s32 1, %s33
      %p39 = scmp.ge.s32.totalorder %s38, 2
      %s40 = scalar_select %p39, 0, %s38
      %s41 = sadd.s32 1, %s32
      %s42 = scalar_select %p39, %s41, %s32
      %p43 = scmp.ge.s32.totalorder %s42, 1
      %s44 = scalar_select %p43, 0, %s42
      %s45 = ssub.s32 %s33, %s40
      %s46 = ssub.s32 %s32, %s44
      %s47 = sor.u32 %s45, %s46
      %p48 = scmp.eq.s32.totalorder %s47, 0
      %s50 = sadd.s32 %s49, 1
      %s51 = scalar_select %p48, %s49, %s50
      %p54 = pneg %p48
      %p55 = scmp.eq.s32.totalorder %s25, 1
      %p56 = por %p54, %p55
      %p57 = scmp.ne.s32.totalorder %s49, %s52
      %p58 = scmp.eq.s32.totalorder %s25, 0
      %p59 = por %p57, %p58
      %p60 = scmp.ne.s32.totalorder %s49, %s52
      %p61 = scmp.eq.s32.totalorder %s30, 1
      %p62 = por %p60, %p61
      %p63 = scmp.ne.s32.totalorder %s52, %s53
      %p64 = scmp.eq.s32.totalorder %s30, 0
      %p65 = por %p63, %p64
      %p66 = scmp.ne.s32.totalorder %s52, %s53
      %p67 = scmp.eq.s32.totalorder %s31, 1
      %p68 = por %p66, %p67
      %p70 = scmp.ne.s32.totalorder %s53, %s69
      %p71 = scmp.eq.s32.totalorder %s31, 0
      %p72 = por %p70, %p71
      %s73 = ssub.s32 %s32, %s44
      %p74 = scmp.eq.s32.totalorder %s73, 0
      %s76 = sadd.s32 %s75, 1
      %s77 = scalar_select %p74, %s75, %s76
      %p80 = pneg %p74
      %p81 = scmp.eq.s32.totalorder %s25, 1
      %p82 = por %p80, %p81
      %p83 = scmp.ne.s32.totalorder %s75, %s78
      %p84 = scmp.eq.s32.totalorder %s25, 0
      %p85 = por %p83, %p84
      %p86 = scmp.ne.s32.totalorder %s75, %s78
      %p87 = scmp.eq.s32.totalorder %s30, 1
      %p88 = por %p86, %p87
      %p89 = scmp.ne.s32.totalorder %s78, %s79
      %p90 = scmp.eq.s32.totalorder %s30, 0
      %p91 = por %p89, %p90
      %p92 = scmp.ne.s32.totalorder %s78, %s79
      %p93 = scmp.eq.s32.totalorder %s31, 1
      %p94 = por %p92, %p93
      %p96 = scmp.ne.s32.totalorder %s79, %s95
      %p97 = scmp.eq.s32.totalorder %s31, 0
      %p98 = por %p96, %p97
      %s99 = ssub.s32 %s32, %s44
      %p100 = scmp.eq.s32.totalorder %s99, 0
      %s102 = sadd.s32 %s101, 1
      %s103 = scalar_select %p100, %s101, %s102
      %p106 = pneg %p100
      %p107 = scmp.eq.s32.totalorder %s25, 1
      %p108 = por %p106, %p107
      %p109 = scmp.ne.s32.totalorder %s101, %s104
      %p110 = scmp.eq.s32.totalorder %s25, 0
      %p111 = por %p109, %p110
      %p112 = scmp.ne.s32.totalorder %s101, %s104
      %p113 = scmp.eq.s32.totalorder %s30, 1
      %p114 = por %p112, %p113
      %p115 = scmp.ne.s32.totalorder %s104, %s105
      %p116 = scmp.eq.s32.totalorder %s30, 0
      %p117 = por %p115, %p116
      %p118 = scmp.ne.s32.totalorder %s104, %s105
      %p119 = scmp.eq.s32.totalorder %s31, 1
      %p120 = por %p118, %p119
      %p122 = scmp.ne.s32.totalorder %s105, %s121
      %p123 = scmp.eq.s32.totalorder %s31, 0
      %p124 = por %p122, %p123
      %s126 = sadd.s32 %s125, 1
      %p129 = scmp.eq.s32.totalorder %s25, 1
      %p130 = scmp.ne.s32.totalorder %s125, %s127
      %p131 = scmp.eq.s32.totalorder %s25, 0
      %p132 = por %p130, %p131
      %p133 = scmp.ne.s32.totalorder %s125, %s127
      %p134 = scmp.eq.s32.totalorder %s30, 1
      %p135 = por %p133, %p134
      %p136 = scmp.ne.s32.totalorder %s127, %s128
      %p137 = scmp.eq.s32.totalorder %s30, 0
      %p138 = por %p136, %p137
      %p139 = scmp.ne.s32.totalorder %s127, %s128
      %p140 = scmp.eq.s32.totalorder %s31, 1
      %p141 = por %p139, %p140
      %p143 = scmp.ne.s32.totalorder %s128, %s142
      %p144 = scmp.eq.s32.totalorder %s31, 0
      %p145 = por %p143, %p144
      %s147 = sadd.s32 %s146, 1
      %p150 = scmp.eq.s32.totalorder %s25, 1
      %p151 = scmp.ne.s32.totalorder %s146, %s148
      %p152 = scmp.eq.s32.totalorder %s25, 0
      %p153 = por %p151, %p152
      %p154 = scmp.ne.s32.totalorder %s146, %s148
      %p155 = scmp.eq.s32.totalorder %s30, 1
      %p156 = por %p154, %p155
      %p157 = scmp.ne.s32.totalorder %s148, %s149
      %p158 = scmp.eq.s32.totalorder %s30, 0
      %p159 = por %p157, %p158
      %p160 = scmp.ne.s32.totalorder %s148, %s149
      %p161 = scmp.eq.s32.totalorder %s31, 1
      %p162 = por %p160, %p161
      %p164 = scmp.ne.s32.totalorder %s149, %s163
      %p165 = scmp.eq.s32.totalorder %s31, 0
      %p166 = por %p164, %p165
      %s168 = sadd.s32 %s167, 1
      %p171 = scmp.eq.s32.totalorder %s25, 1
      %p172 = scmp.ne.s32.totalorder %s167, %s169
      %p173 = scmp.eq.s32.totalorder %s25, 0
      %p174 = por %p172, %p173
      %p175 = scmp.ne.s32.totalorder %s167, %s169
      %p176 = scmp.eq.s32.totalorder %s30, 1
      %p177 = por %p175, %p176
      %p178 = scmp.ne.s32.totalorder %s169, %s170
      %p179 = scmp.eq.s32.totalorder %s30, 0
      %p180 = por %p178, %p179
      %p181 = scmp.ne.s32.totalorder %s169, %s170
      %p182 = scmp.eq.s32.totalorder %s31, 1
      %p183 = por %p181, %p182
      %p185 = scmp.ne.s32.totalorder %s170, %s184
      %p186 = scmp.eq.s32.totalorder %s31, 0
      %p187 = por %p185, %p186
      %s188 = ssub.s32 %s33, %s40
      %s189 = ssub.s32 %s32, %s44
      %s190 = sor.u32 %s188, %s189
      %p191 = scmp.eq.s32.totalorder %s190, 0
      %s193 = sadd.s32 %s192, 1
      %s194 = scalar_select %p191, %s192, %s193
      %p197 = pneg %p191
      %p198 = scmp.eq.s32.totalorder %s25, 1
      %p199 = por %p197, %p198
      %p200 = scmp.ne.s32.totalorder %s192, %s195
      %p201 = scmp.eq.s32.totalorder %s25, 0
      %p202 = por %p200, %p201
      %p203 = scmp.ne.s32.totalorder %s192, %s195
      %p204 = scmp.eq.s32.totalorder %s30, 1
      %p205 = por %p203, %p204
      %p206 = scmp.ne.s32.totalorder %s195, %s196
      %p207 = scmp.eq.s32.totalorder %s30, 0
      %p208 = por %p206, %p207
      %p209 = scmp.ne.s32.totalorder %s195, %s196
      %p210 = scmp.eq.s32.totalorder %s31, 1
      %p211 = por %p209, %p210
      %p213 = scmp.ne.s32.totalorder %s196, %s212
      %p214 = scmp.eq.s32.totalorder %s31, 0
      %p215 = por %p213, %p214
      %s216 = ssub.s32 %s33, %s40
      %s217 = ssub.s32 %s32, %s44
      %s218 = sor.u32 %s216, %s217
      %p219 = scmp.eq.s32.totalorder %s218, 0
      %s221 = sadd.s32 %s220, 1
      %s222 = scalar_select %p219, %s220, %s221
      %p225 = pneg %p219
      %p226 = scmp.eq.s32.totalorder %s25, 1
      %p227 = por %p225, %p226
      %p228 = scmp.ne.s32.totalorder %s220, %s223
      %p229 = scmp.eq.s32.totalorder %s25, 0
      %p230 = por %p228, %p229
      %p231 = scmp.ne.s32.totalorder %s220, %s223
      %p232 = scmp.eq.s32.totalorder %s30, 1
      %p233 = por %p231, %p232
      %p234 = scmp.ne.s32.totalorder %s223, %s224
      %p235 = scmp.eq.s32.totalorder %s30, 0
      %p236 = por %p234, %p235
      %p237 = scmp.ne.s32.totalorder %s223, %s224
      %p238 = scmp.eq.s32.totalorder %s31, 1
      %p239 = por %p237, %p238
      %p241 = scmp.ne.s32.totalorder %s224, %s240
      %p242 = scmp.eq.s32.totalorder %s31, 0
      %p243 = por %p241, %p242
      %p244 = scmp.le.s32.totalorder 1, %s25
      %p245 = scmp.lt.s32.totalorder %s25, 3
      %p246 = pnand %p244, %p245
      %p247 = pneg %p246
      // Predicated region
      $region9: #{tpu_custom_call.1} parent=5 // pred_check
        _
      $region10: #{tpu_custom_call.1} parent=5 // pred_check_branch
        %249 = sbr.rel (%p246) target = $region12
      $region11: #{tpu_custom_call.1} parent=5 // pred_region
        %s250 = ssub.s32 %s25, 1
        // Predicated region
        $region13: #{tpu_custom_call.1} parent=11 // pred_check
          %p251 = pneg %p91
        $region14: #{tpu_custom_call.1} parent=11 // pred_check_branch
          %253 = sbr.rel (%p251) target = $region16
        $region15: #{tpu_custom_call.1} parent=11 // pred_region
          %s255 = ssub.s32 128, 128
          %256 = vsyncadd [#allocation8], %s255
          %s257 = smul.addr %s34, 128
          %s258 = scalar_lea.hbm %s1, %s257
          %s260 = sshll.u32 [#allocation7], 4
          %s261 = int_to_ptr.vmem [resolvable:$true] %s260
          %263 = dma.hbm_to_vmem [thread:$0]  %s258, 128, %s261, [#allocation8]
        $region16: #{tpu_custom_call.1} parent=11 // pred_fallthru
          _
        // Predicated region
        $region17: #{tpu_custom_call.1} parent=11 // pred_check
          %p264 = pneg %p117
        $region18: #{tpu_custom_call.1} parent=11 // pred_check_branch
          %266 = sbr.rel (%p264) target = $region20
        $region19: #{tpu_custom_call.1} parent=11 // pred_region
          %s268 = ssub.s32 128, 128
          %269 = vsyncadd [#allocation8], %s268
          %s270 = smul.addr %s34, 128
          %s271 = scalar_lea.hbm %s2, %s270
          %s273 = sshll.u32 [#allocation9], 4
          %s274 = int_to_ptr.vmem [resolvable:$true] %s273
          %276 = dma.hbm_to_vmem [thread:$0]  %s271, 128, %s274, [#allocation8]
        $region20: #{tpu_custom_call.1} parent=11 // pred_fallthru
          _
        // Predicated region
        $region21: #{tpu_custom_call.1} parent=11 // pred_check
          %p277 = pneg %p138
        $region22: #{tpu_custom_call.1} parent=11 // pred_check_branch
          %279 = sbr.rel (%p277) target = $region24
        $region23: #{tpu_custom_call.1} parent=11 // pred_region
          %s281 = ssub.s32 4096, 4096
          %282 = vsyncadd [#allocation11], %s281
          %s283 = sshll.u32 [#allocation10], 4
          %s284 = int_to_ptr.vmem [resolvable:$true] %s283
          %289 = dma.hbm_to_vmem [thread:$0]  %s3, 4096, %s284, [#allocation11], 256, 256, 16
        $region24: #{tpu_custom_call.1} parent=11 // pred_fallthru
          _
        // Predicated region
        $region25: #{tpu_custom_call.1} parent=11 // pred_check
          %p290 = pneg %p159
        $region26: #{tpu_custom_call.1} parent=11 // pred_check_branch
          %292 = sbr.rel (%p290) target = $region28
        $region27: #{tpu_custom_call.1} parent=11 // pred_region
          _
        $region28: #{tpu_custom_call.1} parent=11 // pred_fallthru
          _
        // Predicated region
        $region29: #{tpu_custom_call.1} parent=11 // pred_check
          %p293 = pneg %p180
        $region30: #{tpu_custom_call.1} parent=11 // pred_check_branch
          %295 = sbr.rel (%p293) target = $region32
        $region31: #{tpu_custom_call.1} parent=11 // pred_region
          _
        $region32: #{tpu_custom_call.1} parent=11 // pred_fallthru
          _
      $region12: #{tpu_custom_call.1} parent=5 // pred_fallthru
        _
      %p296 = scmp.lt.s32.totalorder %s25, 2
      // Predicated region
      $region33: #{tpu_custom_call.1} parent=5 // pred_check
        %p297 = pneg %p296
      $region34: #{tpu_custom_call.1} parent=5 // pred_check_branch
        %299 = sbr.rel (%p297) target = $region36
      $region35: #{tpu_custom_call.1} parent=5 // pred_region
        // Predicated region
        $region37: #{tpu_custom_call.1} parent=35 // pred_check
          %p300 = pneg %p59
        $region38: #{tpu_custom_call.1} parent=35 // pred_check_branch
          %302 = sbr.rel (%p300) target = $region40
        $region39: #{tpu_custom_call.1} parent=35 // pred_region
          %s303 = sand.u32 %s49, 1
          %s304 = scalar_lea.sflag [#allocation5], %s303
          %s305 = sand.u32 %s49, 1
          %s306 = smul.addr %s305, 256
          %s307 = scalar_lea.vmem [#allocation4], %s306
          %s308 = smul.u32 8, %s33
          %s310 = ssub.s32 4096, 4096
          %311 = vsyncadd %s304, %s310
          %s312 = smul.addr %s32, 4
          %s313 = smul.addr %s308, 4
          %s314 = sadd.s32 %s312, %s313
          %s315 = smul.addr %s314, 128
          %s316 = scalar_lea.hbm %s0, %s315
          %s317 = sshll.u32 %s307, 4
          %s318 = int_to_ptr.vmem [resolvable:$true] %s317
          %323 = dma.hbm_to_vmem [thread:$0]  %s316, 4096, %s318, %s304, 512, 512, 32
        $region40: #{tpu_custom_call.1} parent=35 // pred_fallthru
          _
      $region36: #{tpu_custom_call.1} parent=5 // pred_fallthru
        _
      %p324 = scmp.le.s32.totalorder 1, %s25
      %p325 = scmp.lt.s32.totalorder %s25, 3
      %p326 = pnand %p324, %p325
      %p327 = pneg %p326
      // Predicated region
      $region41: #{tpu_custom_call.1} parent=5 // pred_check
        _
      $region42: #{tpu_custom_call.1} parent=5 // pred_check_branch
        %329 = sbr.rel (%p326) target = $region44
      $region43: #{tpu_custom_call.1} parent=5 // pred_region
        %s330 = ssub.s32 %s25, 1
        %s331 = sand.u32 %s52, 1
        %s332 = scalar_lea.sflag [#allocation5], %s331
        %s333 = sand.u32 %s52, 1
        %s334 = smul.addr %s333, 256
        %s335 = scalar_lea.vmem [#allocation4], %s334
        // Predicated region
        $region45: #{tpu_custom_call.1} parent=43 // pred_check
          %p336 = pneg %p65
        $region46: #{tpu_custom_call.1} parent=43 // pred_check_branch
          %338 = sbr.rel (%p336) target = $region48
        $region47: #{tpu_custom_call.1} parent=43 // pred_region
          %339 = dma.done %s332, 4096
        $region48: #{tpu_custom_call.1} parent=43 // pred_fallthru
          _
        // Predicated region
        $region49: #{tpu_custom_call.1} parent=43 // pred_check
          %p340 = pneg %p91
        $region50: #{tpu_custom_call.1} parent=43 // pred_check_branch
          %342 = sbr.rel (%p340) target = $region52
        $region51: #{tpu_custom_call.1} parent=43 // pred_region
          %343 = dma.done [#allocation8], 128
        $region52: #{tpu_custom_call.1} parent=43 // pred_fallthru
          _
        // Predicated region
        $region53: #{tpu_custom_call.1} parent=43 // pred_check
          %p344 = pneg %p117
        $region54: #{tpu_custom_call.1} parent=43 // pred_check_branch
          %346 = sbr.rel (%p344) target = $region56
        $region55: #{tpu_custom_call.1} parent=43 // pred_region
          %347 = dma.done [#allocation8], 128
        $region56: #{tpu_custom_call.1} parent=43 // pred_fallthru
          _
        // Predicated region
        $region57: #{tpu_custom_call.1} parent=43 // pred_check
          %p348 = pneg %p138
        $region58: #{tpu_custom_call.1} parent=43 // pred_check_branch
          %350 = sbr.rel (%p348) target = $region60
        $region59: #{tpu_custom_call.1} parent=43 // pred_region
          %351 = dma.done [#allocation11], 4096
        $region60: #{tpu_custom_call.1} parent=43 // pred_fallthru
          _
        %s352 = sand.u32 %s52, 1
        %s353 = scalar_lea.sflag [#allocation5], %s352
        %s354 = sand.u32 %s52, 1
        %s355 = smul.addr %s354, 256
        %s356 = scalar_lea.vmem [#allocation4], %s355
        %p357 = pneg %p65
        %p358 = pneg %p62
        %p359 = pneg %p91
        %p360 = pneg %p88
        %p361 = pneg %p117
        %p362 = pneg %p114
        %p363 = pneg %p138
        %p364 = pneg %p135
        %p365 = pneg %p159
        %p366 = pneg %p156
        %p367 = pneg %p180
        %p368 = pneg %p177
        %p369 = pneg %p208
        %p370 = pneg %p205
        %s371 = sand.u32 %s195, 1
        %s372 = scalar_lea.sflag [#allocation6], %s371
        %s373 = sand.u32 %s195, 1
        %s374 = smul.addr %s373, 64
        %s375 = scalar_lea.vmem [#allocation12], %s374
        %p376 = pneg %p236
        %p377 = pneg %p233
        %s378 = sand.u32 %s223, 1
        %s379 = scalar_lea.sflag [#allocation14], %s378
        %s380 = sand.u32 %s223, 1
        %s381 = smul.addr %s380, 64
        %s382 = scalar_lea.vmem [#allocation13], %s381
        %s383 = smul.u32 8, %s35
        %s384 = smul.u32 8, %s35
        %s385 = smul.u32 8, %s35
        %p387 = scmp.eq.s32.totalorder %s35, 0
        // Predicated region
        $region61: #{tpu_custom_call.1} parent=43 // pred_check
          %p388 = pneg %p387
        $region62: #{tpu_custom_call.1} parent=43 // pred_check_branch
          %390 = sbr.rel (%p388) target = $region64
        $region63: #{tpu_custom_call.1} parent=43 // pred_region
          %v391 = vld [vmem:[#allocation7] sm:$0xff]
          %v392 = vpack.c.bf16 %v391, %v391
          %393 = vst [vmem:[#allocation2] sm:$0xf] %v392
          %v394 = vld [vmem:[#allocation9] sm:$0xff]
          %395 = vst [vmem:[#allocation3] sm:$0xff] %v394
        $region64: #{tpu_custom_call.1} parent=43 // pred_fallthru
          _
        %v396 = vld [vmem:[#allocation10] sm:$0xff]
        %v397 = vld [vmem:[#allocation10 + $0x8] sm:$0xff]
        %v398 = vld [vmem:[#allocation10 + $0x10] sm:$0xff]
        %v399 = vld [vmem:[#allocation10 + $0x18] sm:$0xff]
        %v400 = vld [vmem:[#allocation10 + $0x20] sm:$0xff]
        %v401 = vld [vmem:[#allocation10 + $0x28] sm:$0xff]
        %v402 = vld [vmem:[#allocation10 + $0x30] sm:$0xff]
        %v403 = vld [vmem:[#allocation10 + $0x38] sm:$0xff]
        %v404 = vld [vmem:[#allocation10 + $0x40] sm:$0xff]
        %v405 = vld [vmem:[#allocation10 + $0x48] sm:$0xff]
        %v406 = vld [vmem:[#allocation10 + $0x50] sm:$0xff]
        %v407 = vld [vmem:[#allocation10 + $0x58] sm:$0xff]
        %v408 = vld [vmem:[#allocation10 + $0x60] sm:$0xff]
        %v409 = vld [vmem:[#allocation10 + $0x68] sm:$0xff]
        %v410 = vld [vmem:[#allocation10 + $0x70] sm:$0xff]
        %v411 = vld [vmem:[#allocation10 + $0x78] sm:$0xff]
        %v412 = vld [vmem:[#allocation10 + $0x80] sm:$0xff]
        %v413 = vld [vmem:[#allocation10 + $0x88] sm:$0xff]
        %v414 = vld [vmem:[#allocation10 + $0x90] sm:$0xff]
        %v415 = vld [vmem:[#allocation10 + $0x98] sm:$0xff]
        %v416 = vld [vmem:[#allocation10 + $0xa0] sm:$0xff]
        %v417 = vld [vmem:[#allocation10 + $0xa8] sm:$0xff]
        %v418 = vld [vmem:[#allocation10 + $0xb0] sm:$0xff]
        %v419 = vld [vmem:[#allocation10 + $0xb8] sm:$0xff]
        %v420 = vld [vmem:[#allocation10 + $0xc0] sm:$0xff]
        %v421 = vld [vmem:[#allocation10 + $0xc8] sm:$0xff]
        %v422 = vld [vmem:[#allocation10 + $0xd0] sm:$0xff]
        %v423 = vld [vmem:[#allocation10 + $0xd8] sm:$0xff]
        %v424 = vld [vmem:[#allocation10 + $0xe0] sm:$0xff]
        %v425 = vld [vmem:[#allocation10 + $0xe8] sm:$0xff]
        %v426 = vld [vmem:[#allocation10 + $0xf0] sm:$0xff]
        %v427 = vld [vmem:[#allocation10 + $0xf8] sm:$0xff]
        %v428 = vld [vmem:[%s4] sm:$0x1f]
        %v429 = vld [vmem:[%s5] sm:$0x1f]
        %v430 = vld [vmem:[%s335] sm:$0xff]
        %v431 = vld [vmem:[%s335 + $0x8] sm:$0xff]
        %v432 = vld [vmem:[%s335 + $0x10] sm:$0xff]
        %v433 = vld [vmem:[%s335 + $0x18] sm:$0xff]
        %v434 = vld [vmem:[#allocation2] sm:$0xf]
        %v467 = vunpack.c.l.b16 %v396
        %v468 = vunpack.c.h.b16 %v396
        %v469 = vunpack.c.l.b16 %v397
        %v470 = vunpack.c.h.b16 %v397
        %v471 = vunpack.c.l.b16 %v398
        %v472 = vunpack.c.h.b16 %v398
        %v473 = vunpack.c.l.b16 %v399
        %v474 = vunpack.c.h.b16 %v399
        %v475 = vunpack.c.l.b16 %v400
        %v476 = vunpack.c.h.b16 %v400
        %v477 = vunpack.c.l.b16 %v401
        %v478 = vunpack.c.h.b16 %v401
        %v479 = vunpack.c.l.b16 %v402
        %v480 = vunpack.c.h.b16 %v402
        %v481 = vunpack.c.l.b16 %v403
        %v482 = vunpack.c.h.b16 %v403
        %v483 = vunpack.c.l.b16 %v404
        %v484 = vunpack.c.h.b16 %v404
        %v485 = vunpack.c.l.b16 %v405
        %v486 = vunpack.c.h.b16 %v405
        %v487 = vunpack.c.l.b16 %v406
        %v488 = vunpack.c.h.b16 %v406
        %v489 = vunpack.c.l.b16 %v407
        %v490 = vunpack.c.h.b16 %v407
        %v491 = vunpack.c.l.b16 %v408
        %v492 = vunpack.c.h.b16 %v408
        %v493 = vunpack.c.l.b16 %v409
        %v494 = vunpack.c.h.b16 %v409
        %v495 = vunpack.c.l.b16 %v410
        %v496 = vunpack.c.h.b16 %v410
        %v497 = vunpack.c.l.b16 %v411
        %v498 = vunpack.c.h.b16 %v411
        %v499 = vunpack.c.l.b16 %v412
        %v500 = vunpack.c.h.b16 %v412
        %v501 = vunpack.c.l.b16 %v413
        %v502 = vunpack.c.h.b16 %v413
        %v503 = vunpack.c.l.b16 %v414
        %v504 = vunpack.c.h.b16 %v414
        %v505 = vunpack.c.l.b16 %v415
        %v506 = vunpack.c.h.b16 %v415
        %v507 = vunpack.c.l.b16 %v416
        %v508 = vunpack.c.h.b16 %v416
        %v509 = vunpack.c.l.b16 %v417
        %v510 = vunpack.c.h.b16 %v417
        %v511 = vunpack.c.l.b16 %v418
        %v512 = vunpack.c.h.b16 %v418
        %v513 = vunpack.c.l.b16 %v419
        %v514 = vunpack.c.h.b16 %v419
        %v515 = vunpack.c.l.b16 %v420
        %v516 = vunpack.c.h.b16 %v420
        %v517 = vunpack.c.l.b16 %v421
        %v518 = vunpack.c.h.b16 %v421
        %v519 = vunpack.c.l.b16 %v422
        %v520 = vunpack.c.h.b16 %v422
        %v521 = vunpack.c.l.b16 %v423
        %v522 = vunpack.c.h.b16 %v423
        %v523 = vunpack.c.l.b16 %v424
        %v524 = vunpack.c.h.b16 %v424
        %v525 = vunpack.c.l.b16 %v425
        %v526 = vunpack.c.h.b16 %v425
        %v527 = vunpack.c.l.b16 %v426
        %v528 = vunpack.c.h.b16 %v426
        %v529 = vunpack.c.l.b16 %v427
        %v530 = vunpack.c.h.b16 %v427
        %v531 = vpack.c.b16 %v471, %v467
        %v532 = vpack.c.b16 %v472, %v468
        %v533 = vpack.c.b16 %v473, %v469
        %v534 = vpack.c.b16 %v474, %v470
        %v535 = vpack.c.b16 %v479, %v475
        %v536 = vpack.c.b16 %v480, %v476
        %v537 = vpack.c.b16 %v481, %v477
        %v538 = vpack.c.b16 %v482, %v478
        %v539 = vpack.c.b16 %v487, %v483
        %v540 = vpack.c.b16 %v488, %v484
        %v541 = vpack.c.b16 %v489, %v485
        %v542 = vpack.c.b16 %v490, %v486
        %v543 = vpack.c.b16 %v495, %v491
        %v544 = vpack.c.b16 %v496, %v492
        %v545 = vpack.c.b16 %v497, %v493
        %v546 = vpack.c.b16 %v498, %v494
        %v547 = vpack.c.b16 %v503, %v499
        %v548 = vpack.c.b16 %v504, %v500
        %v549 = vpack.c.b16 %v505, %v501
        %v550 = vpack.c.b16 %v506, %v502
        %v551 = vpack.c.b16 %v511, %v507
        %v552 = vpack.c.b16 %v512, %v508
        %v553 = vpack.c.b16 %v513, %v509
        %v554 = vpack.c.b16 %v514, %v510
        %v555 = vpack.c.b16 %v519, %v515
        %v556 = vpack.c.b16 %v520, %v516
        %v557 = vpack.c.b16 %v521, %v517
        %v558 = vpack.c.b16 %v522, %v518
        %v559 = vpack.c.b16 %v527, %v523
        %v560 = vpack.c.b16 %v528, %v524
        %v561 = vpack.c.b16 %v529, %v525
        %v562 = vpack.c.b16 %v530, %v526
        %595 = vmatprep.subr.bf16.mxu0 %v532
        %596 = vmatpush1.bf16.msra.mxu0 %v531
        %597 = vmatprep.subr.bf16.mxu0 %v536
        %598 = vmatpush1.bf16.msra.mxu0 %v535
        %599 = vmatprep.subr.bf16.mxu0 %v540
        %600 = vmatpush1.bf16.msra.mxu0 %v539
        %601 = vmatprep.subr.bf16.mxu0 %v544
        %602 = vmatpush1.bf16.msra.mxu0 %v543
        %603 = vmatprep.subr.bf16.mxu0 %v548
        %604 = vmatpush1.bf16.msra.mxu0 %v547
        %605 = vmatprep.subr.bf16.mxu0 %v552
        %606 = vmatpush1.bf16.msra.mxu0 %v551
        %607 = vmatprep.subr.bf16.mxu0 %v556
        %608 = vmatpush1.bf16.msra.mxu0 %v555
        %609 = vmatprep.subr.bf16.mxu0 %v560
        %610 = vmatpush1.bf16.msra.mxu0 %v559
        %611 = vmatprep.subr.bf16.mxu0 0
        %612 = vmatpush1.bf16.msra.mxu0 0
        %613 = vmatprep.subr.bf16.mxu0 0
        %614 = vmatpush1.bf16.msra.mxu0 0
        %615 = vmatprep.subr.bf16.mxu0 0
        %616 = vmatpush1.bf16.msra.mxu0 0
        %617 = vmatprep.subr.bf16.mxu0 0
        %618 = vmatpush1.bf16.msra.mxu0 0
        %619 = vmatprep.subr.bf16.mxu0 0
        %620 = vmatpush1.bf16.msra.mxu0 0
        %621 = vmatprep.subr.bf16.mxu0 0
        %622 = vmatpush1.bf16.msra.mxu0 0
        %623 = vmatprep.subr.bf16.mxu0 0
        %624 = vmatpush1.bf16.msra.mxu0 0
        %625 = vmatprep.subr.bf16.mxu0 0
        %626 = vmatpush1.bf16.msra.mxu0 0
        %627 = vmatprep.mubr.bf16.mxu0 0
        %628 = vmatmul.mubr.bf16.gmra.mrb[0].mxu0 %v434
        %v629 = vpop.f32.mrb[0].mxu0
        %v630 = vadd.f32 0.0, %v629
        %v631 = vpop.f32.mrb[0].mxu0
        %v632 = vadd.f32 0.0, %v631
        %v633 = vpop.f32.mrb[0].mxu0
        %v634 = vpop.f32.mrb[0].mxu0
        %635 = vdwg.mxu0
        %636 = vmatprep.subr.bf16.mxu0 %v534
        %637 = vmatpush1.bf16.msra.mxu0 %v533
        %638 = vmatprep.subr.bf16.mxu0 %v538
        %639 = vmatpush1.bf16.msra.mxu0 %v537
        %640 = vmatprep.subr.bf16.mxu0 %v542
        %641 = vmatpush1.bf16.msra.mxu0 %v541
        %642 = vmatprep.subr.bf16.mxu0 %v546
        %643 = vmatpush1.bf16.msra.mxu0 %v545
        %644 = vmatprep.subr.bf16.mxu0 %v550
        %645 = vmatpush1.bf16.msra.mxu0 %v549
        %646 = vmatprep.subr.bf16.mxu0 %v554
        %647 = vmatpush1.bf16.msra.mxu0 %v553
        %648 = vmatprep.subr.bf16.mxu0 %v558
        %649 = vmatpush1.bf16.msra.mxu0 %v557
        %650 = vmatprep.subr.bf16.mxu0 %v562
        %651 = vmatpush1.bf16.msra.mxu0 %v561
        %652 = vmatprep.subr.bf16.mxu0 0
        %653 = vmatpush1.bf16.msra.mxu0 0
        %654 = vmatprep.subr.bf16.mxu0 0
        %655 = vmatpush1.bf16.msra.mxu0 0
        %656 = vmatprep.subr.bf16.mxu0 0
        %657 = vmatpush1.bf16.msra.mxu0 0
        %658 = vmatprep.subr.bf16.mxu0 0
        %659 = vmatpush1.bf16.msra.mxu0 0
        %660 = vmatprep.subr.bf16.mxu0 0
        %661 = vmatpush1.bf16.msra.mxu0 0
        %662 = vmatprep.subr.bf16.mxu0 0
        %663 = vmatpush1.bf16.msra.mxu0 0
        %664 = vmatprep.subr.bf16.mxu0 0
        %665 = vmatpush1.bf16.msra.mxu0 0
        %666 = vmatprep.subr.bf16.mxu0 0
        %667 = vmatpush1.bf16.msra.mxu0 0
        %668 = vmatprep.mubr.bf16.mxu0 0
        %669 = vmatmul.mubr.bf16.gmra.mrb[0].mxu0 %v434
        %v670 = vpop.f32.mrb[0].mxu0
        %v671 = vadd.f32 0.0, %v670
        %v672 = vpop.f32.mrb[0].mxu0
        %v673 = vadd.f32 0.0, %v672
        %v674 = vpop.f32.mrb[0].mxu0
        %v675 = vpop.f32.mrb[0].mxu0
        %676 = vdwg.mxu0
        %v677 = vadd.f32 %v430, %v630
        %v678 = vadd.f32 %v431, %v632
        %v679 = vadd.f32 %v432, %v671
        %v680 = vadd.f32 %v433, %v673
        %681 = vadd.xlane.f32.xlu0 %v677
        %v682 = vpop.xlane.xlu0 %681
        %v683 = vrcp.pop 128.0
        %v684 = vmul.f32 %v682, %v683
        %v685 = vmul.f32 %v677, %v677
        %686 = vadd.xlane.f32.xlu0 %v685
        %v687 = vpop.xlane.xlu0 %686
        %v688 = vmul.f32 %v687, %v683
        %v689 = vmul.f32 %v684, %v684
        %v690 = vsub.f32 %v688, %v689
        %v691 = vsub.f32 %v677, %v684
        %v692 = vadd.f32 %v690, 1e-05
        %v693 = vrsqrt.pop %v692
        %v694 = vmul.f32 %v691, %v693
        %v695 = vlaneseq
        %v696 = vshrl.u32 %v695, 7
        %v697 = vsub.s32 0, %v696
        %v698 = vrot.slane %v428, %v697
        %v699 = vmul.f32 %v694, %v698
        %v700 = vlaneseq
        %v701 = vshrl.u32 %v700, 7
        %v702 = vsub.s32 0, %v701
        %v703 = vrot.slane %v429, %v702
        %v704 = vadd.f32 %v699, %v703
        %v705 = vxor.u32 %v704, 2147483648
        %v706 = vmul.f32 %v705, 1.442695
        %v707 = vpow.pop %v706
        %v708 = vadd.f32 %v707, 1.0
        %v709 = vrcp.pop %v708
        %v710 = vmul.f32 1.0, %v709
        %711 = vadd.xlane.f32.xlu0 %v678
        %v712 = vpop.xlane.xlu0 %711
        %v713 = vmul.f32 %v712, %v683
        %v714 = vmul.f32 %v678, %v678
        %715 = vadd.xlane.f32.xlu0 %v714
        %v716 = vpop.xlane.xlu0 %715
        %v717 = vmul.f32 %v716, %v683
        %v718 = vmul.f32 %v713, %v713
        %v719 = vsub.f32 %v717, %v718
        %v720 = vsub.f32 %v678, %v713
        %v721 = vadd.f32 %v719, 1e-05
        %v722 = vrsqrt.pop %v721
        %v723 = vmul.f32 %v720, %v722
        %v724 = vlaneseq
        %v725 = vshrl.u32 %v724, 7
        %v726 = vsub.s32 1, %v725
        %v727 = vrot.slane %v428, %v726
        %v728 = vmul.f32 %v723, %v727
        %v729 = vlaneseq
        %v730 = vshrl.u32 %v729, 7
        %v731 = vsub.s32 1, %v730
        %v732 = vrot.slane %v429, %v731
        %v733 = vadd.f32 %v728, %v732
        %v734 = vxor.u32 %v733, 2147483648
        %v735 = vmul.f32 %v734, 1.442695
        %v736 = vpow.pop %v735
        %v737 = vadd.f32 %v736, 1.0
        %v738 = vrcp.pop %v737
        %v739 = vmul.f32 1.0, %v738
        %740 = vadd.xlane.f32.xlu0 %v679
        %v741 = vpop.xlane.xlu0 %740
        %v742 = vmul.f32 %v741, %v683
        %v743 = vmul.f32 %v679, %v679
        %744 = vadd.xlane.f32.xlu0 %v743
        %v745 = vpop.xlane.xlu0 %744
        %v746 = vmul.f32 %v745, %v683
        %v747 = vmul.f32 %v742, %v742
        %v748 = vsub.f32 %v746, %v747
        %v749 = vsub.f32 %v679, %v742
        %v750 = vadd.f32 %v748, 1e-05
        %v751 = vrsqrt.pop %v750
        %v752 = vmul.f32 %v749, %v751
        %v753 = vlaneseq
        %v754 = vshrl.u32 %v753, 7
        %v755 = vsub.s32 2, %v754
        %v756 = vrot.slane %v428, %v755
        %v757 = vmul.f32 %v752, %v756
        %v758 = vlaneseq
        %v759 = vshrl.u32 %v758, 7
        %v760 = vsub.s32 2, %v759
        %v761 = vrot.slane %v429, %v760
        %v762 = vadd.f32 %v757, %v761
        %v763 = vxor.u32 %v762, 2147483648
        %v764 = vmul.f32 %v763, 1.442695
        %v765 = vpow.pop %v764
        %v766 = vadd.f32 %v765, 1.0
        %v767 = vrcp.pop %v766
        %v768 = vmul.f32 1.0, %v767
        %769 = vadd.xlane.f32.xlu0 %v680
        %v770 = vpop.xlane.xlu0 %769
        %v771 = vmul.f32 %v770, %v683
        %v772 = vmul.f32 %v680, %v680
        %773 = vadd.xlane.f32.xlu0 %v772
        %v774 = vpop.xlane.xlu0 %773
        %v775 = vmul.f32 %v774, %v683
        %v776 = vmul.f32 %v771, %v771
        %v777 = vsub.f32 %v775, %v776
        %v778 = vsub.f32 %v680, %v771
        %v779 = vadd.f32 %v777, 1e-05
        %v780 = vrsqrt.pop %v779
        %v781 = vmul.f32 %v778, %v780
        %v782 = vlaneseq
        %v783 = vshrl.u32 %v782, 7
        %v784 = vsub.s32 3, %v783
        %v785 = vrot.slane %v428, %v784
        %v786 = vmul.f32 %v781, %v785
        %v787 = vlaneseq
        %v788 = vshrl.u32 %v787, 7
        %v789 = vsub.s32 3, %v788
        %v790 = vrot.slane %v429, %v789
        %v791 = vadd.f32 %v786, %v790
        %v792 = vtanh.pop %v791
        %v793 = vmul.f32 %v739, %v792
        %v794 = vld [vmem:[#allocation3] sm:$0xff]
        %v795 = vmul.f32 %v710, %v794
        %v796 = vadd.f32 %v793, %v795
        %797 = vadd.xlane.f32.xlu0 %v796
        %v798 = vpop.xlane.xlu0 %797
        %v799 = vmul.f32 %v798, %v683
        %v800 = vmul.f32 %v796, %v796
        %801 = vadd.xlane.f32.xlu0 %v800
        %v802 = vpop.xlane.xlu0 %801
        %v803 = vmul.f32 %v802, %v683
        %v804 = vmul.f32 %v799, %v799
        %v805 = vsub.f32 %v803, %v804
        %v806 = vsub.f32 %v796, %v799
        %v807 = vadd.f32 %v805, 1e-05
        %v808 = vrsqrt.pop %v807
        %v809 = vmul.f32 %v806, %v808
        %v810 = vlaneseq
        %v811 = vshrl.u32 %v810, 7
        %v812 = vsub.s32 4, %v811
        %v813 = vrot.slane %v428, %v812
        %v814 = vmul.f32 %v809, %v813
        %v815 = vlaneseq
        %v816 = vshrl.u32 %v815, 7
        %v817 = vsub.s32 4, %v816
        %v818 = vrot.slane %v429, %v817
        %v819 = vadd.f32 %v814, %v818
        %v820 = vtanh.pop %v819
        %v821 = vmul.f32 %v768, %v820
        %v822 = vpack.c.bf16 %v821, %v821
        %823 = vst [vmem:[#allocation2] sm:$0xf] %v822
        %824 = vst [vmem:[#allocation3] sm:$0xff] %v819
        %825 = vst [vmem:[%s375] sm:$0xff] %v821
        %826 = vst [vmem:[%s382] sm:$0xff] %v819
        %s827 = scalar_lea.vmem %s335, 32 [#allocation4]
        %v828 = vld [vmem:[%s827] sm:$0xff]
        %v829 = vld [vmem:[%s827 + $0x8] sm:$0xff]
        %v830 = vld [vmem:[%s827 + $0x10] sm:$0xff]
        %v831 = vld [vmem:[%s827 + $0x18] sm:$0xff]
        %v832 = vld [vmem:[#allocation2] sm:$0xf]
        %833 = vmatprep.subr.bf16.mxu0 %v532
        %834 = vmatpush1.bf16.msra.mxu0 %v531
        %835 = vmatprep.subr.bf16.mxu0 %v536
        %836 = vmatpush1.bf16.msra.mxu0 %v535
        %837 = vmatprep.subr.bf16.mxu0 %v540
        %838 = vmatpush1.bf16.msra.mxu0 %v539
        %839 = vmatprep.subr.bf16.mxu0 %v544
        %840 = vmatpush1.bf16.msra.mxu0 %v543
        %841 = vmatprep.subr.bf16.mxu0 %v548
        %842 = vmatpush1.bf16.msra.mxu0 %v547
        %843 = vmatprep.subr.bf16.mxu0 %v552
        %844 = vmatpush1.bf16.msra.mxu0 %v551
        %845 = vmatprep.subr.bf16.mxu0 %v556
        %846 = vmatpush1.bf16.msra.mxu0 %v555
        %847 = vmatprep.subr.bf16.mxu0 %v560
        %848 = vmatpush1.bf16.msra.mxu0 %v559
        %849 = vmatprep.subr.bf16.mxu0 0
        %850 = vmatpush1.bf16.msra.mxu0 0
        %851 = vmatprep.subr.bf16.mxu0 0
        %852 = vmatpush1.bf16.msra.mxu0 0
        %853 = vmatprep.subr.bf16.mxu0 0
        %854 = vmatpush1.bf16.msra.mxu0 0
        %855 = vmatprep.subr.bf16.mxu0 0
        %856 = vmatpush1.bf16.msra.mxu0 0
        %857 = vmatprep.subr.bf16.mxu0 0
        %858 = vmatpush1.bf16.msra.mxu0 0
        %859 = vmatprep.subr.bf16.mxu0 0
        %860 = vmatpush1.bf16.msra.mxu0 0
        %861 = vmatprep.subr.bf16.mxu0 0
        %862 = vmatpush1.bf16.msra.mxu0 0
        %863 = vmatprep.subr.bf16.mxu0 0
        %864 = vmatpush1.bf16.msra.mxu0 0
        %865 = vmatprep.mubr.bf16.mxu0 0
        %866 = vmatmul.mubr.bf16.gmra.mrb[0].mxu0 %v832
        %v867 = vpop.f32.mrb[0].mxu0
        %v868 = vadd.f32 0.0, %v867
        %v869 = vpop.f32.mrb[0].mxu0
        %v870 = vadd.f32 0.0, %v869
        %v871 = vpop.f32.mrb[0].mxu0
        %v872 = vpop.f32.mrb[0].mxu0
        %873 = vdwg.mxu0
        %874 = vmatprep.subr.bf16.mxu0 %v534
        %875 = vmatpush1.bf16.msra.mxu0 %v533
        %876 = vmatprep.subr.bf16.mxu0 %v538
        %877 = vmatpush1.bf16.msra.mxu0 %v537
        %878 = vmatprep.subr.bf16.mxu0 %v542
        %879 = vmatpush1.bf16.msra.mxu0 %v541
        %880 = vmatprep.subr.bf16.mxu0 %v546
        %881 = vmatpush1.bf16.msra.mxu0 %v545
        %882 = vmatprep.subr.bf16.mxu0 %v550
        %883 = vmatpush1.bf16.msra.mxu0 %v549
        %884 = vmatprep.subr.bf16.mxu0 %v554
        %885 = vmatpush1.bf16.msra.mxu0 %v553
        %886 = vmatprep.subr.bf16.mxu0 %v558
        %887 = vmatpush1.bf16.msra.mxu0 %v557
        %888 = vmatprep.subr.bf16.mxu0 %v562
        %889 = vmatpush1.bf16.msra.mxu0 %v561
        %890 = vmatprep.subr.bf16.mxu0 0
        %891 = vmatpush1.bf16.msra.mxu0 0
        %892 = vmatprep.subr.bf16.mxu0 0
        %893 = vmatpush1.bf16.msra.mxu0 0
        %894 = vmatprep.subr.bf16.mxu0 0
        %895 = vmatpush1.bf16.msra.mxu0 0
        %896 = vmatprep.subr.bf16.mxu0 0
        %897 = vmatpush1.bf16.msra.mxu0 0
        %898 = vmatprep.subr.bf16.mxu0 0
        %899 = vmatpush1.bf16.msra.mxu0 0
        %900 = vmatprep.subr.bf16.mxu0 0
        %901 = vmatpush1.bf16.msra.mxu0 0
        %902 = vmatprep.subr.bf16.mxu0 0
        %903 = vmatpush1.bf16.msra.mxu0 0
        %904 = vmatprep.subr.bf16.mxu0 0
        %905 = vmatpush1.bf16.msra.mxu0 0
        %906 = vmatprep.mubr.bf16.mxu0 0
        %907 = vmatmul.mubr.bf16.gmra.mrb[0].mxu0 %v832
        %v908 = vpop.f32.mrb[0].mxu0
        %v909 = vadd.f32 0.0, %v908
        %v910 = vpop.f32.mrb[0].mxu0
        %v911 = vadd.f32 0.0, %v910
        %v912 = vpop.f32.mrb[0].mxu0
        %v913 = vpop.f32.mrb[0].mxu0
        %914 = vdwg.mxu0
        %v915 = vadd.f32 %v828, %v868
        %v916 = vadd.f32 %v829, %v870
        %v917 = vadd.f32 %v830, %v909
        %v918 = vadd.f32 %v831, %v911
        %919 = vadd.xlane.f32.xlu0 %v915
        %v920 = vpop.xlane.xlu0 %919
        %v921 = vmul.f32 %v920, %v683
        %v922 = vmul.f32 %v915, %v915
        %923 = vadd.xlane.f32.xlu0 %v922
        %v924 = vpop.xlane.xlu0 %923
        %v925 = vmul.f32 %v924, %v683
        %v926 = vmul.f32 %v921, %v921
        %v927 = vsub.f32 %v925, %v926
        %v928 = vsub.f32 %v915, %v921
        %v929 = vadd.f32 %v927, 1e-05
        %v930 = vrsqrt.pop %v929
        %v931 = vmul.f32 %v928, %v930
        %v932 = vmul.f32 %v931, %v698
        %v933 = vadd.f32 %v932, %v703
        %v934 = vxor.u32 %v933, 2147483648
        %v935 = vmul.f32 %v934, 1.442695
        %v936 = vpow.pop %v935
        %v937 = vadd.f32 %v936, 1.0
        %v938 = vrcp.pop %v937
        %v939 = vmul.f32 1.0, %v938
        %940 = vadd.xlane.f32.xlu0 %v916
        %v941 = vpop.xlane.xlu0 %940
        %v942 = vmul.f32 %v941, %v683
        %v943 = vmul.f32 %v916, %v916
        %944 = vadd.xlane.f32.xlu0 %v943
        %v945 = vpop.xlane.xlu0 %944
        %v946 = vmul.f32 %v945, %v683
        %v947 = vmul.f32 %v942, %v942
        %v948 = vsub.f32 %v946, %v947
        %v949 = vsub.f32 %v916, %v942
        %v950 = vadd.f32 %v948, 1e-05
        %v951 = vrsqrt.pop %v950
        %v952 = vmul.f32 %v949, %v951
        %v953 = vmul.f32 %v952, %v727
        %v954 = vadd.f32 %v953, %v732
        %v955 = vxor.u32 %v954, 2147483648
        %v956 = vmul.f32 %v955, 1.442695
        %v957 = vpow.pop %v956
        %v958 = vadd.f32 %v957, 1.0
        %v959 = vrcp.pop %v958
        %v960 = vmul.f32 1.0, %v959
        %961 = vadd.xlane.f32.xlu0 %v917
        %v962 = vpop.xlane.xlu0 %961
        %v963 = vmul.f32 %v962, %v683
        %v964 = vmul.f32 %v917, %v917
        %965 = vadd.xlane.f32.xlu0 %v964
        %v966 = vpop.xlane.xlu0 %965
        %v967 = vmul.f32 %v966, %v683
        %v968 = vmul.f32 %v963, %v963
        %v969 = vsub.f32 %v967, %v968
        %v970 = vsub.f32 %v917, %v963
        %v971 = vadd.f32 %v969, 1e-05
        %v972 = vrsqrt.pop %v971
        %v973 = vmul.f32 %v970, %v972
        %v974 = vmul.f32 %v973, %v756
        %v975 = vadd.f32 %v974, %v761
        %v976 = vxor.u32 %v975, 2147483648
        %v977 = vmul.f32 %v976, 1.442695
        %v978 = vpow.pop %v977
        %v979 = vadd.f32 %v978, 1.0
        %v980 = vrcp.pop %v979
        %v981 = vmul.f32 1.0, %v980
        %982 = vadd.xlane.f32.xlu0 %v918
        %v983 = vpop.xlane.xlu0 %982
        %v984 = vmul.f32 %v983, %v683
        %v985 = vmul.f32 %v918, %v918
        %986 = vadd.xlane.f32.xlu0 %v985
        %v987 = vpop.xlane.xlu0 %986
        %v988 = vmul.f32 %v987, %v683
        %v989 = vmul.f32 %v984, %v984
        %v990 = vsub.f32 %v988, %v989
        %v991 = vsub.f32 %v918, %v984
        %v992 = vadd.f32 %v990, 1e-05
        %v993 = vrsqrt.pop %v992
        %v994 = vmul.f32 %v991, %v993
        %v995 = vmul.f32 %v994, %v785
        %v996 = vadd.f32 %v995, %v790
        %v997 = vtanh.pop %v996
        %v998 = vmul.f32 %v960, %v997
        %v999 = vld [vmem:[#allocation3] sm:$0xff]
        %v1000 = vmul.f32 %v939, %v999
        %v1001 = vadd.f32 %v998, %v1000
        %1002 = vadd.xlane.f32.xlu0 %v1001
        %v1003 = vpop.xlane.xlu0 %1002
        %v1004 = vmul.f32 %v1003, %v683
        %v1005 = vmul.f32 %v1001, %v1001
        %1006 = vadd.xlane.f32.xlu0 %v1005
        %v1007 = vpop.xlane.xlu0 %1006
        %v1008 = vmul.f32 %v1007, %v683
        %v1009 = vmul.f32 %v1004, %v1004
        %v1010 = vsub.f32 %v1008, %v1009
        %v1011 = vsub.f32 %v1001, %v1004
        %v1012 = vadd.f32 %v1010, 1e-05
        %v1013 = vrsqrt.pop %v1012
        %v1014 = vmul.f32 %v1011, %v1013
        %v1015 = vmul.f32 %v1014, %v813
        %v1016 = vadd.f32 %v1015, %v818
        %v1017 = vtanh.pop %v1016
        %v1018 = vmul.f32 %v981, %v1017
        %v1019 = vpack.c.bf16 %v1018, %v1018
        %1020 = vst [vmem:[#allocation2] sm:$0xf] %v1019
        %1021 = vst [vmem:[#allocation3] sm:$0xff] %v1016
        %s1022 = scalar_lea.vmem %s375, 8 [#allocation12]
        %1023 = vst [vmem:[%s1022] sm:$0xff] %v1018
        %s1024 = scalar_lea.vmem %s382, 8 [#allocation13]
        %1025 = vst [vmem:[%s1024] sm:$0xff] %v1016
        %s1026 = scalar_lea.vmem %s335, 64 [#allocation4]
        %v1027 = vld [vmem:[%s1026] sm:$0xff]
        %v1028 = vld [vmem:[%s1026 + $0x8] sm:$0xff]
        %v1029 = vld [vmem:[%s1026 + $0x10] sm:$0xff]
        %v1030 = vld [vmem:[%s1026 + $0x18] sm:$0xff]
        %v1031 = vld [vmem:[#allocation2] sm:$0xf]
        %1032 = vmatprep.subr.bf16.mxu0 %v532
        %1033 = vmatpush1.bf16.msra.mxu0 %v531
        %1034 = vmatprep.subr.bf16.mxu0 %v536
        %1035 = vmatpush1.bf16.msra.mxu0 %v535
        %1036 = vmatprep.subr.bf16.mxu0 %v540
        %1037 = vmatpush1.bf16.msra.mxu0 %v539
        %1038 = vmatprep.subr.bf16.mxu0 %v544
        %1039 = vmatpush1.bf16.msra.mxu0 %v543
        %1040 = vmatprep.subr.bf16.mxu0 %v548
        %1041 = vmatpush1.bf16.msra.mxu0 %v547
        %1042 = vmatprep.subr.bf16.mxu0 %v552
        %1043 = vmatpush1.bf16.msra.mxu0 %v551
        %1044 = vmatprep.subr.bf16.mxu0 %v556
        %1045 = vmatpush1.bf16.msra.mxu0 %v555
        %1046 = vmatprep.subr.bf16.mxu0 %v560
        %1047 = vmatpush1.bf16.msra.mxu0 %v559
        %1048 = vmatprep.subr.bf16.mxu0 0
        %1049 = vmatpush1.bf16.msra.mxu0 0
        %1050 = vmatprep.subr.bf16.mxu0 0
        %1051 = vmatpush1.bf16.msra.mxu0 0
        %1052 = vmatprep.subr.bf16.mxu0 0
        %1053 = vmatpush1.bf16.msra.mxu0 0
        %1054 = vmatprep.subr.bf16.mxu0 0
        %1055 = vmatpush1.bf16.msra.mxu0 0
        %1056 = vmatprep.subr.bf16.mxu0 0
        %1057 = vmatpush1.bf16.msra.mxu0 0
        %1058 = vmatprep.subr.bf16.mxu0 0
        %1059 = vmatpush1.bf16.msra.mxu0 0
        %1060 = vmatprep.subr.bf16.mxu0 0
        %1061 = vmatpush1.bf16.msra.mxu0 0
        %1062 = vmatprep.subr.bf16.mxu0 0
        %1063 = vmatpush1.bf16.msra.mxu0 0
        %1064 = vmatprep.mubr.bf16.mxu0 0
        %1065 = vmatmul.mubr.bf16.gmra.mrb[0].mxu0 %v1031
        %v1066 = vpop.f32.mrb[0].mxu0
        %v1067 = vadd.f32 0.0, %v1066
        %v1068 = vpop.f32.mrb[0].mxu0
        %v1069 = vadd.f32 0.0, %v1068
        %v1070 = vpop.f32.mrb[0].mxu0
        %v1071 = vpop.f32.mrb[0].mxu0
        %1072 = vdwg.mxu0
        %1073 = vmatprep.subr.bf16.mxu0 %v534
        %1074 = vmatpush1.bf16.msra.mxu0 %v533
        %1075 = vmatprep.subr.bf16.mxu0 %v538
        %1076 = vmatpush1.bf16.msra.mxu0 %v537
        %1077 = vmatprep.subr.bf16.mxu0 %v542
        %1078 = vmatpush1.bf16.msra.mxu0 %v541
        %1079 = vmatprep.subr.bf16.mxu0 %v546
        %1080 = vmatpush1.bf16.msra.mxu0 %v545
        %1081 = vmatprep.subr.bf16.mxu0 %v550
        %1082 = vmatpush1.bf16.msra.mxu0 %v549
        %1083 = vmatprep.subr.bf16.mxu0 %v554
        %1084 = vmatpush1.bf16.msra.mxu0 %v553
        %1085 = vmatprep.subr.bf16.mxu0 %v558
        %1086 = vmatpush1.bf16.msra.mxu0 %v557
        %1087 = vmatprep.subr.bf16.mxu0 %v562
        %1088 = vmatpush1.bf16.msra.mxu0 %v561
        %1089 = vmatprep.subr.bf16.mxu0 0
        %1090 = vmatpush1.bf16.msra.mxu0 0
        %1091 = vmatprep.subr.bf16.mxu0 0
        %1092 = vmatpush1.bf16.msra.mxu0 0
        %1093 = vmatprep.subr.bf16.mxu0 0
        %1094 = vmatpush1.bf16.msra.mxu0 0
        %1095 = vmatprep.subr.bf16.mxu0 0
        %1096 = vmatpush1.bf16.msra.mxu0 0
        %1097 = vmatprep.subr.bf16.mxu0 0
        %1098 = vmatpush1.bf16.msra.mxu0 0
        %1099 = vmatprep.subr.bf16.mxu0 0
        %1100 = vmatpush1.bf16.msra.mxu0 0
        %1101 = vmatprep.subr.bf16.mxu0 0
        %1102 = vmatpush1.bf16.msra.mxu0 0
        %1103 = vmatprep.subr.bf16.mxu0 0
        %1104 = vmatpush1.bf16.msra.mxu0 0
        %1105 = vmatprep.mubr.bf16.mxu0 0
        %1106 = vmatmul.mubr.bf16.gmra.mrb[0].mxu0 %v1031
        %v1107 = vpop.f32.mrb[0].mxu0
        %v1108 = vadd.f32 0.0, %v1107
        %v1109 = vpop.f32.mrb[0].mxu0
        %v1110 = vadd.f32 0.0, %v1109
        %v1111 = vpop.f32.mrb[0].mxu0
        %v1112 = vpop.f32.mrb[0].mxu0
        %1113 = vdwg.mxu0
        %v1114 = vadd.f32 %v1027, %v1067
        %v1115 = vadd.f32 %v1028, %v1069
        %v1116 = vadd.f32 %v1029, %v1108
        %v1117 = vadd.f32 %v1030, %v1110
        %1118 = vadd.xlane.f32.xlu0 %v1114
        %v1119 = vpop.xlane.xlu0 %1118
        %v1120 = vmul.f32 %v1119, %v683
        %v1121 = vmul.f32 %v1114, %v1114
        %1122 = vadd.xlane.f32.xlu0 %v1121
        %v1123 = vpop.xlane.xlu0 %1122
        %v1124 = vmul.f32 %v1123, %v683
        %v1125 = vmul.f32 %v1120, %v1120
        %v1126 = vsub.f32 %v1124, %v1125
        %v1127 = vsub.f32 %v1114, %v1120
        %v1128 = vadd.f32 %v1126, 1e-05
        %v1129 = vrsqrt.pop %v1128
        %v1130 = vmul.f32 %v1127, %v1129
        %v1131 = vmul.f32 %v1130, %v698
        %v1132 = vadd.f32 %v1131, %v703
        %v1133 = vxor.u32 %v1132, 2147483648
        %v1134 = vmul.f32 %v1133, 1.442695
        %v1135 = vpow.pop %v1134
        %v1136 = vadd.f32 %v1135, 1.0
        %v1137 = vrcp.pop %v1136
        %v1138 = vmul.f32 1.0, %v1137
        %1139 = vadd.xlane.f32.xlu0 %v1115
        %v1140 = vpop.xlane.xlu0 %1139
        %v1141 = vmul.f32 %v1140, %v683
        %v1142 = vmul.f32 %v1115, %v1115
        %1143 = vadd.xlane.f32.xlu0 %v1142
        %v1144 = vpop.xlane.xlu0 %1143
        %v1145 = vmul.f32 %v1144, %v683
        %v1146 = vmul.f32 %v1141, %v1141
        %v1147 = vsub.f32 %v1145, %v1146
        %v1148 = vsub.f32 %v1115, %v1141
        %v1149 = vadd.f32 %v1147, 1e-05
        %v1150 = vrsqrt.pop %v1149
        %v1151 = vmul.f32 %v1148, %v1150
        %v1152 = vmul.f32 %v1151, %v727
        %v1153 = vadd.f32 %v1152, %v732
        %v1154 = vxor.u32 %v1153, 2147483648
        %v1155 = vmul.f32 %v1154, 1.442695
        %v1156 = vpow.pop %v1155
        %v1157 = vadd.f32 %v1156, 1.0
        %v1158 = vrcp.pop %v1157
        %v1159 = vmul.f32 1.0, %v1158
        %1160 = vadd.xlane.f32.xlu0 %v1116
        %v1161 = vpop.xlane.xlu0 %1160
        %v1162 = vmul.f32 %v1161, %v683
        %v1163 = vmul.f32 %v1116, %v1116
        %1164 = vadd.xlane.f32.xlu0 %v1163
        %v1165 = vpop.xlane.xlu0 %1164
        %v1166 = vmul.f32 %v1165, %v683
        %v1167 = vmul.f32 %v1162, %v1162
        %v1168 = vsub.f32 %v1166, %v1167
        %v1169 = vsub.f32 %v1116, %v1162
        %v1170 = vadd.f32 %v1168, 1e-05
        %v1171 = vrsqrt.pop %v1170
        %v1172 = vmul.f32 %v1169, %v1171
        %v1173 = vmul.f32 %v1172, %v756
        %v1174 = vadd.f32 %v1173, %v761
        %v1175 = vxor.u32 %v1174, 2147483648
        %v1176 = vmul.f32 %v1175, 1.442695
        %v1177 = vpow.pop %v1176
        %v1178 = vadd.f32 %v1177, 1.0
        %v1179 = vrcp.pop %v1178
        %v1180 = vmul.f32 1.0, %v1179
        %1181 = vadd.xlane.f32.xlu0 %v1117
        %v1182 = vpop.xlane.xlu0 %1181
        %v1183 = vmul.f32 %v1182, %v683
        %v1184 = vmul.f32 %v1117, %v1117
        %1185 = vadd.xlane.f32.xlu0 %v1184
        %v1186 = vpop.xlane.xlu0 %1185
        %v1187 = vmul.f32 %v1186, %v683
        %v1188 = vmul.f32 %v1183, %v1183
        %v1189 = vsub.f32 %v1187, %v1188
        %v1190 = vsub.f32 %v1117, %v1183
        %v1191 = vadd.f32 %v1189, 1e-05
        %v1192 = vrsqrt.pop %v1191
        %v1193 = vmul.f32 %v1190, %v1192
        %v1194 = vmul.f32 %v1193, %v785
        %v1195 = vadd.f32 %v1194, %v790
        %v1196 = vtanh.pop %v1195
        %v1197 = vmul.f32 %v1159, %v1196
        %v1198 = vld [vmem:[#allocation3] sm:$0xff]
        %v1199 = vmul.f32 %v1138, %v1198
        %v1200 = vadd.f32 %v1197, %v1199
        %1201 = vadd.xlane.f32.xlu0 %v1200
        %v1202 = vpop.xlane.xlu0 %1201
        %v1203 = vmul.f32 %v1202, %v683
        %v1204 = vmul.f32 %v1200, %v1200
        %1205 = vadd.xlane.f32.xlu0 %v1204
        %v1206 = vpop.xlane.xlu0 %1205
        %v1207 = vmul.f32 %v1206, %v683
        %v1208 = vmul.f32 %v1203, %v1203
        %v1209 = vsub.f32 %v1207, %v1208
        %v1210 = vsub.f32 %v1200, %v1203
        %v1211 = vadd.f32 %v1209, 1e-05
        %v1212 = vrsqrt.pop %v1211
        %v1213 = vmul.f32 %v1210, %v1212
        %v1214 = vmul.f32 %v1213, %v813
        %v1215 = vadd.f32 %v1214, %v818
        %v1216 = vtanh.pop %v1215
        %v1217 = vmul.f32 %v1180, %v1216
        %v1218 = vpack.c.bf16 %v1217, %v1217
        %1219 = vst [vmem:[#allocation2] sm:$0xf] %v1218
        %1220 = vst [vmem:[#allocation3] sm:$0xff] %v1215
        %s1221 = scalar_lea.vmem %s375, 16 [#allocation12]
        %1222 = vst [vmem:[%s1221] sm:$0xff] %v1217
        %s1223 = scalar_lea.vmem %s382, 16 [#allocation13]
        %1224 = vst [vmem:[%s1223] sm:$0xff] %v1215
        %s1225 = scalar_lea.vmem %s335, 96 [#allocation4]
        %v1226 = vld [vmem:[%s1225] sm:$0xff]
        %v1227 = vld [vmem:[%s1225 + $0x8] sm:$0xff]
        %v1228 = vld [vmem:[%s1225 + $0x10] sm:$0xff]
        %v1229 = vld [vmem:[%s1225 + $0x18] sm:$0xff]
        %v1230 = vld [vmem:[#allocation2] sm:$0xf]
        %1231 = vmatprep.subr.bf16.mxu0 %v532
        %1232 = vmatpush1.bf16.msra.mxu0 %v531
        %1233 = vmatprep.subr.bf16.mxu0 %v536
        %1234 = vmatpush1.bf16.msra.mxu0 %v535
        %1235 = vmatprep.subr.bf16.mxu0 %v540
        %1236 = vmatpush1.bf16.msra.mxu0 %v539
        %1237 = vmatprep.subr.bf16.mxu0 %v544
        %1238 = vmatpush1.bf16.msra.mxu0 %v543
        %1239 = vmatprep.subr.bf16.mxu0 %v548
        %1240 = vmatpush1.bf16.msra.mxu0 %v547
        %1241 = vmatprep.subr.bf16.mxu0 %v552
        %1242 = vmatpush1.bf16.msra.mxu0 %v551
        %1243 = vmatprep.subr.bf16.mxu0 %v556
        %1244 = vmatpush1.bf16.msra.mxu0 %v555
        %1245 = vmatprep.subr.bf16.mxu0 %v560
        %1246 = vmatpush1.bf16.msra.mxu0 %v559
        %1247 = vmatprep.subr.bf16.mxu0 0
        %1248 = vmatpush1.bf16.msra.mxu0 0
        %1249 = vmatprep.subr.bf16.mxu0 0
        %1250 = vmatpush1.bf16.msra.mxu0 0
        %1251 = vmatprep.subr.bf16.mxu0 0
        %1252 = vmatpush1.bf16.msra.mxu0 0
        %1253 = vmatprep.subr.bf16.mxu0 0
        %1254 = vmatpush1.bf16.msra.mxu0 0
        %1255 = vmatprep.subr.bf16.mxu0 0
        %1256 = vmatpush1.bf16.msra.mxu0 0
        %1257 = vmatprep.subr.bf16.mxu0 0
        %1258 = vmatpush1.bf16.msra.mxu0 0
        %1259 = vmatprep.subr.bf16.mxu0 0
        %1260 = vmatpush1.bf16.msra.mxu0 0
        %1261 = vmatprep.subr.bf16.mxu0 0
        %1262 = vmatpush1.bf16.msra.mxu0 0
        %1263 = vmatprep.mubr.bf16.mxu0 0
        %1264 = vmatmul.mubr.bf16.gmra.mrb[0].mxu0 %v1230
        %v1265 = vpop.f32.mrb[0].mxu0
        %v1266 = vadd.f32 0.0, %v1265
        %v1267 = vpop.f32.mrb[0].mxu0
        %v1268 = vadd.f32 0.0, %v1267
        %v1269 = vpop.f32.mrb[0].mxu0
        %v1270 = vpop.f32.mrb[0].mxu0
        %1271 = vdwg.mxu0
        %1272 = vmatprep.subr.bf16.mxu0 %v534
        %1273 = vmatpush1.bf16.msra.mxu0 %v533
        %1274 = vmatprep.subr.bf16.mxu0 %v538
        %1275 = vmatpush1.bf16.msra.mxu0 %v537
        %1276 = vmatprep.subr.bf16.mxu0 %v542
        %1277 = vmatpush1.bf16.msra.mxu0 %v541
        %1278 = vmatprep.subr.bf16.mxu0 %v546
        %1279 = vmatpush1.bf16.msra.mxu0 %v545
        %1280 = vmatprep.subr.bf16.mxu0 %v550
        %1281 = vmatpush1.bf16.msra.mxu0 %v549
        %1282 = vmatprep.subr.bf16.mxu0 %v554
        %1283 = vmatpush1.bf16.msra.mxu0 %v553
        %1284 = vmatprep.subr.bf16.mxu0 %v558
        %1285 = vmatpush1.bf16.msra.mxu0 %v557
        %1286 = vmatprep.subr.bf16.mxu0 %v562
        %1287 = vmatpush1.bf16.msra.mxu0 %v561
        %1288 = vmatprep.subr.bf16.mxu0 0
        %1289 = vmatpush1.bf16.msra.mxu0 0
        %1290 = vmatprep.subr.bf16.mxu0 0
        %1291 = vmatpush1.bf16.msra.mxu0 0
        %1292 = vmatprep.subr.bf16.mxu0 0
        %1293 = vmatpush1.bf16.msra.mxu0 0
        %1294 = vmatprep.subr.bf16.mxu0 0
        %1295 = vmatpush1.bf16.msra.mxu0 0
        %1296 = vmatprep.subr.bf16.mxu0 0
        %1297 = vmatpush1.bf16.msra.mxu0 0
        %1298 = vmatprep.subr.bf16.mxu0 0
        %1299 = vmatpush1.bf16.msra.mxu0 0
        %1300 = vmatprep.subr.bf16.mxu0 0
        %1301 = vmatpush1.bf16.msra.mxu0 0
        %1302 = vmatprep.subr.bf16.mxu0 0
        %1303 = vmatpush1.bf16.msra.mxu0 0
        %1304 = vmatprep.mubr.bf16.mxu0 0
        %1305 = vmatmul.mubr.bf16.gmra.mrb[0].mxu0 %v1230
        %v1306 = vpop.f32.mrb[0].mxu0
        %v1307 = vadd.f32 0.0, %v1306
        %v1308 = vpop.f32.mrb[0].mxu0
        %v1309 = vadd.f32 0.0, %v1308
        %v1310 = vpop.f32.mrb[0].mxu0
        %v1311 = vpop.f32.mrb[0].mxu0
        %1312 = vdwg.mxu0
        %v1313 = vadd.f32 %v1226, %v1266
        %v1314 = vadd.f32 %v1227, %v1268
        %v1315 = vadd.f32 %v1228, %v1307
        %v1316 = vadd.f32 %v1229, %v1309
        %1317 = vadd.xlane.f32.xlu0 %v1313
        %v1318 = vpop.xlane.xlu0 %1317
        %v1319 = vmul.f32 %v1318, %v683
        %v1320 = vmul.f32 %v1313, %v1313
        %1321 = vadd.xlane.f32.xlu0 %v1320
        %v1322 = vpop.xlane.xlu0 %1321
        %v1323 = vmul.f32 %v1322, %v683
        %v1324 = vmul.f32 %v1319, %v1319
        %v1325 = vsub.f32 %v1323, %v1324
        %v1326 = vsub.f32 %v1313, %v1319
        %v1327 = vadd.f32 %v1325, 1e-05
        %v1328 = vrsqrt.pop %v1327
        %v1329 = vmul.f32 %v1326, %v1328
        %v1330 = vmul.f32 %v1329, %v698
        %v1331 = vadd.f32 %v1330, %v703
        %v1332 = vxor.u32 %v1331, 2147483648
        %v1333 = vmul.f32 %v1332, 1.442695
        %v1334 = vpow.pop %v1333
        %v1335 = vadd.f32 %v1334, 1.0
        %v1336 = vrcp.pop %v1335
        %v1337 = vmul.f32 1.0, %v1336
        %1338 = vadd.xlane.f32.xlu0 %v1314
        %v1339 = vpop.xlane.xlu0 %1338
        %v1340 = vmul.f32 %v1339, %v683
        %v1341 = vmul.f32 %v1314, %v1314
        %1342 = vadd.xlane.f32.xlu0 %v1341
        %v1343 = vpop.xlane.xlu0 %1342
        %v1344 = vmul.f32 %v1343, %v683
        %v1345 = vmul.f32 %v1340, %v1340
        %v1346 = vsub.f32 %v1344, %v1345
        %v1347 = vsub.f32 %v1314, %v1340
        %v1348 = vadd.f32 %v1346, 1e-05
        %v1349 = vrsqrt.pop %v1348
        %v1350 = vmul.f32 %v1347, %v1349
        %v1351 = vmul.f32 %v1350, %v727
        %v1352 = vadd.f32 %v1351, %v732
        %v1353 = vxor.u32 %v1352, 2147483648
        %v1354 = vmul.f32 %v1353, 1.442695
        %v1355 = vpow.pop %v1354
        %v1356 = vadd.f32 %v1355, 1.0
        %v1357 = vrcp.pop %v1356
        %v1358 = vmul.f32 1.0, %v1357
        %1359 = vadd.xlane.f32.xlu0 %v1315
        %v1360 = vpop.xlane.xlu0 %1359
        %v1361 = vmul.f32 %v1360, %v683
        %v1362 = vmul.f32 %v1315, %v1315
        %1363 = vadd.xlane.f32.xlu0 %v1362
        %v1364 = vpop.xlane.xlu0 %1363
        %v1365 = vmul.f32 %v1364, %v683
        %v1366 = vmul.f32 %v1361, %v1361
        %v1367 = vsub.f32 %v1365, %v1366
        %v1368 = vsub.f32 %v1315, %v1361
        %v1369 = vadd.f32 %v1367, 1e-05
        %v1370 = vrsqrt.pop %v1369
        %v1371 = vmul.f32 %v1368, %v1370
        %v1372 = vmul.f32 %v1371, %v756
        %v1373 = vadd.f32 %v1372, %v761
        %v1374 = vxor.u32 %v1373, 2147483648
        %v1375 = vmul.f32 %v1374, 1.442695
        %v1376 = vpow.pop %v1375
        %v1377 = vadd.f32 %v1376, 1.0
        %v1378 = vrcp.pop %v1377
        %v1379 = vmul.f32 1.0, %v1378
        %1380 = vadd.xlane.f32.xlu0 %v1316
        %v1381 = vpop.xlane.xlu0 %1380
        %v1382 = vmul.f32 %v1381, %v683
        %v1383 = vmul.f32 %v1316, %v1316
        %1384 = vadd.xlane.f32.xlu0 %v1383
        %v1385 = vpop.xlane.xlu0 %1384
        %v1386 = vmul.f32 %v1385, %v683
        %v1387 = vmul.f32 %v1382, %v1382
        %v1388 = vsub.f32 %v1386, %v1387
        %v1389 = vsub.f32 %v1316, %v1382
        %v1390 = vadd.f32 %v1388, 1e-05
        %v1391 = vrsqrt.pop %v1390
        %v1392 = vmul.f32 %v1389, %v1391
        %v1393 = vmul.f32 %v1392, %v785
        %v1394 = vadd.f32 %v1393, %v790
        %v1395 = vtanh.pop %v1394
        %v1396 = vmul.f32 %v1358, %v1395
        %v1397 = vld [vmem:[#allocation3] sm:$0xff]
        %v1398 = vmul.f32 %v1337, %v1397
        %v1399 = vadd.f32 %v1396, %v1398
        %1400 = vadd.xlane.f32.xlu0 %v1399
        %v1401 = vpop.xlane.xlu0 %1400
        %v1402 = vmul.f32 %v1401, %v683
        %v1403 = vmul.f32 %v1399, %v1399
        %1404 = vadd.xlane.f32.xlu0 %v1403
        %v1405 = vpop.xlane.xlu0 %1404
        %v1406 = vmul.f32 %v1405, %v683
        %v1407 = vmul.f32 %v1402, %v1402
        %v1408 = vsub.f32 %v1406, %v1407
        %v1409 = vsub.f32 %v1399, %v1402
        %v1410 = vadd.f32 %v1408, 1e-05
        %v1411 = vrsqrt.pop %v1410
        %v1412 = vmul.f32 %v1409, %v1411
        %v1413 = vmul.f32 %v1412, %v813
        %v1414 = vadd.f32 %v1413, %v818
        %v1415 = vtanh.pop %v1414
        %v1416 = vmul.f32 %v1379, %v1415
        %v1417 = vpack.c.bf16 %v1416, %v1416
        %1418 = vst [vmem:[#allocation2] sm:$0xf] %v1417
        %1419 = vst [vmem:[#allocation3] sm:$0xff] %v1414
        %s1420 = scalar_lea.vmem %s375, 24 [#allocation12]
        %1421 = vst [vmem:[%s1420] sm:$0xff] %v1416
        %s1422 = scalar_lea.vmem %s382, 24 [#allocation13]
        %1423 = vst [vmem:[%s1422] sm:$0xff] %v1414
        %s1424 = scalar_lea.vmem %s335, 128 [#allocation4]
        %v1425 = vld [vmem:[%s1424] sm:$0xff]
        %v1426 = vld [vmem:[%s1424 + $0x8] sm:$0xff]
        %v1427 = vld [vmem:[%s1424 + $0x10] sm:$0xff]
        %v1428 = vld [vmem:[%s1424 + $0x18] sm:$0xff]
        %v1429 = vld [vmem:[#allocation2] sm:$0xf]
        %1430 = vmatprep.subr.bf16.mxu0 %v532
        %1431 = vmatpush1.bf16.msra.mxu0 %v531
        %1432 = vmatprep.subr.bf16.mxu0 %v536
        %1433 = vmatpush1.bf16.msra.mxu0 %v535
        %1434 = vmatprep.subr.bf16.mxu0 %v540
        %1435 = vmatpush1.bf16.msra.mxu0 %v539
        %1436 = vmatprep.subr.bf16.mxu0 %v544
        %1437 = vmatpush1.bf16.msra.mxu0 %v543
        %1438 = vmatprep.subr.bf16.mxu0 %v548
        %1439 = vmatpush1.bf16.msra.mxu0 %v547
        %1440 = vmatprep.subr.bf16.mxu0 %v552
        %1441 = vmatpush1.bf16.msra.mxu0 %v551
        %1442 = vmatprep.subr.bf16.mxu0 %v556
        %1443 = vmatpush1.bf16.msra.mxu0 %v555
        %1444 = vmatprep.subr.bf16.mxu0 %v560
        %1445 = vmatpush1.bf16.msra.mxu0 %v559
        %1446 = vmatprep.subr.bf16.mxu0 0
        %1447 = vmatpush1.bf16.msra.mxu0 0
        %1448 = vmatprep.subr.bf16.mxu0 0
        %1449 = vmatpush1.bf16.msra.mxu0 0
        %1450 = vmatprep.subr.bf16.mxu0 0
        %1451 = vmatpush1.bf16.msra.mxu0 0
        %1452 = vmatprep.subr.bf16.mxu0 0
        %1453 = vmatpush1.bf16.msra.mxu0 0
        %1454 = vmatprep.subr.bf16.mxu0 0
        %1455 = vmatpush1.bf16.msra.mxu0 0
        %1456 = vmatprep.subr.bf16.mxu0 0
        %1457 = vmatpush1.bf16.msra.mxu0 0
        %1458 = vmatprep.subr.bf16.mxu0 0
        %1459 = vmatpush1.bf16.msra.mxu0 0
        %1460 = vmatprep.subr.bf16.mxu0 0
        %1461 = vmatpush1.bf16.msra.mxu0 0
        %1462 = vmatprep.mubr.bf16.mxu0 0
        %1463 = vmatmul.mubr.bf16.gmra.mrb[0].mxu0 %v1429
        %v1464 = vpop.f32.mrb[0].mxu0
        %v1465 = vadd.f32 0.0, %v1464
        %v1466 = vpop.f32.mrb[0].mxu0
        %v1467 = vadd.f32 0.0, %v1466
        %v1468 = vpop.f32.mrb[0].mxu0
        %v1469 = vpop.f32.mrb[0].mxu0
        %1470 = vdwg.mxu0
        %1471 = vmatprep.subr.bf16.mxu0 %v534
        %1472 = vmatpush1.bf16.msra.mxu0 %v533
        %1473 = vmatprep.subr.bf16.mxu0 %v538
        %1474 = vmatpush1.bf16.msra.mxu0 %v537
        %1475 = vmatprep.subr.bf16.mxu0 %v542
        %1476 = vmatpush1.bf16.msra.mxu0 %v541
        %1477 = vmatprep.subr.bf16.mxu0 %v546
        %1478 = vmatpush1.bf16.msra.mxu0 %v545
        %1479 = vmatprep.subr.bf16.mxu0 %v550
        %1480 = vmatpush1.bf16.msra.mxu0 %v549
        %1481 = vmatprep.subr.bf16.mxu0 %v554
        %1482 = vmatpush1.bf16.msra.mxu0 %v553
        %1483 = vmatprep.subr.bf16.mxu0 %v558
        %1484 = vmatpush1.bf16.msra.mxu0 %v557
        %1485 = vmatprep.subr.bf16.mxu0 %v562
        %1486 = vmatpush1.bf16.msra.mxu0 %v561
        %1487 = vmatprep.subr.bf16.mxu0 0
        %1488 = vmatpush1.bf16.msra.mxu0 0
        %1489 = vmatprep.subr.bf16.mxu0 0
        %1490 = vmatpush1.bf16.msra.mxu0 0
        %1491 = vmatprep.subr.bf16.mxu0 0
        %1492 = vmatpush1.bf16.msra.mxu0 0
        %1493 = vmatprep.subr.bf16.mxu0 0
        %1494 = vmatpush1.bf16.msra.mxu0 0
        %1495 = vmatprep.subr.bf16.mxu0 0
        %1496 = vmatpush1.bf16.msra.mxu0 0
        %1497 = vmatprep.subr.bf16.mxu0 0
        %1498 = vmatpush1.bf16.msra.mxu0 0
        %1499 = vmatprep.subr.bf16.mxu0 0
        %1500 = vmatpush1.bf16.msra.mxu0 0
        %1501 = vmatprep.subr.bf16.mxu0 0
        %1502 = vmatpush1.bf16.msra.mxu0 0
        %1503 = vmatprep.mubr.bf16.mxu0 0
        %1504 = vmatmul.mubr.bf16.gmra.mrb[0].mxu0 %v1429
        %v1505 = vpop.f32.mrb[0].mxu0
        %v1506 = vadd.f32 0.0, %v1505
        %v1507 = vpop.f32.mrb[0].mxu0
        %v1508 = vadd.f32 0.0, %v1507
        %v1509 = vpop.f32.mrb[0].mxu0
        %v1510 = vpop.f32.mrb[0].mxu0
        %1511 = vdwg.mxu0
        %v1512 = vadd.f32 %v1425, %v1465
        %v1513 = vadd.f32 %v1426, %v1467
        %v1514 = vadd.f32 %v1427, %v1506
        %v1515 = vadd.f32 %v1428, %v1508
        %1516 = vadd.xlane.f32.xlu0 %v1512
        %v1517 = vpop.xlane.xlu0 %1516
        %v1518 = vmul.f32 %v1517, %v683
        %v1519 = vmul.f32 %v1512, %v1512
        %1520 = vadd.xlane.f32.xlu0 %v1519
        %v1521 = vpop.xlane.xlu0 %1520
        %v1522 = vmul.f32 %v1521, %v683
        %v1523 = vmul.f32 %v1518, %v1518
        %v1524 = vsub.f32 %v1522, %v1523
        %v1525 = vsub.f32 %v1512, %v1518
        %v1526 = vadd.f32 %v1524, 1e-05
        %v1527 = vrsqrt.pop %v1526
        %v1528 = vmul.f32 %v1525, %v1527
        %v1529 = vmul.f32 %v1528, %v698
        %v1530 = vadd.f32 %v1529, %v703
        %v1531 = vxor.u32 %v1530, 2147483648
        %v1532 = vmul.f32 %v1531, 1.442695
        %v1533 = vpow.pop %v1532
        %v1534 = vadd.f32 %v1533, 1.0
        %v1535 = vrcp.pop %v1534
        %v1536 = vmul.f32 1.0, %v1535
        %1537 = vadd.xlane.f32.xlu0 %v1513
        %v1538 = vpop.xlane.xlu0 %1537
        %v1539 = vmul.f32 %v1538, %v683
        %v1540 = vmul.f32 %v1513, %v1513
        %1541 = vadd.xlane.f32.xlu0 %v1540
        %v1542 = vpop.xlane.xlu0 %1541
        %v1543 = vmul.f32 %v1542, %v683
        %v1544 = vmul.f32 %v1539, %v1539
        %v1545 = vsub.f32 %v1543, %v1544
        %v1546 = vsub.f32 %v1513, %v1539
        %v1547 = vadd.f32 %v1545, 1e-05
        %v1548 = vrsqrt.pop %v1547
        %v1549 = vmul.f32 %v1546, %v1548
        %v1550 = vmul.f32 %v1549, %v727
        %v1551 = vadd.f32 %v1550, %v732
        %v1552 = vxor.u32 %v1551, 2147483648
        %v1553 = vmul.f32 %v1552, 1.442695
        %v1554 = vpow.pop %v1553
        %v1555 = vadd.f32 %v1554, 1.0
        %v1556 = vrcp.pop %v1555
        %v1557 = vmul.f32 1.0, %v1556
        %1558 = vadd.xlane.f32.xlu0 %v1514
        %v1559 = vpop.xlane.xlu0 %1558
        %v1560 = vmul.f32 %v1559, %v683
        %v1561 = vmul.f32 %v1514, %v1514
        %1562 = vadd.xlane.f32.xlu0 %v1561
        %v1563 = vpop.xlane.xlu0 %1562
        %v1564 = vmul.f32 %v1563, %v683
        %v1565 = vmul.f32 %v1560, %v1560
        %v1566 = vsub.f32 %v1564, %v1565
        %v1567 = vsub.f32 %v1514, %v1560
        %v1568 = vadd.f32 %v1566, 1e-05
        %v1569 = vrsqrt.pop %v1568
        %v1570 = vmul.f32 %v1567, %v1569
        %v1571 = vmul.f32 %v1570, %v756
        %v1572 = vadd.f32 %v1571, %v761
        %v1573 = vxor.u32 %v1572, 2147483648
        %v1574 = vmul.f32 %v1573, 1.442695
        %v1575 = vpow.pop %v1574
        %v1576 = vadd.f32 %v1575, 1.0
        %v1577 = vrcp.pop %v1576
        %v1578 = vmul.f32 1.0, %v1577
        %1579 = vadd.xlane.f32.xlu0 %v1515
        %v1580 = vpop.xlane.xlu0 %1579
        %v1581 = vmul.f32 %v1580, %v683
        %v1582 = vmul.f32 %v1515, %v1515
        %1583 = vadd.xlane.f32.xlu0 %v1582
        %v1584 = vpop.xlane.xlu0 %1583
        %v1585 = vmul.f32 %v1584, %v683
        %v1586 = vmul.f32 %v1581, %v1581
        %v1587 = vsub.f32 %v1585, %v1586
        %v1588 = vsub.f32 %v1515, %v1581
        %v1589 = vadd.f32 %v1587, 1e-05
        %v1590 = vrsqrt.pop %v1589
        %v1591 = vmul.f32 %v1588, %v1590
        %v1592 = vmul.f32 %v1591, %v785
        %v1593 = vadd.f32 %v1592, %v790
        %v1594 = vtanh.pop %v1593
        %v1595 = vmul.f32 %v1557, %v1594
        %v1596 = vld [vmem:[#allocation3] sm:$0xff]
        %v1597 = vmul.f32 %v1536, %v1596
        %v1598 = vadd.f32 %v1595, %v1597
        %1599 = vadd.xlane.f32.xlu0 %v1598
        %v1600 = vpop.xlane.xlu0 %1599
        %v1601 = vmul.f32 %v1600, %v683
        %v1602 = vmul.f32 %v1598, %v1598
        %1603 = vadd.xlane.f32.xlu0 %v1602
        %v1604 = vpop.xlane.xlu0 %1603
        %v1605 = vmul.f32 %v1604, %v683
        %v1606 = vmul.f32 %v1601, %v1601
        %v1607 = vsub.f32 %v1605, %v1606
        %v1608 = vsub.f32 %v1598, %v1601
        %v1609 = vadd.f32 %v1607, 1e-05
        %v1610 = vrsqrt.pop %v1609
        %v1611 = vmul.f32 %v1608, %v1610
        %v1612 = vmul.f32 %v1611, %v813
        %v1613 = vadd.f32 %v1612, %v818
        %v1614 = vtanh.pop %v1613
        %v1615 = vmul.f32 %v1578, %v1614
        %v1616 = vpack.c.bf16 %v1615, %v1615
        %1617 = vst [vmem:[#allocation2] sm:$0xf] %v1616
        %1618 = vst [vmem:[#allocation3] sm:$0xff] %v1613
        %s1619 = scalar_lea.vmem %s375, 32 [#allocation12]
        %1620 = vst [vmem:[%s1619] sm:$0xff] %v1615
        %s1621 = scalar_lea.vmem %s382, 32 [#allocation13]
        %1622 = vst [vmem:[%s1621] sm:$0xff] %v1613
        %s1623 = scalar_lea.vmem %s335, 160 [#allocation4]
        %v1624 = vld [vmem:[%s1623] sm:$0xff]
        %v1625 = vld [vmem:[%s1623 + $0x8] sm:$0xff]
        %v1626 = vld [vmem:[%s1623 + $0x10] sm:$0xff]
        %v1627 = vld [vmem:[%s1623 + $0x18] sm:$0xff]
        %v1628 = vld [vmem:[#allocation2] sm:$0xf]
        %1629 = vmatprep.subr.bf16.mxu0 %v532
        %1630 = vmatpush1.bf16.msra.mxu0 %v531
        %1631 = vmatprep.subr.bf16.mxu0 %v536
        %1632 = vmatpush1.bf16.msra.mxu0 %v535
        %1633 = vmatprep.subr.bf16.mxu0 %v540
        %1634 = vmatpush1.bf16.msra.mxu0 %v539
        %1635 = vmatprep.subr.bf16.mxu0 %v544
        %1636 = vmatpush1.bf16.msra.mxu0 %v543
        %1637 = vmatprep.subr.bf16.mxu0 %v548
        %1638 = vmatpush1.bf16.msra.mxu0 %v547
        %1639 = vmatprep.subr.bf16.mxu0 %v552
        %1640 = vmatpush1.bf16.msra.mxu0 %v551
        %1641 = vmatprep.subr.bf16.mxu0 %v556
        %1642 = vmatpush1.bf16.msra.mxu0 %v555
        %1643 = vmatprep.subr.bf16.mxu0 %v560
        %1644 = vmatpush1.bf16.msra.mxu0 %v559
        %1645 = vmatprep.subr.bf16.mxu0 0
        %1646 = vmatpush1.bf16.msra.mxu0 0
        %1647 = vmatprep.subr.bf16.mxu0 0
        %1648 = vmatpush1.bf16.msra.mxu0 0
        %1649 = vmatprep.subr.bf16.mxu0 0
        %1650 = vmatpush1.bf16.msra.mxu0 0
        %1651 = vmatprep.subr.bf16.mxu0 0
        %1652 = vmatpush1.bf16.msra.mxu0 0
        %1653 = vmatprep.subr.bf16.mxu0 0
        %1654 = vmatpush1.bf16.msra.mxu0 0
        %1655 = vmatprep.subr.bf16.mxu0 0
        %1656 = vmatpush1.bf16.msra.mxu0 0
        %1657 = vmatprep.subr.bf16.mxu0 0
        %1658 = vmatpush1.bf16.msra.mxu0 0
        %1659 = vmatprep.subr.bf16.mxu0 0
        %1660 = vmatpush1.bf16.msra.mxu0 0
        %1661 = vmatprep.mubr.bf16.mxu0 0
        %1662 = vmatmul.mubr.bf16.gmra.mrb[0].mxu0 %v1628
        %v1663 = vpop.f32.mrb[0].mxu0
        %v1664 = vadd.f32 0.0, %v1663
        %v1665 = vpop.f32.mrb[0].mxu0
        %v1666 = vadd.f32 0.0, %v1665
        %v1667 = vpop.f32.mrb[0].mxu0
        %v1668 = vpop.f32.mrb[0].mxu0
        %1669 = vdwg.mxu0
        %1670 = vmatprep.subr.bf16.mxu0 %v534
        %1671 = vmatpush1.bf16.msra.mxu0 %v533
        %1672 = vmatprep.subr.bf16.mxu0 %v538
        %1673 = vmatpush1.bf16.msra.mxu0 %v537
        %1674 = vmatprep.subr.bf16.mxu0 %v542
        %1675 = vmatpush1.bf16.msra.mxu0 %v541
        %1676 = vmatprep.subr.bf16.mxu0 %v546
        %1677 = vmatpush1.bf16.msra.mxu0 %v545
        %1678 = vmatprep.subr.bf16.mxu0 %v550
        %1679 = vmatpush1.bf16.msra.mxu0 %v549
        %1680 = vmatprep.subr.bf16.mxu0 %v554
        %1681 = vmatpush1.bf16.msra.mxu0 %v553
        %1682 = vmatprep.subr.bf16.mxu0 %v558
        %1683 = vmatpush1.bf16.msra.mxu0 %v557
        %1684 = vmatprep.subr.bf16.mxu0 %v562
        %1685 = vmatpush1.bf16.msra.mxu0 %v561
        %1686 = vmatprep.subr.bf16.mxu0 0
        %1687 = vmatpush1.bf16.msra.mxu0 0
        %1688 = vmatprep.subr.bf16.mxu0 0
        %1689 = vmatpush1.bf16.msra.mxu0 0
        %1690 = vmatprep.subr.bf16.mxu0 0
        %1691 = vmatpush1.bf16.msra.mxu0 0
        %1692 = vmatprep.subr.bf16.mxu0 0
        %1693 = vmatpush1.bf16.msra.mxu0 0
        %1694 = vmatprep.subr.bf16.mxu0 0
        %1695 = vmatpush1.bf16.msra.mxu0 0
        %1696 = vmatprep.subr.bf16.mxu0 0
        %1697 = vmatpush1.bf16.msra.mxu0 0
        %1698 = vmatprep.subr.bf16.mxu0 0
        %1699 = vmatpush1.bf16.msra.mxu0 0
        %1700 = vmatprep.subr.bf16.mxu0 0
        %1701 = vmatpush1.bf16.msra.mxu0 0
        %1702 = vmatprep.mubr.bf16.mxu0 0
        %1703 = vmatmul.mubr.bf16.gmra.mrb[0].mxu0 %v1628
        %v1704 = vpop.f32.mrb[0].mxu0
        %v1705 = vadd.f32 0.0, %v1704
        %v1706 = vpop.f32.mrb[0].mxu0
        %v1707 = vadd.f32 0.0, %v1706
        %v1708 = vpop.f32.mrb[0].mxu0
        %v1709 = vpop.f32.mrb[0].mxu0
        %1710 = vdwg.mxu0
        %v1711 = vadd.f32 %v1624, %v1664
        %v1712 = vadd.f32 %v1625, %v1666
        %v1713 = vadd.f32 %v1626, %v1705
        %v1714 = vadd.f32 %v1627, %v1707
        %1715 = vadd.xlane.f32.xlu0 %v1711
        %v1716 = vpop.xlane.xlu0 %1715
        %v1717 = vmul.f32 %v1716, %v683
        %v1718 = vmul.f32 %v1711, %v1711
        %1719 = vadd.xlane.f32.xlu0 %v1718
        %v1720 = vpop.xlane.xlu0 %1719
        %v1721 = vmul.f32 %v1720, %v683
        %v1722 = vmul.f32 %v1717, %v1717
        %v1723 = vsub.f32 %v1721, %v1722
        %v1724 = vsub.f32 %v1711, %v1717
        %v1725 = vadd.f32 %v1723, 1e-05
        %v1726 = vrsqrt.pop %v1725
        %v1727 = vmul.f32 %v1724, %v1726
        %v1728 = vmul.f32 %v1727, %v698
        %v1729 = vadd.f32 %v1728, %v703
        %v1730 = vxor.u32 %v1729, 2147483648
        %v1731 = vmul.f32 %v1730, 1.442695
        %v1732 = vpow.pop %v1731
        %v1733 = vadd.f32 %v1732, 1.0
        %v1734 = vrcp.pop %v1733
        %v1735 = vmul.f32 1.0, %v1734
        %1736 = vadd.xlane.f32.xlu0 %v1712
        %v1737 = vpop.xlane.xlu0 %1736
        %v1738 = vmul.f32 %v1737, %v683
        %v1739 = vmul.f32 %v1712, %v1712
        %1740 = vadd.xlane.f32.xlu0 %v1739
        %v1741 = vpop.xlane.xlu0 %1740
        %v1742 = vmul.f32 %v1741, %v683
        %v1743 = vmul.f32 %v1738, %v1738
        %v1744 = vsub.f32 %v1742, %v1743
        %v1745 = vsub.f32 %v1712, %v1738
        %v1746 = vadd.f32 %v1744, 1e-05
        %v1747 = vrsqrt.pop %v1746
        %v1748 = vmul.f32 %v1745, %v1747
        %v1749 = vmul.f32 %v1748, %v727
        %v1750 = vadd.f32 %v1749, %v732
        %v1751 = vxor.u32 %v1750, 2147483648
        %v1752 = vmul.f32 %v1751, 1.442695
        %v1753 = vpow.pop %v1752
        %v1754 = vadd.f32 %v1753, 1.0
        %v1755 = vrcp.pop %v1754
        %v1756 = vmul.f32 1.0, %v1755
        %1757 = vadd.xlane.f32.xlu0 %v1713
        %v1758 = vpop.xlane.xlu0 %1757
        %v1759 = vmul.f32 %v1758, %v683
        %v1760 = vmul.f32 %v1713, %v1713
        %1761 = vadd.xlane.f32.xlu0 %v1760
        %v1762 = vpop.xlane.xlu0 %1761
        %v1763 = vmul.f32 %v1762, %v683
        %v1764 = vmul.f32 %v1759, %v1759
        %v1765 = vsub.f32 %v1763, %v1764
        %v1766 = vsub.f32 %v1713, %v1759
        %v1767 = vadd.f32 %v1765, 1e-05
        %v1768 = vrsqrt.pop %v1767
        %v1769 = vmul.f32 %v1766, %v1768
        %v1770 = vmul.f32 %v1769, %v756
        %v1771 = vadd.f32 %v1770, %v761
        %v1772 = vxor.u32 %v1771, 2147483648
        %v1773 = vmul.f32 %v1772, 1.442695
        %v1774 = vpow.pop %v1773
        %v1775 = vadd.f32 %v1774, 1.0
        %v1776 = vrcp.pop %v1775
        %v1777 = vmul.f32 1.0, %v1776
        %1778 = vadd.xlane.f32.xlu0 %v1714
        %v1779 = vpop.xlane.xlu0 %1778
        %v1780 = vmul.f32 %v1779, %v683
        %v1781 = vmul.f32 %v1714, %v1714
        %1782 = vadd.xlane.f32.xlu0 %v1781
        %v1783 = vpop.xlane.xlu0 %1782
        %v1784 = vmul.f32 %v1783, %v683
        %v1785 = vmul.f32 %v1780, %v1780
        %v1786 = vsub.f32 %v1784, %v1785
        %v1787 = vsub.f32 %v1714, %v1780
        %v1788 = vadd.f32 %v1786, 1e-05
        %v1789 = vrsqrt.pop %v1788
        %v1790 = vmul.f32 %v1787, %v1789
        %v1791 = vmul.f32 %v1790, %v785
        %v1792 = vadd.f32 %v1791, %v790
        %v1793 = vtanh.pop %v1792
        %v1794 = vmul.f32 %v1756, %v1793
        %v1795 = vld [vmem:[#allocation3] sm:$0xff]
        %v1796 = vmul.f32 %v1735, %v1795
        %v1797 = vadd.f32 %v1794, %v1796
        %1798 = vadd.xlane.f32.xlu0 %v1797
        %v1799 = vpop.xlane.xlu0 %1798
        %v1800 = vmul.f32 %v1799, %v683
        %v1801 = vmul.f32 %v1797, %v1797
        %1802 = vadd.xlane.f32.xlu0 %v1801
        %v1803 = vpop.xlane.xlu0 %1802
        %v1804 = vmul.f32 %v1803, %v683
        %v1805 = vmul.f32 %v1800, %v1800
        %v1806 = vsub.f32 %v1804, %v1805
        %v1807 = vsub.f32 %v1797, %v1800
        %v1808 = vadd.f32 %v1806, 1e-05
        %v1809 = vrsqrt.pop %v1808
        %v1810 = vmul.f32 %v1807, %v1809
        %v1811 = vmul.f32 %v1810, %v813
        %v1812 = vadd.f32 %v1811, %v818
        %v1813 = vtanh.pop %v1812
        %v1814 = vmul.f32 %v1777, %v1813
        %v1815 = vpack.c.bf16 %v1814, %v1814
        %1816 = vst [vmem:[#allocation2] sm:$0xf] %v1815
        %1817 = vst [vmem:[#allocation3] sm:$0xff] %v1812
        %s1818 = scalar_lea.vmem %s375, 40 [#allocation12]
        %1819 = vst [vmem:[%s1818] sm:$0xff] %v1814
        %s1820 = scalar_lea.vmem %s382, 40 [#allocation13]
        %1821 = vst [vmem:[%s1820] sm:$0xff] %v1812
        %s1822 = scalar_lea.vmem %s335, 192 [#allocation4]
        %v1823 = vld [vmem:[%s1822] sm:$0xff]
        %v1824 = vld [vmem:[%s1822 + $0x8] sm:$0xff]
        %v1825 = vld [vmem:[%s1822 + $0x10] sm:$0xff]
        %v1826 = vld [vmem:[%s1822 + $0x18] sm:$0xff]
        %v1827 = vld [vmem:[#allocation2] sm:$0xf]
        %1828 = vmatprep.subr.bf16.mxu0 %v532
        %1829 = vmatpush1.bf16.msra.mxu0 %v531
        %1830 = vmatprep.subr.bf16.mxu0 %v536
        %1831 = vmatpush1.bf16.msra.mxu0 %v535
        %1832 = vmatprep.subr.bf16.mxu0 %v540
        %1833 = vmatpush1.bf16.msra.mxu0 %v539
        %1834 = vmatprep.subr.bf16.mxu0 %v544
        %1835 = vmatpush1.bf16.msra.mxu0 %v543
        %1836 = vmatprep.subr.bf16.mxu0 %v548
        %1837 = vmatpush1.bf16.msra.mxu0 %v547
        %1838 = vmatprep.subr.bf16.mxu0 %v552
        %1839 = vmatpush1.bf16.msra.mxu0 %v551
        %1840 = vmatprep.subr.bf16.mxu0 %v556
        %1841 = vmatpush1.bf16.msra.mxu0 %v555
        %1842 = vmatprep.subr.bf16.mxu0 %v560
        %1843 = vmatpush1.bf16.msra.mxu0 %v559
        %1844 = vmatprep.subr.bf16.mxu0 0
        %1845 = vmatpush1.bf16.msra.mxu0 0
        %1846 = vmatprep.subr.bf16.mxu0 0
        %1847 = vmatpush1.bf16.msra.mxu0 0
        %1848 = vmatprep.subr.bf16.mxu0 0
        %1849 = vmatpush1.bf16.msra.mxu0 0
        %1850 = vmatprep.subr.bf16.mxu0 0
        %1851 = vmatpush1.bf16.msra.mxu0 0
        %1852 = vmatprep.subr.bf16.mxu0 0
        %1853 = vmatpush1.bf16.msra.mxu0 0
        %1854 = vmatprep.subr.bf16.mxu0 0
        %1855 = vmatpush1.bf16.msra.mxu0 0
        %1856 = vmatprep.subr.bf16.mxu0 0
        %1857 = vmatpush1.bf16.msra.mxu0 0
        %1858 = vmatprep.subr.bf16.mxu0 0
        %1859 = vmatpush1.bf16.msra.mxu0 0
        %1860 = vmatprep.mubr.bf16.mxu0 0
        %1861 = vmatmul.mubr.bf16.gmra.mrb[0].mxu0 %v1827
        %v1862 = vpop.f32.mrb[0].mxu0
        %v1863 = vadd.f32 0.0, %v1862
        %v1864 = vpop.f32.mrb[0].mxu0
        %v1865 = vadd.f32 0.0, %v1864
        %v1866 = vpop.f32.mrb[0].mxu0
        %v1867 = vpop.f32.mrb[0].mxu0
        %1868 = vdwg.mxu0
        %1869 = vmatprep.subr.bf16.mxu0 %v534
        %1870 = vmatpush1.bf16.msra.mxu0 %v533
        %1871 = vmatprep.subr.bf16.mxu0 %v538
        %1872 = vmatpush1.bf16.msra.mxu0 %v537
        %1873 = vmatprep.subr.bf16.mxu0 %v542
        %1874 = vmatpush1.bf16.msra.mxu0 %v541
        %1875 = vmatprep.subr.bf16.mxu0 %v546
        %1876 = vmatpush1.bf16.msra.mxu0 %v545
        %1877 = vmatprep.subr.bf16.mxu0 %v550
        %1878 = vmatpush1.bf16.msra.mxu0 %v549
        %1879 = vmatprep.subr.bf16.mxu0 %v554
        %1880 = vmatpush1.bf16.msra.mxu0 %v553
        %1881 = vmatprep.subr.bf16.mxu0 %v558
        %1882 = vmatpush1.bf16.msra.mxu0 %v557
        %1883 = vmatprep.subr.bf16.mxu0 %v562
        %1884 = vmatpush1.bf16.msra.mxu0 %v561
        %1885 = vmatprep.subr.bf16.mxu0 0
        %1886 = vmatpush1.bf16.msra.mxu0 0
        %1887 = vmatprep.subr.bf16.mxu0 0
        %1888 = vmatpush1.bf16.msra.mxu0 0
        %1889 = vmatprep.subr.bf16.mxu0 0
        %1890 = vmatpush1.bf16.msra.mxu0 0
        %1891 = vmatprep.subr.bf16.mxu0 0
        %1892 = vmatpush1.bf16.msra.mxu0 0
        %1893 = vmatprep.subr.bf16.mxu0 0
        %1894 = vmatpush1.bf16.msra.mxu0 0
        %1895 = vmatprep.subr.bf16.mxu0 0
        %1896 = vmatpush1.bf16.msra.mxu0 0
        %1897 = vmatprep.subr.bf16.mxu0 0
        %1898 = vmatpush1.bf16.msra.mxu0 0
        %1899 = vmatprep.subr.bf16.mxu0 0
        %1900 = vmatpush1.bf16.msra.mxu0 0
        %1901 = vmatprep.mubr.bf16.mxu0 0
        %1902 = vmatmul.mubr.bf16.gmra.mrb[0].mxu0 %v1827
        %v1903 = vpop.f32.mrb[0].mxu0
        %v1904 = vadd.f32 0.0, %v1903
        %v1905 = vpop.f32.mrb[0].mxu0
        %v1906 = vadd.f32 0.0, %v1905
        %v1907 = vpop.f32.mrb[0].mxu0
        %v1908 = vpop.f32.mrb[0].mxu0
        %1909 = vdwg.mxu0
        %v1910 = vadd.f32 %v1823, %v1863
        %v1911 = vadd.f32 %v1824, %v1865
        %v1912 = vadd.f32 %v1825, %v1904
        %v1913 = vadd.f32 %v1826, %v1906
        %1914 = vadd.xlane.f32.xlu0 %v1910
        %v1915 = vpop.xlane.xlu0 %1914
        %v1916 = vmul.f32 %v1915, %v683
        %v1917 = vmul.f32 %v1910, %v1910
        %1918 = vadd.xlane.f32.xlu0 %v1917
        %v1919 = vpop.xlane.xlu0 %1918
        %v1920 = vmul.f32 %v1919, %v683
        %v1921 = vmul.f32 %v1916, %v1916
        %v1922 = vsub.f32 %v1920, %v1921
        %v1923 = vsub.f32 %v1910, %v1916
        %v1924 = vadd.f32 %v1922, 1e-05
        %v1925 = vrsqrt.pop %v1924
        %v1926 = vmul.f32 %v1923, %v1925
        %v1927 = vmul.f32 %v1926, %v698
        %v1928 = vadd.f32 %v1927, %v703
        %v1929 = vxor.u32 %v1928, 2147483648
        %v1930 = vmul.f32 %v1929, 1.442695
        %v1931 = vpow.pop %v1930
        %v1932 = vadd.f32 %v1931, 1.0
        %v1933 = vrcp.pop %v1932
        %v1934 = vmul.f32 1.0, %v1933
        %1935 = vadd.xlane.f32.xlu0 %v1911
        %v1936 = vpop.xlane.xlu0 %1935
        %v1937 = vmul.f32 %v1936, %v683
        %v1938 = vmul.f32 %v1911, %v1911
        %1939 = vadd.xlane.f32.xlu0 %v1938
        %v1940 = vpop.xlane.xlu0 %1939
        %v1941 = vmul.f32 %v1940, %v683
        %v1942 = vmul.f32 %v1937, %v1937
        %v1943 = vsub.f32 %v1941, %v1942
        %v1944 = vsub.f32 %v1911, %v1937
        %v1945 = vadd.f32 %v1943, 1e-05
        %v1946 = vrsqrt.pop %v1945
        %v1947 = vmul.f32 %v1944, %v1946
        %v1948 = vmul.f32 %v1947, %v727
        %v1949 = vadd.f32 %v1948, %v732
        %v1950 = vxor.u32 %v1949, 2147483648
        %v1951 = vmul.f32 %v1950, 1.442695
        %v1952 = vpow.pop %v1951
        %v1953 = vadd.f32 %v1952, 1.0
        %v1954 = vrcp.pop %v1953
        %v1955 = vmul.f32 1.0, %v1954
        %1956 = vadd.xlane.f32.xlu0 %v1912
        %v1957 = vpop.xlane.xlu0 %1956
        %v1958 = vmul.f32 %v1957, %v683
        %v1959 = vmul.f32 %v1912, %v1912
        %1960 = vadd.xlane.f32.xlu0 %v1959
        %v1961 = vpop.xlane.xlu0 %1960
        %v1962 = vmul.f32 %v1961, %v683
        %v1963 = vmul.f32 %v1958, %v1958
        %v1964 = vsub.f32 %v1962, %v1963
        %v1965 = vsub.f32 %v1912, %v1958
        %v1966 = vadd.f32 %v1964, 1e-05
        %v1967 = vrsqrt.pop %v1966
        %v1968 = vmul.f32 %v1965, %v1967
        %v1969 = vmul.f32 %v1968, %v756
        %v1970 = vadd.f32 %v1969, %v761
        %v1971 = vxor.u32 %v1970, 2147483648
        %v1972 = vmul.f32 %v1971, 1.442695
        %v1973 = vpow.pop %v1972
        %v1974 = vadd.f32 %v1973, 1.0
        %v1975 = vrcp.pop %v1974
        %v1976 = vmul.f32 1.0, %v1975
        %1977 = vadd.xlane.f32.xlu0 %v1913
        %v1978 = vpop.xlane.xlu0 %1977
        %v1979 = vmul.f32 %v1978, %v683
        %v1980 = vmul.f32 %v1913, %v1913
        %1981 = vadd.xlane.f32.xlu0 %v1980
        %v1982 = vpop.xlane.xlu0 %1981
        %v1983 = vmul.f32 %v1982, %v683
        %v1984 = vmul.f32 %v1979, %v1979
        %v1985 = vsub.f32 %v1983, %v1984
        %v1986 = vsub.f32 %v1913, %v1979
        %v1987 = vadd.f32 %v1985, 1e-05
        %v1988 = vrsqrt.pop %v1987
        %v1989 = vmul.f32 %v1986, %v1988
        %v1990 = vmul.f32 %v1989, %v785
        %v1991 = vadd.f32 %v1990, %v790
        %v1992 = vtanh.pop %v1991
        %v1993 = vmul.f32 %v1955, %v1992
        %v1994 = vld [vmem:[#allocation3] sm:$0xff]
        %v1995 = vmul.f32 %v1934, %v1994
        %v1996 = vadd.f32 %v1993, %v1995
        %1997 = vadd.xlane.f32.xlu0 %v1996
        %v1998 = vpop.xlane.xlu0 %1997
        %v1999 = vmul.f32 %v1998, %v683
        %v2000 = vmul.f32 %v1996, %v1996
        %2001 = vadd.xlane.f32.xlu0 %v2000
        %v2002 = vpop.xlane.xlu0 %2001
        %v2003 = vmul.f32 %v2002, %v683
        %v2004 = vmul.f32 %v1999, %v1999
        %v2005 = vsub.f32 %v2003, %v2004
        %v2006 = vsub.f32 %v1996, %v1999
        %v2007 = vadd.f32 %v2005, 1e-05
        %v2008 = vrsqrt.pop %v2007
        %v2009 = vmul.f32 %v2006, %v2008
        %v2010 = vmul.f32 %v2009, %v813
        %v2011 = vadd.f32 %v2010, %v818
        %v2012 = vtanh.pop %v2011
        %v2013 = vmul.f32 %v1976, %v2012
        %v2014 = vpack.c.bf16 %v2013, %v2013
        %2015 = vst [vmem:[#allocation2] sm:$0xf] %v2014
        %2016 = vst [vmem:[#allocation3] sm:$0xff] %v2011
        %s2017 = scalar_lea.vmem %s375, 48 [#allocation12]
        %2018 = vst [vmem:[%s2017] sm:$0xff] %v2013
        %s2019 = scalar_lea.vmem %s382, 48 [#allocation13]
        %2020 = vst [vmem:[%s2019] sm:$0xff] %v2011
        %s2021 = scalar_lea.vmem %s335, 224 [#allocation4]
        %v2022 = vld [vmem:[%s2021] sm:$0xff]
        %v2023 = vld [vmem:[%s2021 + $0x8] sm:$0xff]
        %v2024 = vld [vmem:[%s2021 + $0x10] sm:$0xff]
        %v2025 = vld [vmem:[%s2021 + $0x18] sm:$0xff]
        %v2026 = vld [vmem:[#allocation2] sm:$0xf]
        %2027 = vmatprep.subr.bf16.mxu0 %v532
        %2028 = vmatpush1.bf16.msra.mxu0 %v531
        %2029 = vmatprep.subr.bf16.mxu0 %v536
        %2030 = vmatpush1.bf16.msra.mxu0 %v535
        %2031 = vmatprep.subr.bf16.mxu0 %v540
        %2032 = vmatpush1.bf16.msra.mxu0 %v539
        %2033 = vmatprep.subr.bf16.mxu0 %v544
        %2034 = vmatpush1.bf16.msra.mxu0 %v543
        %2035 = vmatprep.subr.bf16.mxu0 %v548
        %2036 = vmatpush1.bf16.msra.mxu0 %v547
        %2037 = vmatprep.subr.bf16.mxu0 %v552
        %2038 = vmatpush1.bf16.msra.mxu0 %v551
        %2039 = vmatprep.subr.bf16.mxu0 %v556
        %2040 = vmatpush1.bf16.msra.mxu0 %v555
        %2041 = vmatprep.subr.bf16.mxu0 %v560
        %2042 = vmatpush1.bf16.msra.mxu0 %v559
        %2043 = vmatprep.subr.bf16.mxu0 0
        %2044 = vmatpush1.bf16.msra.mxu0 0
        %2045 = vmatprep.subr.bf16.mxu0 0
        %2046 = vmatpush1.bf16.msra.mxu0 0
        %2047 = vmatprep.subr.bf16.mxu0 0
        %2048 = vmatpush1.bf16.msra.mxu0 0
        %2049 = vmatprep.subr.bf16.mxu0 0
        %2050 = vmatpush1.bf16.msra.mxu0 0
        %2051 = vmatprep.subr.bf16.mxu0 0
        %2052 = vmatpush1.bf16.msra.mxu0 0
        %2053 = vmatprep.subr.bf16.mxu0 0
        %2054 = vmatpush1.bf16.msra.mxu0 0
        %2055 = vmatprep.subr.bf16.mxu0 0
        %2056 = vmatpush1.bf16.msra.mxu0 0
        %2057 = vmatprep.subr.bf16.mxu0 0
        %2058 = vmatpush1.bf16.msra.mxu0 0
        %2059 = vmatprep.mubr.bf16.mxu0 0
        %2060 = vmatmul.mubr.bf16.gmra.mrb[0].mxu0 %v2026
        %v2061 = vpop.f32.mrb[0].mxu0
        %v2062 = vadd.f32 0.0, %v2061
        %v2063 = vpop.f32.mrb[0].mxu0
        %v2064 = vadd.f32 0.0, %v2063
        %v2065 = vpop.f32.mrb[0].mxu0
        %v2066 = vpop.f32.mrb[0].mxu0
        %2067 = vdwg.mxu0
        %2068 = vmatprep.subr.bf16.mxu0 %v534
        %2069 = vmatpush1.bf16.msra.mxu0 %v533
        %2070 = vmatprep.subr.bf16.mxu0 %v538
        %2071 = vmatpush1.bf16.msra.mxu0 %v537
        %2072 = vmatprep.subr.bf16.mxu0 %v542
        %2073 = vmatpush1.bf16.msra.mxu0 %v541
        %2074 = vmatprep.subr.bf16.mxu0 %v546
        %2075 = vmatpush1.bf16.msra.mxu0 %v545
        %2076 = vmatprep.subr.bf16.mxu0 %v550
        %2077 = vmatpush1.bf16.msra.mxu0 %v549
        %2078 = vmatprep.subr.bf16.mxu0 %v554
        %2079 = vmatpush1.bf16.msra.mxu0 %v553
        %2080 = vmatprep.subr.bf16.mxu0 %v558
        %2081 = vmatpush1.bf16.msra.mxu0 %v557
        %2082 = vmatprep.subr.bf16.mxu0 %v562
        %2083 = vmatpush1.bf16.msra.mxu0 %v561
        %2084 = vmatprep.subr.bf16.mxu0 0
        %2085 = vmatpush1.bf16.msra.mxu0 0
        %2086 = vmatprep.subr.bf16.mxu0 0
        %2087 = vmatpush1.bf16.msra.mxu0 0
        %2088 = vmatprep.subr.bf16.mxu0 0
        %2089 = vmatpush1.bf16.msra.mxu0 0
        %2090 = vmatprep.subr.bf16.mxu0 0
        %2091 = vmatpush1.bf16.msra.mxu0 0
        %2092 = vmatprep.subr.bf16.mxu0 0
        %2093 = vmatpush1.bf16.msra.mxu0 0
        %2094 = vmatprep.subr.bf16.mxu0 0
        %2095 = vmatpush1.bf16.msra.mxu0 0
        %2096 = vmatprep.subr.bf16.mxu0 0
        %2097 = vmatpush1.bf16.msra.mxu0 0
        %2098 = vmatprep.subr.bf16.mxu0 0
        %2099 = vmatpush1.bf16.msra.mxu0 0
        %2100 = vmatprep.mubr.bf16.mxu0 0
        %2101 = vmatmul.mubr.bf16.gmra.mrb[0].mxu0 %v2026
        %v2102 = vpop.f32.mrb[0].mxu0
        %v2103 = vadd.f32 0.0, %v2102
        %v2104 = vpop.f32.mrb[0].mxu0
        %v2105 = vadd.f32 0.0, %v2104
        %v2106 = vpop.f32.mrb[0].mxu0
        %v2107 = vpop.f32.mrb[0].mxu0
        %2108 = vdwg.mxu0
        %v2109 = vadd.f32 %v2022, %v2062
        %v2110 = vadd.f32 %v2023, %v2064
        %v2111 = vadd.f32 %v2024, %v2103
        %v2112 = vadd.f32 %v2025, %v2105
        %2113 = vadd.xlane.f32.xlu0 %v2109
        %v2114 = vpop.xlane.xlu0 %2113
        %v2115 = vmul.f32 %v2114, %v683
        %v2116 = vmul.f32 %v2109, %v2109
        %2117 = vadd.xlane.f32.xlu0 %v2116
        %v2118 = vpop.xlane.xlu0 %2117
        %v2119 = vmul.f32 %v2118, %v683
        %v2120 = vmul.f32 %v2115, %v2115
        %v2121 = vsub.f32 %v2119, %v2120
        %v2122 = vsub.f32 %v2109, %v2115
        %v2123 = vadd.f32 %v2121, 1e-05
        %v2124 = vrsqrt.pop %v2123
        %v2125 = vmul.f32 %v2122, %v2124
        %v2126 = vmul.f32 %v2125, %v698
        %v2127 = vadd.f32 %v2126, %v703
        %v2128 = vxor.u32 %v2127, 2147483648
        %v2129 = vmul.f32 %v2128, 1.442695
        %v2130 = vpow.pop %v2129
        %v2131 = vadd.f32 %v2130, 1.0
        %v2132 = vrcp.pop %v2131
        %v2133 = vmul.f32 1.0, %v2132
        %2134 = vadd.xlane.f32.xlu0 %v2110
        %v2135 = vpop.xlane.xlu0 %2134
        %v2136 = vmul.f32 %v2135, %v683
        %v2137 = vmul.f32 %v2110, %v2110
        %2138 = vadd.xlane.f32.xlu0 %v2137
        %v2139 = vpop.xlane.xlu0 %2138
        %v2140 = vmul.f32 %v2139, %v683
        %v2141 = vmul.f32 %v2136, %v2136
        %v2142 = vsub.f32 %v2140, %v2141
        %v2143 = vsub.f32 %v2110, %v2136
        %v2144 = vadd.f32 %v2142, 1e-05
        %v2145 = vrsqrt.pop %v2144
        %v2146 = vmul.f32 %v2143, %v2145
        %v2147 = vmul.f32 %v2146, %v727
        %v2148 = vadd.f32 %v2147, %v732
        %v2149 = vxor.u32 %v2148, 2147483648
        %v2150 = vmul.f32 %v2149, 1.442695
        %v2151 = vpow.pop %v2150
        %v2152 = vadd.f32 %v2151, 1.0
        %v2153 = vrcp.pop %v2152
        %v2154 = vmul.f32 1.0, %v2153
        %2155 = vadd.xlane.f32.xlu0 %v2111
        %v2156 = vpop.xlane.xlu0 %2155
        %v2157 = vmul.f32 %v2156, %v683
        %v2158 = vmul.f32 %v2111, %v2111
        %2159 = vadd.xlane.f32.xlu0 %v2158
        %v2160 = vpop.xlane.xlu0 %2159
        %v2161 = vmul.f32 %v2160, %v683
        %v2162 = vmul.f32 %v2157, %v2157
        %v2163 = vsub.f32 %v2161, %v2162
        %v2164 = vsub.f32 %v2111, %v2157
        %v2165 = vadd.f32 %v2163, 1e-05
        %v2166 = vrsqrt.pop %v2165
        %v2167 = vmul.f32 %v2164, %v2166
        %v2168 = vmul.f32 %v2167, %v756
        %v2169 = vadd.f32 %v2168, %v761
        %v2170 = vxor.u32 %v2169, 2147483648
        %v2171 = vmul.f32 %v2170, 1.442695
        %v2172 = vpow.pop %v2171
        %v2173 = vadd.f32 %v2172, 1.0
        %v2174 = vrcp.pop %v2173
        %v2175 = vmul.f32 1.0, %v2174
        %2176 = vadd.xlane.f32.xlu0 %v2112
        %v2177 = vpop.xlane.xlu0 %2176
        %v2178 = vmul.f32 %v2177, %v683
        %v2179 = vmul.f32 %v2112, %v2112
        %2180 = vadd.xlane.f32.xlu0 %v2179
        %v2181 = vpop.xlane.xlu0 %2180
        %v2182 = vmul.f32 %v2181, %v683
        %v2183 = vmul.f32 %v2178, %v2178
        %v2184 = vsub.f32 %v2182, %v2183
        %v2185 = vsub.f32 %v2112, %v2178
        %v2186 = vadd.f32 %v2184, 1e-05
        %v2187 = vrsqrt.pop %v2186
        %v2188 = vmul.f32 %v2185, %v2187
        %v2189 = vmul.f32 %v2188, %v785
        %v2190 = vadd.f32 %v2189, %v790
        %v2191 = vtanh.pop %v2190
        %v2192 = vmul.f32 %v2154, %v2191
        %v2193 = vld [vmem:[#allocation3] sm:$0xff]
        %v2194 = vmul.f32 %v2133, %v2193
        %v2195 = vadd.f32 %v2192, %v2194
        %2196 = vadd.xlane.f32.xlu0 %v2195
        %v2197 = vpop.xlane.xlu0 %2196
        %v2198 = vmul.f32 %v2197, %v683
        %v2199 = vmul.f32 %v2195, %v2195
        %2200 = vadd.xlane.f32.xlu0 %v2199
        %v2201 = vpop.xlane.xlu0 %2200
        %v2202 = vmul.f32 %v2201, %v683
        %v2203 = vmul.f32 %v2198, %v2198
        %v2204 = vsub.f32 %v2202, %v2203
        %v2205 = vsub.f32 %v2195, %v2198
        %v2206 = vadd.f32 %v2204, 1e-05
        %v2207 = vrsqrt.pop %v2206
        %v2208 = vmul.f32 %v2205, %v2207
        %v2209 = vmul.f32 %v2208, %v813
        %v2210 = vadd.f32 %v2209, %v818
        %v2211 = vtanh.pop %v2210
        %v2212 = vmul.f32 %v2175, %v2211
        %v2213 = vpack.c.bf16 %v2212, %v2212
        %2214 = vst [vmem:[#allocation2] sm:$0xf] %v2213
        %2215 = vst [vmem:[#allocation3] sm:$0xff] %v2210
        %s2216 = scalar_lea.vmem %s375, 56 [#allocation12]
        %2217 = vst [vmem:[%s2216] sm:$0xff] %v2212
        %s2218 = scalar_lea.vmem %s382, 56 [#allocation13]
        %2219 = vst [vmem:[%s2218] sm:$0xff] %v2210
        %s2220 = sand.u32 %s195, 1
        %s2221 = scalar_lea.sflag [#allocation6], %s2220
        %s2222 = sand.u32 %s195, 1
        %s2223 = smul.addr %s2222, 64
        %s2224 = scalar_lea.vmem [#allocation12], %s2223
        %s2225 = sand.u32 %s223, 1
        %s2226 = scalar_lea.sflag [#allocation14], %s2225
        %s2227 = sand.u32 %s223, 1
        %s2228 = smul.addr %s2227, 64
        %s2229 = scalar_lea.vmem [#allocation13], %s2228
        // Predicated region
        $region65: #{tpu_custom_call.1} parent=43 // pred_check
          %p2230 = pneg %p205
        $region66: #{tpu_custom_call.1} parent=43 // pred_check_branch
          %2232 = sbr.rel (%p2230) target = $region68
        $region67: #{tpu_custom_call.1} parent=43 // pred_region
          %s2233 = smul.u32 8, %s35
          %s2235 = ssub.s32 1024, 1024
          %2236 = vsyncadd %s2221, %s2235
          %s2237 = sadd.s32 %s34, %s2233
          %s2238 = smul.addr %s2237, 128
          %s2239 = scalar_lea.hbm %s6, %s2238
          %s2240 = sshll.u32 %s2224, 4
          %s2241 = int_to_ptr.vmem [resolvable:$true] %s2240
          %2246 = dma.vmem_to_hbm [thread:$0]  %s2241, 1024, %s2239, %s2221, 128, 128, 8
        $region68: #{tpu_custom_call.1} parent=43 // pred_fallthru
          _
        // Predicated region
        $region69: #{tpu_custom_call.1} parent=43 // pred_check
          %p2247 = pneg %p233
        $region70: #{tpu_custom_call.1} parent=43 // pred_check_branch
          %2249 = sbr.rel (%p2247) target = $region72
        $region71: #{tpu_custom_call.1} parent=43 // pred_region
          %s2250 = smul.u32 8, %s35
          %s2252 = ssub.s32 1024, 1024
          %2253 = vsyncadd %s2226, %s2252
          %s2254 = sadd.s32 %s34, %s2250
          %s2255 = smul.addr %s2254, 128
          %s2256 = scalar_lea.hbm %s7, %s2255
          %s2257 = sshll.u32 %s2229, 4
          %s2258 = int_to_ptr.vmem [resolvable:$true] %s2257
          %2263 = dma.vmem_to_hbm [thread:$0]  %s2258, 1024, %s2256, %s2226, 128, 128, 8
        $region72: #{tpu_custom_call.1} parent=43 // pred_fallthru
          _
      $region44: #{tpu_custom_call.1} parent=5 // pred_fallthru
        _
      %p2264 = scmp.le.s32.totalorder 2, %s25
      // Predicated region
      $region73: #{tpu_custom_call.1} parent=5 // pred_check
        %p2265 = pneg %p2264
      $region74: #{tpu_custom_call.1} parent=5 // pred_check_branch
        %2267 = sbr.rel (%p2265) target = $region76
      $region75: #{tpu_custom_call.1} parent=5 // pred_region
        %s2268 = ssub.s32 %s25, 2
        // Predicated region
        $region77: #{tpu_custom_call.1} parent=75 // pred_check
          %p2269 = pneg %p211
        $region78: #{tpu_custom_call.1} parent=75 // pred_check_branch
          %2271 = sbr.rel (%p2269) target = $region80
        $region79: #{tpu_custom_call.1} parent=75 // pred_region
          %s2272 = sand.u32 %s196, 1
          %s2273 = scalar_lea.sflag [#allocation6], %s2272
          %s2274 = sand.u32 %s196, 1
          %s2275 = smul.addr %s2274, 64
          %s2276 = scalar_lea.vmem [#allocation12], %s2275
          %2277 = dma.done %s2273, 1024
        $region80: #{tpu_custom_call.1} parent=75 // pred_fallthru
          _
        // Predicated region
        $region81: #{tpu_custom_call.1} parent=75 // pred_check
          %p2278 = pneg %p239
        $region82: #{tpu_custom_call.1} parent=75 // pred_check_branch
          %2280 = sbr.rel (%p2278) target = $region84
        $region83: #{tpu_custom_call.1} parent=75 // pred_region
          %s2281 = sand.u32 %s224, 1
          %s2282 = scalar_lea.sflag [#allocation14], %s2281
          %s2283 = sand.u32 %s224, 1
          %s2284 = smul.addr %s2283, 64
          %s2285 = scalar_lea.vmem [#allocation13], %s2284
          %2286 = dma.done %s2282, 1024
        $region84: #{tpu_custom_call.1} parent=75 // pred_fallthru
          _
      $region76: #{tpu_custom_call.1} parent=5 // pred_fallthru
        _
    $region6: #{tpu_custom_call.1} parent=1 // loop_footer
      %s29 = sadd.s32 1, %s25
    $region7: #{tpu_custom_call.1} parent=1 // loop_footer_branch
      %24 = sbr.rel target = $region3
    $region8: #{tpu_custom_call.1} parent=1 // loop_exit
      _
    %2287 = vsyncpa [#allocation5], 1
    %s2288 = scalar_lea.sflag [#allocation5], 1
    %2289 = vsyncpa %s2288, 1
    %2290 = vsyncpa [#allocation8], 1
    %2291 = vsyncpa [#allocation11], 1
    %2292 = vsyncpa [#allocation6], 1
    %s2293 = scalar_lea.sflag [#allocation6], 1
    %2294 = vsyncpa %s2293, 1
    %2295 = vsyncpa [#allocation14], 1
    %s2296 = scalar_lea.sflag [#allocation14], 1
    %2297 = vsyncpa %s2296, 1

</llo_original>
